<compile_context>
chip_gen: v7x
topology: tpu7x:2x2x1
jax: 0.10.0
libtpu: 0.0.40
codegen_flags: <defaults>
</compile_context>

<pallas_src>
import functools

import jax
import jax.numpy as jnp
import numpy as np
from jax.experimental import pallas as pl
from jax.experimental.pallas import tpu as pltpu

_VMEM_LIMIT = 64 * 1024 * 1024


# ----------------------------------------------------------------------------
# helpers
# ----------------------------------------------------------------------------

def _pick_tile(dim, preferred):
    """Largest tile <= preferred that divides dim (or the full dim)."""
    if dim <= preferred:
        return dim
    t = preferred
    while t > 1 and dim % t != 0:
        t //= 2
    return t


# ----------------------------------------------------------------------------
# Tiled matmul kernels (bf16 in, f32 MXU accumulation, fused epilogues)
# ----------------------------------------------------------------------------

def _mm_kernel(a_ref, b_ref, o_ref, acc_ref):
    @pl.when(pl.program_id(2) == 0)
    def _():
        acc_ref[...] = jnp.zeros_like(acc_ref)

    acc_ref[...] += jnp.dot(a_ref[...], b_ref[...],
                            preferred_element_type=jnp.float32)

    @pl.when(pl.program_id(2) == pl.num_programs(2) - 1)
    def _():
        o_ref[...] = acc_ref[...].astype(o_ref.dtype)


def pallas_matmul(a, b, out_dtype=jnp.bfloat16, tm=512, tn=512, tk=512):
    M, K = a.shape
    _, N = b.shape
    tm = _pick_tile(M, tm)
    tn = _pick_tile(N, tn)
    tk = _pick_tile(K, tk)
    return pl.pallas_call(
        _mm_kernel,
        out_shape=jax.ShapeDtypeStruct((M, N), out_dtype),
        grid=(M // tm, N // tn, K // tk),
        in_specs=[pl.BlockSpec((tm, tk), lambda i, j, k: (i, k)),
                  pl.BlockSpec((tk, tn), lambda i, j, k: (k, j))],
        out_specs=pl.BlockSpec((tm, tn), lambda i, j, k: (i, j)),
        scratch_shapes=[pltpu.VMEM((tm, tn), jnp.float32)],
        compiler_params=pltpu.CompilerParams(
            dimension_semantics=("parallel", "parallel", "arbitrary"),
            vmem_limit_bytes=_VMEM_LIMIT),
    )(a, b)


def _mm_bias_gelu_kernel(a_ref, b_ref, bias_ref, o_ref, acc_ref):
    @pl.when(pl.program_id(2) == 0)
    def _():
        acc_ref[...] = jnp.zeros_like(acc_ref)

    acc_ref[...] += jnp.dot(a_ref[...], b_ref[...],
                            preferred_element_type=jnp.float32)

    @pl.when(pl.program_id(2) == pl.num_programs(2) - 1)
    def _():
        x = acc_ref[...] + bias_ref[...]
        c = 0.7978845608028654  # sqrt(2/pi); tanh-approx GELU (see TODO at top)
        g = 0.5 * x * (1.0 + jnp.tanh(c * (x + 0.044715 * x * x * x)))
        o_ref[...] = g.astype(o_ref.dtype)


def pallas_matmul_bias_gelu(a, w, bias, out_dtype=jnp.bfloat16,
                            tm=512, tn=512, tk=512):
    M, K = a.shape
    _, N = w.shape
    tm = _pick_tile(M, tm)
    tn = _pick_tile(N, tn)
    tk = _pick_tile(K, tk)
    return pl.pallas_call(
        _mm_bias_gelu_kernel,
        out_shape=jax.ShapeDtypeStruct((M, N), out_dtype),
        grid=(M // tm, N // tn, K // tk),
        in_specs=[pl.BlockSpec((tm, tk), lambda i, j, k: (i, k)),
                  pl.BlockSpec((tk, tn), lambda i, j, k: (k, j)),
                  pl.BlockSpec((1, tn), lambda i, j, k: (0, j))],
        out_specs=pl.BlockSpec((tm, tn), lambda i, j, k: (i, j)),
        scratch_shapes=[pltpu.VMEM((tm, tn), jnp.float32)],
        compiler_params=pltpu.CompilerParams(
            dimension_semantics=("parallel", "parallel", "arbitrary"),
            vmem_limit_bytes=_VMEM_LIMIT),
    )(a, w, bias)


def _mm_bias_res_ln_kernel(a_ref, b_ref, bias_ref, res_ref, g_ref, beta_ref,
                           o_ref, acc_ref):
    @pl.when(pl.program_id(1) == 0)
    def _():
        acc_ref[...] = jnp.zeros_like(acc_ref)

    acc_ref[...] += jnp.dot(a_ref[...], b_ref[...],
                            preferred_element_type=jnp.float32)

    @pl.when(pl.program_id(1) == pl.num_programs(1) - 1)
    def _():
        x = acc_ref[...] + bias_ref[...] + res_ref[...].astype(jnp.float32)
        mean = jnp.mean(x, axis=-1, keepdims=True)
        var = jnp.mean((x - mean) ** 2, axis=-1, keepdims=True)
        inv = jax.lax.rsqrt(var + 1e-12)  # XLNet layer_norm_eps = 1e-12 (f32 stats)
        o_ref[...] = ((x - mean) * inv * g_ref[...] + beta_ref[...]).astype(o_ref.dtype)


def pallas_matmul_bias_res_ln(a, w, bias, res, gamma, beta,
                              out_dtype=jnp.bfloat16, tm=512, tk=512):
    M, K = a.shape
    _, N = w.shape
    tm = _pick_tile(M, tm)
    tk = _pick_tile(K, tk)
    return pl.pallas_call(
        _mm_bias_res_ln_kernel,
        out_shape=jax.ShapeDtypeStruct((M, N), out_dtype),
        grid=(M // tm, K // tk),
        in_specs=[pl.BlockSpec((tm, tk), lambda i, k: (i, k)),
                  pl.BlockSpec((tk, N), lambda i, k: (k, 0)),
                  pl.BlockSpec((1, N), lambda i, k: (0, 0)),
                  pl.BlockSpec((tm, N), lambda i, k: (i, 0)),
                  pl.BlockSpec((1, N), lambda i, k: (0, 0)),
                  pl.BlockSpec((1, N), lambda i, k: (0, 0))],
        out_specs=pl.BlockSpec((tm, N), lambda i, k: (i, 0)),
        scratch_shapes=[pltpu.VMEM((tm, N), jnp.float32)],
        compiler_params=pltpu.CompilerParams(
            dimension_semantics=("parallel", "arbitrary"),
            vmem_limit_bytes=_VMEM_LIMIT),
    )(a, w, bias, res, gamma, beta)


# ----------------------------------------------------------------------------
# rel_shift: bd[i, j] = bd_raw[i, j + S - i]   (HF rel_shift_bnij, klen==S, P==2S)
# Preferred path: one strided XLU rotate.  The per-row stride convention of the
# hardware roll is probed once (tiny kernel); fallback is the proven bit path.
# ----------------------------------------------------------------------------

def _roll_probe_kernel(x_ref, o_ref, *, shift, stride):
    o_ref[...] = pltpu.roll(x_ref[...], shift=shift, axis=1,
                            stride=stride, stride_axis=0)


@functools.lru_cache(maxsize=None)
def _get_roll_cfg(S):
    """Return (shift, stride) for pltpu.roll realizing the rel-shift, or None."""
    P = 2 * S
    x = np.arange(S * P, dtype=np.float32).reshape(S, P)
    want = np.stack([np.roll(x[i], i - S) for i in range(S)])
    for stride in (1, -1):
        try:
            kern = functools.partial(_roll_probe_kernel, shift=S, stride=stride)
            got = pl.pallas_call(
                kern,
                out_shape=jax.ShapeDtypeStruct((S, P), jnp.float32),
            )(jnp.asarray(x))
            got = np.asarray(jax.block_until_ready(got))
            if np.array_equal(got, want):
                return (S, stride)
        except Exception:
            continue
    return None


def _rel_shift(bd_raw, S, roll_cfg):
    P = bd_raw.shape[1]
    if roll_cfg is not None:
        shift, stride = roll_cfg
        rolled = pltpu.roll(bd_raw, shift=shift, axis=1,
                            stride=stride, stride_axis=0)
        return rolled[:, :S]
    # Fallback: per-row left-roll by (S - i), decomposed over the bits of (S - i).
    row = jax.lax.broadcasted_iota(jnp.int32, (S, P), 0)
    amt_needed = S - row
    x = bd_raw
    for kb in range(int(S).bit_length()):
        amt = 1 << kb
        rolled = jnp.concatenate([x[:, amt:], x[:, :amt]], axis=1)
        x = jnp.where((amt_needed & amt) != 0, rolled, x)
    return x[:, :S]


# ----------------------------------------------------------------------------
# Fused relative attention: per (batch, head-pair) grid step computes ac+bd+ef,
# mask, softmax, attn@V, the head-pair O-projection (accumulated over the head
# axis, K = 2*Dh), residual add and LayerNorm.  No [B,H,S,S] tensor in HBM.
# ----------------------------------------------------------------------------

def _rel_attn_kernel(q_ref, k_ref, v_ref, kr_ref, rw_ref, rr_ref, rs_ref,
                     seg_ref, kp_ref, ttq_ref, ttk_ref, ow_ref, res_ref,
                     g_ref, beta_ref, out_ref, acc_ref, *, S, Dh, roll_cfg):
    f32 = jnp.float32
    h2 = pl.program_id(1)
    scale = 1.0 / (Dh ** 0.5)

    @pl.when(h2 == 0)
    def _():
        acc_ref[...] = jnp.zeros_like(acc_ref)

    # [S,S] attention mask / segment indicator rebuilt from per-row vectors.
    row = jax.lax.broadcasted_iota(jnp.int32, (S, S), 0)
    col = jax.lax.broadcasted_iota(jnp.int32, (S, S), 1)
    masked = (kp_ref[0] > 0.5) & (row != col)          # key padded & not diagonal
    seg_neq = ttq_ref[0] != ttk_ref[0]                 # [S,1] vs [1,S] -> [S,S]

    cdims = (((1,), (1,)), ((), ()))
    seg = seg_ref[0].astype(f32)                       # [2, 2*Dh]

    def one_head(a):
        lo, hi = a * Dh, (a + 1) * Dh
        q = q_ref[:, lo:hi].astype(f32)                # [S, Dh]
        k = k_ref[:, lo:hi]                            # bf16 [S, Dh]
        v = v_ref[:, lo:hi]                            # bf16 [S, Dh]
        kr = kr_ref[:, lo:hi]                          # bf16 [P, Dh]
        rw = rw_ref[0, :, lo:hi].astype(f32)           # [1, Dh]
        rr = rr_ref[0, :, lo:hi].astype(f32)
        rs = rs_ref[0, :, lo:hi].astype(f32)

        # fold the 1/sqrt(Dh) scale into the query-side operands
        qw = ((q + rw) * scale).astype(k.dtype)
        qr = ((q + rr) * scale).astype(kr.dtype)
        qs = (q + rs) * scale

        ac = jax.lax.dot_general(qw, k, cdims,
                                 preferred_element_type=f32)       # [S, S]
        bd_raw = jax.lax.dot_general(qr, kr, cdims,
                                     preferred_element_type=f32)   # [S, 2S]
        bd = _rel_shift(bd_raw, S, roll_cfg)                       # [S, S]

        # segment score: 2-way one-hot -> VPU select (no tiny matmuls)
        e_same = jnp.sum(qs * seg[0:1, lo:hi], axis=-1, keepdims=True)   # [S, 1]
        e_diff = jnp.sum(qs * seg[1:2, lo:hi], axis=-1, keepdims=True)
        ef = jnp.where(seg_neq, e_diff, e_same)                          # [S, S]

        score = jnp.where(masked, -1e30, ac + bd + ef)
        m = jnp.max(score, axis=-1, keepdims=True)
        e = jnp.exp(score - m)
        p = e * pl.reciprocal(jnp.sum(e, axis=-1, keepdims=True), approx=True)
        return jnp.dot(p.astype(v.dtype), v, preferred_element_type=f32)  # [S, Dh]

    # 2 heads per step -> lane-dense [S, 2*Dh] block, O-projection with K = 2*Dh.
    av_pair = jnp.concatenate([one_head(0), one_head(1)], axis=1)
    acc_ref[...] += jnp.dot(av_pair.astype(ow_ref.dtype), ow_ref[...],
                            preferred_element_type=f32)                   # [S, D]

    @pl.when(h2 == pl.num_programs(1) - 1)
    def _():
        x = acc_ref[...] + res_ref[...].astype(f32)
        mean = jnp.mean(x, axis=-1, keepdims=True)
        var = jnp.mean((x - mean) ** 2, axis=-1, keepdims=True)
        inv = jax.lax.rsqrt(var + 1e-12)
        out_ref[...] = ((x - mean) * inv * g_ref[...] + beta_ref[...]).astype(out_ref.dtype)


def pallas_rel_attention(qkv, kr, rw, rr, rs, seg_pair, kp, tt_q, tt_k,
                         w_o, h_res, ln_g, ln_b, *, B, S, H, Dh, roll_cfg):
    M, D = h_res.shape
    P = kr.shape[0]
    Dh2 = 2 * Dh
    n_pair = H // 2
    kern = functools.partial(_rel_attn_kernel, S=S, Dh=Dh, roll_cfg=roll_cfg)
    return pl.pallas_call(
        kern,
        out_shape=jax.ShapeDtypeStruct((M, D), h_res.dtype),
        grid=(B, n_pair),
        in_specs=[
            # q/k/v head-pair blocks read straight from the fused QKV matmul output
            pl.BlockSpec((S, Dh2), lambda b, h: (b, h)),                # q pair
            pl.BlockSpec((S, Dh2), lambda b, h: (b, n_pair + h)),       # k pair
            pl.BlockSpec((S, Dh2), lambda b, h: (b, 2 * n_pair + h)),   # v pair
            pl.BlockSpec((P, Dh2), lambda b, h: (0, h)),                # k_r pair
            pl.BlockSpec((1, 1, Dh2), lambda b, h: (h, 0, 0)),          # r_w_bias
            pl.BlockSpec((1, 1, Dh2), lambda b, h: (h, 0, 0)),          # r_r_bias
            pl.BlockSpec((1, 1, Dh2), lambda b, h: (h, 0, 0)),          # r_s_bias
            pl.BlockSpec((1, 2, Dh2), lambda b, h: (h, 0, 0)),          # seg_embed pair
            pl.BlockSpec((1, 1, S), lambda b, h: (b, 0, 0)),            # key padding
            pl.BlockSpec((1, S, 1), lambda b, h: (b, 0, 0)),            # token type (q)
            pl.BlockSpec((1, 1, S), lambda b, h: (b, 0, 0)),            # token type (k)
            pl.BlockSpec((Dh2, D), lambda b, h: (h, 0)),                # O weight pair
            pl.BlockSpec((S, D), lambda b, h: (b, 0)),                  # residual
            pl.BlockSpec((1, D), lambda b, h: (0, 0)),                  # LN gamma
            pl.BlockSpec((1, D), lambda b, h: (0, 0)),                  # LN beta
        ],
        out_specs=pl.BlockSpec((S, D), lambda b, h: (b, 0)),
        scratch_shapes=[pltpu.VMEM((S, D), jnp.float32)],
        compiler_params=pltpu.CompilerParams(
            dimension_semantics=("parallel", "arbitrary"),
            vmem_limit_bytes=_VMEM_LIMIT),
    )(qkv, qkv, qkv, kr, rw, rr, rs, seg_pair, kp, tt_q, tt_k,
      w_o, h_res, ln_g, ln_b)


# ----------------------------------------------------------------------------
# QA head: per-batch [S,D]@[D,128] (fc weight zero-padded for lane-dense stores)
# + softmax over the sequence dim; the wrapper slices the first 2 columns.
# ----------------------------------------------------------------------------

def _qa_head_kernel(h_ref, w_ref, b_ref, o_ref):
    logits = jnp.dot(h_ref[...], w_ref[...],
                     preferred_element_type=jnp.float32) + b_ref[...]   # [S, 128]
    m = jnp.max(logits, axis=0, keepdims=True)
    e = jnp.exp(logits - m)
    o_ref[...] = e / jnp.sum(e, axis=0, keepdims=True)


def pallas_qa_head(h2d, w_pad, b_pad, *, B, S):
    M, D = h2d.shape
    N = w_pad.shape[1]
    return pl.pallas_call(
        _qa_head_kernel,
        out_shape=jax.ShapeDtypeStruct((M, N), jnp.float32),
        grid=(B,),
        in_specs=[pl.BlockSpec((S, D), lambda b: (b, 0)),
                  pl.BlockSpec((D, N), lambda b: (0, 0)),
                  pl.BlockSpec((1, N), lambda b: (0, 0))],
        out_specs=pl.BlockSpec((S, N), lambda b: (b, 0)),
        compiler_params=pltpu.CompilerParams(
            dimension_semantics=("parallel",),
            vmem_limit_bytes=_VMEM_LIMIT),
    )(h2d, w_pad, b_pad)


# ----------------------------------------------------------------------------
# XLNet backbone (HF XLNetModel semantics: attn_type='bi', no mems, eval mode)
# ----------------------------------------------------------------------------

def relative_positional_encoding(qlen, klen, d_model):
    freq_seq = jnp.arange(0, d_model, 2, dtype=jnp.float32)
    inv_freq = 1.0 / (10000.0 ** (freq_seq / d_model))
    fwd_pos_seq = jnp.arange(klen, -qlen, -1, dtype=jnp.float32)   # length 2S
    sinusoid = fwd_pos_seq[:, None] * inv_freq[None, :]
    return jnp.concatenate([jnp.sin(sinusoid), jnp.cos(sinusoid)], axis=-1)  # [2S, D]


def xlnet_layer(h2d, pos_emb, kp, tt_q, tt_k, lp, *, B, S, roll_cfg):
    n_pair = lp["rw"].shape[0]
    Dh2 = lp["rw"].shape[2]
    H, Dh = 2 * n_pair, Dh2 // 2

    # fused Q/K/V projection (one matmul, weights concatenated at init)
    qkv = pallas_matmul(h2d, lp["w_qkv"])                               # [M, 3*H*Dh]
    # positional key projection (batch-independent)
    kr = pallas_matmul(pos_emb.astype(jnp.bfloat16), lp["w_r"])         # [2S, H*Dh]

    attn_out = pallas_rel_attention(
        qkv, kr, lp["rw"], lp["rr"], lp["rs"], lp["seg_pair"],
        kp, tt_q, tt_k, lp["w_o"], h2d, lp["ln1_g"], lp["ln1_b"],
        B=B, S=S, H=H, Dh=Dh, roll_cfg=roll_cfg)                        # [M, D]

    # XLNetFeedForward: LN(x + W2(gelu(W1 x + b1)) + b2)
    ff1 = pallas_matmul_bias_gelu(attn_out, lp["ff_w1"], lp["ff_b1"])
    return pallas_matmul_bias_res_ln(ff1, lp["ff_w2"], lp["ff_b2"], attn_out,
                                     lp["ln2_g"], lp["ln2_b"])


@functools.partial(jax.jit, static_argnames=("roll_cfg",))
def _xlnet_qa_forward_jit(params, input_ids, token_type_ids, attention_mask,
                          *, roll_cfg):
    B, S = input_ids.shape
    # TODO(synk): embedding gather stays in XLA (no clean Pallas gather here).
    h = params["word_emb"][input_ids].astype(jnp.bfloat16)
    D = h.shape[-1]
    h2d = h.reshape(B * S, D)

    # per-row vectors only — the [S,S] mask / segment indicator is built in-kernel
    kp = (1.0 - attention_mask.astype(jnp.float32)).reshape(B, 1, S)
    tt = token_type_ids.astype(jnp.float32)
    tt_q = tt.reshape(B, S, 1)
    tt_k = tt.reshape(B, 1, S)

    pos_emb = relative_positional_encoding(S, S, D)                     # [2S, D] f32

    for lp in params["layers"]:
        h2d = xlnet_layer(h2d, pos_emb, kp, tt_q, tt_k, lp,
                          B=B, S=S, roll_cfg=roll_cfg)

    probs = pallas_qa_head(h2d, params["fc_w_pad"], params["fc_b_pad"], B=B, S=S)
    probs = probs.reshape(B, S, -1)
    return probs[..., 0], probs[..., 1]


def xlnet_qa_forward(params, input_ids, token_type_ids, attention_mask):
    S = int(input_ids.shape[1])
    roll_cfg = _get_roll_cfg(S)   # eager probe (outside jit) for the strided rel-shift
    return _xlnet_qa_forward_jit(params, input_ids, token_type_ids, attention_mask,
                                 roll_cfg=roll_cfg)


# ----------------------------------------------------------------------------
# Parameters: deterministic synthetic init (torch layout) + one-time device
# re-layout (hoisted out of the forward).
# ----------------------------------------------------------------------------

def init_params(key, cfg):
    V, D, H, Dh, Di, L = (cfg["vocab"], cfg["d_model"], cfg["n_head"],
                          cfg["d_head"], cfg["d_inner"], cfg["n_layer"])
    std = 0.02
    k_emb, k_fc, *k_layers = jax.random.split(key, 2 + L)

    def nrm(k, shape):
        return jax.random.normal(k, shape, jnp.float32) * std

    layers = []
    for kl in k_layers:
        ks = jax.random.split(kl, 11)
        layers.append(dict(
            q=nrm(ks[0], (D, H, Dh)), k=nrm(ks[1], (D, H, Dh)),
            v=nrm(ks[2], (D, H, Dh)), o=nrm(ks[3], (D, H, Dh)),
            r=nrm(ks[4], (D, H, Dh)),
            r_w_bias=nrm(ks[5], (H, Dh)), r_r_bias=nrm(ks[6], (H, Dh)),
            r_s_bias=nrm(ks[7], (H, Dh)), seg_embed=nrm(ks[8], (2, H, Dh)),
            ln1_g=jnp.ones((D,), jnp.float32), ln1_b=jnp.zeros((D,), jnp.float32),
            ff_w1=nrm(ks[9], (Di, D)), ff_b1=jnp.zeros((Di,), jnp.float32),
            ff_w2=nrm(ks[10], (D, Di)), ff_b2=jnp.zeros((D,), jnp.float32),
            ln2_g=jnp.ones((D,), jnp.float32), ln2_b=jnp.zeros((D,), jnp.float32),
        ))
    return dict(
        word_emb=nrm(k_emb, (V, D)),
        layers=layers,
        fc_w=nrm(k_fc, (2, D)),
        fc_b=jnp.zeros((2,), jnp.float32),
    )


def prepare_params(raw, cfg):
    """One-time weight re-layout / cast to the kernel-friendly device layout."""
    D, H, Dh = cfg["d_model"], cfg["n_head"], cfg["d_head"]
    assert H % 2 == 0, "attention kernel processes head pairs"
    bf = jnp.bfloat16
    f32 = jnp.float32
    layers = []
    for p in raw["layers"]:
        w_qkv = jnp.concatenate(
            [p["q"].reshape(D, H * Dh), p["k"].reshape(D, H * Dh),
             p["v"].reshape(D, H * Dh)], axis=1).astype(bf)               # [D, 3*H*Dh]
        w_r = p["r"].reshape(D, H * Dh).astype(bf)
        w_o = jnp.transpose(p["o"], (1, 2, 0)).reshape(H * Dh, D).astype(bf)
        seg_pair = (jnp.transpose(p["seg_embed"], (1, 0, 2))              # [H,2,Dh]
                    .reshape(H // 2, 2, 2, Dh).transpose(0, 2, 1, 3)
                    .reshape(H // 2, 2, 2 * Dh).astype(f32))              # [H/2,2,2Dh]
        layers.append(dict(
            w_qkv=w_qkv, w_r=w_r, w_o=w_o, seg_pair=seg_pair,
            rw=p["r_w_bias"].reshape(H // 2, 1, 2 * Dh).astype(f32),
            rr=p["r_r_bias"].reshape(H // 2, 1, 2 * Dh).astype(f32),
            rs=p["r_s_bias"].reshape(H // 2, 1, 2 * Dh).astype(f32),
            ln1_g=p["ln1_g"].reshape(1, D), ln1_b=p["ln1_b"].reshape(1, D),
            ff_w1=p["ff_w1"].T.astype(bf),
            ff_b1=p["ff_b1"].reshape(1, -1).astype(f32),
            ff_w2=p["ff_w2"].T.astype(bf),
            ff_b2=p["ff_b2"].reshape(1, D).astype(f32),
            ln2_g=p["ln2_g"].reshape(1, D), ln2_b=p["ln2_b"].reshape(1, D),
        ))
    fc_w_pad = jnp.zeros((D, 128), f32).at[:, :2].set(raw["fc_w"].T).astype(bf)
    fc_b_pad = jnp.zeros((1, 128), f32).at[0, :2].set(raw["fc_b"])
    return dict(word_emb=raw["word_emb"], layers=layers,
                fc_w_pad=fc_w_pad, fc_b_pad=fc_b_pad)


if __name__ == "__main__":
    # Small but layout-compatible config (XLNet-like: d_head=64 so head pairs are
    # 128 lanes wide; S multiple of 8).
    cfg = dict(vocab=128, d_model=128, n_layer=2, n_head=2, d_head=64, d_inner=256)
    B, S = 2, 16

    key = jax.random.PRNGKey(0)
    pkey, dkey = jax.random.split(key)
    params = prepare_params(init_params(pkey, cfg), cfg)

    input_ids = jax.random.randint(dkey, (B, S), 0, cfg["vocab"], dtype=jnp.int32)
    token_type_ids = jnp.concatenate(
        [jnp.zeros((B, S // 2), jnp.int32), jnp.ones((B, S // 2), jnp.int32)], axis=1)
    attention_mask = jnp.ones((B, S), jnp.float32)

    start_pred, end_pred = xlnet_qa_forward(params, input_ids, token_type_ids,
                                            attention_mask)
    jax.block_until_ready((start_pred, end_pred))

    assert start_pred.shape == (B, S) and end_pred.shape == (B, S)
    assert jnp.allclose(jnp.sum(start_pred, axis=-1), 1.0, atol=1e-4)
    assert jnp.allclose(jnp.sum(end_pred, axis=-1), 1.0, atol=1e-4)
    print("KERNEL_OK")
</pallas_src>

<mosaic_0001>
module attributes {stable_mosaic.version = 11 : i64} {
  func.func @_roll_probe_kernel(%arg0: memref<16x32xf32, #tpu.memory_space<vmem>>, %arg1: memref<16x32xf32, #tpu.memory_space<vmem>>) attributes {dimension_semantics = [], scalar_prefetch = 0 : i64, scratch_operands = 0 : i64, tpu.core_type = #tpu.core_type<tc>} {
    %c0 = arith.constant 0 : index
    %c0_0 = arith.constant 0 : index
    %0 = vector.load %arg0[%c0, %c0_0] : memref<16x32xf32, #tpu.memory_space<vmem>>, vector<16x32xf32>
    %c16_i32 = arith.constant 16 : i32
    %1 = tpu.dynamic_rotate %0 by %c16_i32 dim 1 {stride = 1 : si32, stride_dimension = 0 : si32} : vector<16x32xf32>, i32 -> vector<16x32xf32>
    %c0_1 = arith.constant 0 : index
    %c0_2 = arith.constant 0 : index
    %2 = vector.load %arg1[%c0_1, %c0_2] : memref<16x32xf32, #tpu.memory_space<vmem>>, vector<16x32xf32>
    tpu.vector_store %arg1[%c0_1, %c0_2], %1 {strides = array<i32>} : memref<16x32xf32, #tpu.memory_space<vmem>>, vector<16x32xf32>,
    return
  }
}

module attributes {stable_mosaic.version = 11 : i64} {
  func.func @_mm_kernel(%arg0: i32, %arg1: i32, %arg2: i32, %arg3: memref<32x128xbf16, #tpu.memory_space<vmem>>, %arg4: memref<128x128xbf16, #tpu.memory_space<vmem>>, %arg5: memref<32x128xbf16, #tpu.memory_space<vmem>>, %arg6: memref<32x128xf32, #tpu.memory_space<vmem>>) attributes {dimension_semantics = [#tpu.dimension_semantics<parallel>, #tpu.dimension_semantics<parallel>, #tpu.dimension_semantics<arbitrary>], iteration_bounds = array<i64: 1, 1, 1>, scalar_prefetch = 0 : i64, scratch_operands = 1 : i64, tpu.core_type = #tpu.core_type<tc>, window_params = [{transform_indices = @transform_0, window_bounds = array<i64: 32, 128>}, {transform_indices = @transform_1, window_bounds = array<i64: 128, 128>}, {transform_indices = @transform_2, window_bounds = array<i64: 32, 128>}]} {
    %c0_i32 = arith.constant 0 : i32
    %0 = arith.cmpi eq, %arg2, %c0_i32 : i32
    %1 = arith.extui %0 : i1 to i32
    %c0_i32_0 = arith.constant 0 : i32
    %2 = arith.cmpi ne, %1, %c0_i32_0 : i32
    scf.if %2 {
      %cst_10 = arith.constant 0.000000e+00 : f32
      %12 = vector.broadcast %cst_10 : f32 to vector<32x128xf32>
      %c0_11 = arith.constant 0 : index
      %c0_12 = arith.constant 0 : index
      %13 = vector.load %arg6[%c0_11, %c0_12] : memref<32x128xf32, #tpu.memory_space<vmem>>, vector<32x128xf32>
      tpu.vector_store %arg6[%c0_11, %c0_12], %12 {strides = array<i32>} : memref<32x128xf32, #tpu.memory_space<vmem>>, vector<32x128xf32>,
    } else {
    }
    %c0 = arith.constant 0 : index
    %c0_1 = arith.constant 0 : index
    %3 = vector.load %arg6[%c0, %c0_1] : memref<32x128xf32, #tpu.memory_space<vmem>>, vector<32x128xf32>
    %c0_2 = arith.constant 0 : index
    %c0_3 = arith.constant 0 : index
    %4 = vector.load %arg3[%c0_2, %c0_3] : memref<32x128xbf16, #tpu.memory_space<vmem>>, vector<32x128xbf16>
    %c0_4 = arith.constant 0 : index
    %c0_5 = arith.constant 0 : index
    %5 = vector.load %arg4[%c0_4, %c0_5] : memref<128x128xbf16, #tpu.memory_space<vmem>>, vector<128x128xbf16>
    %cst = arith.constant dense<0.000000e+00> : vector<32x128xf32>
    %6 = tpu.matmul %4, %5, %cst {dimension_numbers = #tpu.dot_dimension_numbers<[1], [0], [0], [1], [0, 0, 1, 1], [], []>} : vector<32x128xbf16>, vector<128x128xbf16>, vector<32x128xf32> -> vector<32x128xf32>
    %7 = arith.addf %3, %6 : vector<32x128xf32>
    %c0_6 = arith.constant 0 : index
    %c0_7 = arith.constant 0 : index
    %8 = vector.load %arg6[%c0_6, %c0_7] : memref<32x128xf32, #tpu.memory_space<vmem>>, vector<32x128xf32>
    tpu.vector_store %arg6[%c0_6, %c0_7], %7 {strides = array<i32>} : memref<32x128xf32, #tpu.memory_space<vmem>>, vector<32x128xf32>,
    %c0_i32_8 = arith.constant 0 : i32
    %9 = arith.cmpi eq, %arg2, %c0_i32_8 : i32
    %10 = arith.extui %9 : i1 to i32
    %c0_i32_9 = arith.constant 0 : i32
    %11 = arith.cmpi ne, %10, %c0_i32_9 : i32
    scf.if %11 {
      %c0_10 = arith.constant 0 : index
      %c0_11 = arith.constant 0 : index
      %12 = vector.load %arg6[%c0_10, %c0_11] : memref<32x128xf32, #tpu.memory_space<vmem>>, vector<32x128xf32>
      %13 = arith.truncf %12 : vector<32x128xf32> to vector<32x128xbf16>
      %c0_12 = arith.constant 0 : index
      %c0_13 = arith.constant 0 : index
      %14 = vector.load %arg5[%c0_12, %c0_13] : memref<32x128xbf16, #tpu.memory_space<vmem>>, vector<32x128xbf16>
      tpu.vector_store %arg5[%c0_12, %c0_13], %13 {strides = array<i32>} : memref<32x128xbf16, #tpu.memory_space<vmem>>, vector<32x128xbf16>,
    } else {
    }
    return
  }
  func.func @transform_0(%arg0: i32, %arg1: i32, %arg2: i32) -> (i32, i32) {
    %c0_i32 = arith.constant 0 : i32
    return %arg0, %arg2 : i32, i32
  }
  func.func @transform_1(%arg0: i32, %arg1: i32, %arg2: i32) -> (i32, i32) {
    %c0_i32 = arith.constant 0 : i32
    return %arg2, %arg1 : i32, i32
  }
  func.func @transform_2(%arg0: i32, %arg1: i32, %arg2: i32) -> (i32, i32) {
    %c0_i32 = arith.constant 0 : i32
    return %arg0, %arg1 : i32, i32
  }
}

module attributes {stable_mosaic.version = 11 : i64} {
  func.func @_mm_kernel(%arg0: i32, %arg1: i32, %arg2: i32, %arg3: memref<32x128xbf16, #tpu.memory_space<vmem>>, %arg4: memref<128x384xbf16, #tpu.memory_space<vmem>>, %arg5: memref<32x384xbf16, #tpu.memory_space<vmem>>, %arg6: memref<32x384xf32, #tpu.memory_space<vmem>>) attributes {dimension_semantics = [#tpu.dimension_semantics<parallel>, #tpu.dimension_semantics<parallel>, #tpu.dimension_semantics<arbitrary>], iteration_bounds = array<i64: 1, 1, 1>, scalar_prefetch = 0 : i64, scratch_operands = 1 : i64, tpu.core_type = #tpu.core_type<tc>, window_params = [{transform_indices = @transform_0, window_bounds = array<i64: 32, 128>}, {transform_indices = @transform_1, window_bounds = array<i64: 128, 384>}, {transform_indices = @transform_2, window_bounds = array<i64: 32, 384>}]} {
    %c0_i32 = arith.constant 0 : i32
    %0 = arith.cmpi eq, %arg2, %c0_i32 : i32
    %1 = arith.extui %0 : i1 to i32
    %c0_i32_0 = arith.constant 0 : i32
    %2 = arith.cmpi ne, %1, %c0_i32_0 : i32
    scf.if %2 {
      %cst_10 = arith.constant 0.000000e+00 : f32
      %12 = vector.broadcast %cst_10 : f32 to vector<32x384xf32>
      %c0_11 = arith.constant 0 : index
      %c0_12 = arith.constant 0 : index
      %13 = vector.load %arg6[%c0_11, %c0_12] : memref<32x384xf32, #tpu.memory_space<vmem>>, vector<32x384xf32>
      tpu.vector_store %arg6[%c0_11, %c0_12], %12 {strides = array<i32>} : memref<32x384xf32, #tpu.memory_space<vmem>>, vector<32x384xf32>,
    } else {
    }
    %c0 = arith.constant 0 : index
    %c0_1 = arith.constant 0 : index
    %3 = vector.load %arg6[%c0, %c0_1] : memref<32x384xf32, #tpu.memory_space<vmem>>, vector<32x384xf32>
    %c0_2 = arith.constant 0 : index
    %c0_3 = arith.constant 0 : index
    %4 = vector.load %arg3[%c0_2, %c0_3] : memref<32x128xbf16, #tpu.memory_space<vmem>>, vector<32x128xbf16>
    %c0_4 = arith.constant 0 : index
    %c0_5 = arith.constant 0 : index
    %5 = vector.load %arg4[%c0_4, %c0_5] : memref<128x384xbf16, #tpu.memory_space<vmem>>, vector<128x384xbf16>
    %cst = arith.constant dense<0.000000e+00> : vector<32x384xf32>
    %6 = tpu.matmul %4, %5, %cst {dimension_numbers = #tpu.dot_dimension_numbers<[1], [0], [0], [1], [0, 0, 1, 1], [], []>} : vector<32x128xbf16>, vector<128x384xbf16>, vector<32x384xf32> -> vector<32x384xf32>
    %7 = arith.addf %3, %6 : vector<32x384xf32>
    %c0_6 = arith.constant 0 : index
    %c0_7 = arith.constant 0 : index
    %8 = vector.load %arg6[%c0_6, %c0_7] : memref<32x384xf32, #tpu.memory_space<vmem>>, vector<32x384xf32>
    tpu.vector_store %arg6[%c0_6, %c0_7], %7 {strides = array<i32>} : memref<32x384xf32, #tpu.memory_space<vmem>>, vector<32x384xf32>,
    %c0_i32_8 = arith.constant 0 : i32
    %9 = arith.cmpi eq, %arg2, %c0_i32_8 : i32
    %10 = arith.extui %9 : i1 to i32
    %c0_i32_9 = arith.constant 0 : i32
    %11 = arith.cmpi ne, %10, %c0_i32_9 : i32
    scf.if %11 {
      %c0_10 = arith.constant 0 : index
      %c0_11 = arith.constant 0 : index
      %12 = vector.load %arg6[%c0_10, %c0_11] : memref<32x384xf32, #tpu.memory_space<vmem>>, vector<32x384xf32>
      %13 = arith.truncf %12 : vector<32x384xf32> to vector<32x384xbf16>
      %c0_12 = arith.constant 0 : index
      %c0_13 = arith.constant 0 : index
      %14 = vector.load %arg5[%c0_12, %c0_13] : memref<32x384xbf16, #tpu.memory_space<vmem>>, vector<32x384xbf16>
      tpu.vector_store %arg5[%c0_12, %c0_13], %13 {strides = array<i32>} : memref<32x384xbf16, #tpu.memory_space<vmem>>, vector<32x384xbf16>,
    } else {
    }
    return
  }
  func.func @transform_0(%arg0: i32, %arg1: i32, %arg2: i32) -> (i32, i32) {
    %c0_i32 = arith.constant 0 : i32
    return %arg0, %arg2 : i32, i32
  }
  func.func @transform_1(%arg0: i32, %arg1: i32, %arg2: i32) -> (i32, i32) {
    %c0_i32 = arith.constant 0 : i32
    return %arg2, %arg1 : i32, i32
  }
  func.func @transform_2(%arg0: i32, %arg1: i32, %arg2: i32) -> (i32, i32) {
    %c0_i32 = arith.constant 0 : i32
    return %arg0, %arg1 : i32, i32
  }
}

module attributes {stable_mosaic.version = 11 : i64} {
  func.func @_rel_attn_kernel(%arg0: i32, %arg1: i32, %arg2: memref<16x128xbf16, #tpu.memory_space<vmem>>, %arg3: memref<16x128xbf16, #tpu.memory_space<vmem>>, %arg4: memref<16x128xbf16, #tpu.memory_space<vmem>>, %arg5: memref<32x128xbf16, #tpu.memory_space<vmem>>, %arg6: memref<1x1x128xf32, #tpu.memory_space<vmem>>, %arg7: memref<1x1x128xf32, #tpu.memory_space<vmem>>, %arg8: memref<1x1x128xf32, #tpu.memory_space<vmem>>, %arg9: memref<1x2x128xf32, #tpu.memory_space<vmem>>, %arg10: memref<1x1x16xf32, #tpu.memory_space<vmem>>, %arg11: memref<1x16x1xf32, #tpu.memory_space<vmem>>, %arg12: memref<1x1x16xf32, #tpu.memory_space<vmem>>, %arg13: memref<128x128xbf16, #tpu.memory_space<vmem>>, %arg14: memref<16x128xbf16, #tpu.memory_space<vmem>>, %arg15: memref<1x128xf32, #tpu.memory_space<vmem>>, %arg16: memref<1x128xf32, #tpu.memory_space<vmem>>, %arg17: memref<16x128xbf16, #tpu.memory_space<vmem>>, %arg18: memref<16x128xf32, #tpu.memory_space<vmem>>) attributes {dimension_semantics = [#tpu.dimension_semantics<parallel>, #tpu.dimension_semantics<arbitrary>], iteration_bounds = array<i64: 2, 1>, scalar_prefetch = 0 : i64, scratch_operands = 1 : i64, tpu.core_type = #tpu.core_type<tc>, window_params = [{transform_indices = @transform_0, window_bounds = array<i64: 16, 128>}, {transform_indices = @transform_1, window_bounds = array<i64: 16, 128>}, {transform_indices = @transform_2, window_bounds = array<i64: 16, 128>}, {transform_indices = @transform_3, window_bounds = array<i64: 32, 128>}, {transform_indices = @transform_4, window_bounds = array<i64: 1, 1, 128>}, {transform_indices = @transform_5, window_bounds = array<i64: 1, 1, 128>}, {transform_indices = @transform_6, window_bounds = array<i64: 1, 1, 128>}, {transform_indices = @transform_7, window_bounds = array<i64: 1, 2, 128>}, {transform_indices = @transform_8, window_bounds = array<i64: 1, 1, 16>}, {transform_indices = @transform_9, window_bounds = array<i64: 1, 16, 1>}, {transform_indices = @transform_10, window_bounds = array<i64: 1, 1, 16>}, {transform_indices = @transform_11, window_bounds = array<i64: 128, 128>}, {transform_indices = @transform_12, window_bounds = array<i64: 16, 128>}, {pipeline_mode = #tpu.pipeline_mode<synchronous>, transform_indices = @transform_13, window_bounds = array<i64: 1, 128>}, {pipeline_mode = #tpu.pipeline_mode<synchronous>, transform_indices = @transform_14, window_bounds = array<i64: 1, 128>}, {transform_indices = @transform_15, window_bounds = array<i64: 16, 128>}]} {
    %c0_i32 = arith.constant 0 : i32
    %0 = arith.cmpi eq, %arg1, %c0_i32 : i32
    %1 = arith.extui %0 : i1 to i32
    %c0_i32_0 = arith.constant 0 : i32
    %2 = arith.cmpi ne, %1, %c0_i32_0 : i32
    scf.if %2 {
      %cst_93 = arith.constant 0.000000e+00 : f32
      %235 = vector.broadcast %cst_93 : f32 to vector<16x128xf32>
      %c0_94 = arith.constant 0 : index
      %c0_95 = arith.constant 0 : index
      %236 = vector.load %arg18[%c0_94, %c0_95] : memref<16x128xf32, #tpu.memory_space<vmem>>, vector<16x128xf32>
      tpu.vector_store %arg18[%c0_94, %c0_95], %235 {strides = array<i32>} : memref<16x128xf32, #tpu.memory_space<vmem>>, vector<16x128xf32>,
    } else {
    }
    %3 = tpu.iota {dimensions = array<i32: 0>} : vector<16x16xi32>
    %4 = tpu.iota {dimensions = array<i32: 1>} : vector<16x16xi32>
    %c0 = arith.constant 0 : index
    %c0_1 = arith.constant 0 : index
    %c0_2 = arith.constant 0 : index
    %5 = vector.load %arg10[%c0, %c0_1, %c0_2] : memref<1x1x16xf32, #tpu.memory_space<vmem>>, vector<1x1x16xf32>
    %6 = vector.shape_cast %5 : vector<1x1x16xf32> to vector<1x16xf32>
    %cst = arith.constant 5.000000e-01 : f32
    %7 = vector.broadcast %cst : f32 to vector<1x16xf32>
    %8 = arith.cmpf ogt, %6, %7 : vector<1x16xf32>
    %9 = arith.cmpi ne, %3, %4 : vector<16x16xi32>
    %10 = vector.broadcast %8 : vector<1x16xi1> to vector<16x16xi1>
    %11 = arith.andi %10, %9 : vector<16x16xi1>
    %c0_3 = arith.constant 0 : index
    %c0_4 = arith.constant 0 : index
    %c0_5 = arith.constant 0 : index
    %12 = vector.load %arg11[%c0_3, %c0_4, %c0_5] : memref<1x16x1xf32, #tpu.memory_space<vmem>>, vector<1x16x1xf32>
    %13 = vector.shape_cast %12 : vector<1x16x1xf32> to vector<16x1xf32>
    %c0_6 = arith.constant 0 : index
    %c0_7 = arith.constant 0 : index
    %c0_8 = arith.constant 0 : index
    %14 = vector.load %arg12[%c0_6, %c0_7, %c0_8] : memref<1x1x16xf32, #tpu.memory_space<vmem>>, vector<1x1x16xf32>
    %15 = vector.shape_cast %14 : vector<1x1x16xf32> to vector<1x16xf32>
    %16 = vector.broadcast %13 : vector<16x1xf32> to vector<16x16xf32>
    %17 = vector.broadcast %15 : vector<1x16xf32> to vector<16x16xf32>
    %18 = arith.cmpf one, %16, %17 : vector<16x16xf32>
    %c0_9 = arith.constant 0 : index
    %c0_10 = arith.constant 0 : index
    %c0_11 = arith.constant 0 : index
    %19 = vector.load %arg9[%c0_9, %c0_10, %c0_11] : memref<1x2x128xf32, #tpu.memory_space<vmem>>, vector<1x2x128xf32>
    %20 = vector.shape_cast %19 : vector<1x2x128xf32> to vector<2x128xf32>
    %c0_12 = arith.constant 0 : index
    %c0_13 = arith.constant 0 : index
    %21 = vector.load %arg2[%c0_12, %c0_13] : memref<16x128xbf16, #tpu.memory_space<vmem>>, vector<16x64xbf16>
    %22 = arith.extf %21 : vector<16x64xbf16> to vector<16x64xf32>
    %c0_14 = arith.constant 0 : index
    %c0_15 = arith.constant 0 : index
    %23 = vector.load %arg3[%c0_14, %c0_15] : memref<16x128xbf16, #tpu.memory_space<vmem>>, vector<16x64xbf16>
    %c0_16 = arith.constant 0 : index
    %c0_17 = arith.constant 0 : index
    %24 = vector.load %arg4[%c0_16, %c0_17] : memref<16x128xbf16, #tpu.memory_space<vmem>>, vector<16x64xbf16>
    %c0_18 = arith.constant 0 : index
    %c0_19 = arith.constant 0 : index
    %25 = vector.load %arg5[%c0_18, %c0_19] : memref<32x128xbf16, #tpu.memory_space<vmem>>, vector<32x64xbf16>
    %c0_20 = arith.constant 0 : index
    %c0_21 = arith.constant 0 : index
    %c0_22 = arith.constant 0 : index
    %26 = vector.load %arg6[%c0_20, %c0_21, %c0_22] : memref<1x1x128xf32, #tpu.memory_space<vmem>>, vector<1x1x64xf32>
    %27 = vector.shape_cast %26 : vector<1x1x64xf32> to vector<1x64xf32>
    %c0_23 = arith.constant 0 : index
    %c0_24 = arith.constant 0 : index
    %c0_25 = arith.constant 0 : index
    %28 = vector.load %arg7[%c0_23, %c0_24, %c0_25] : memref<1x1x128xf32, #tpu.memory_space<vmem>>, vector<1x1x64xf32>
    %29 = vector.shape_cast %28 : vector<1x1x64xf32> to vector<1x64xf32>
    %c0_26 = arith.constant 0 : index
    %c0_27 = arith.constant 0 : index
    %c0_28 = arith.constant 0 : index
    %30 = vector.load %arg8[%c0_26, %c0_27, %c0_28] : memref<1x1x128xf32, #tpu.memory_space<vmem>>, vector<1x1x64xf32>
    %31 = vector.shape_cast %30 : vector<1x1x64xf32> to vector<1x64xf32>
    %32 = vector.broadcast %27 : vector<1x64xf32> to vector<16x64xf32>
    %33 = arith.addf %22, %32 : vector<16x64xf32>
    %cst_29 = arith.constant 1.250000e-01 : f32
    %34 = vector.broadcast %cst_29 : f32 to vector<16x64xf32>
    %35 = arith.mulf %33, %34 : vector<16x64xf32>
    %36 = arith.truncf %35 : vector<16x64xf32> to vector<16x64xbf16>
    %37 = vector.broadcast %29 : vector<1x64xf32> to vector<16x64xf32>
    %38 = arith.addf %22, %37 : vector<16x64xf32>
    %cst_30 = arith.constant 1.250000e-01 : f32
    %39 = vector.broadcast %cst_30 : f32 to vector<16x64xf32>
    %40 = arith.mulf %38, %39 : vector<16x64xf32>
    %41 = arith.truncf %40 : vector<16x64xf32> to vector<16x64xbf16>
    %42 = vector.broadcast %31 : vector<1x64xf32> to vector<16x64xf32>
    %43 = arith.addf %22, %42 : vector<16x64xf32>
    %cst_31 = arith.constant 1.250000e-01 : f32
    %44 = vector.broadcast %cst_31 : f32 to vector<16x64xf32>
    %45 = arith.mulf %43, %44 : vector<16x64xf32>
    %cst_32 = arith.constant dense<0.000000e+00> : vector<16x16xf32>
    %46 = tpu.matmul %36, %23, %cst_32 {dimension_numbers = #tpu.dot_dimension_numbers<[1], [1], [0], [0], [0, 0, 1, 0], [], []>} : vector<16x64xbf16>, vector<16x64xbf16>, vector<16x16xf32> -> vector<16x16xf32>
    %cst_33 = arith.constant dense<0.000000e+00> : vector<16x32xf32>
    %47 = tpu.matmul %41, %25, %cst_33 {dimension_numbers = #tpu.dot_dimension_numbers<[1], [1], [0], [0], [0, 0, 1, 0], [], []>} : vector<16x64xbf16>, vector<32x64xbf16>, vector<16x32xf32> -> vector<16x32xf32>
    %48 = tpu.iota {dimensions = array<i32: 0>} : vector<16x32xi32>
    %c16_i32 = arith.constant 16 : i32
    %49 = vector.broadcast %c16_i32 : i32 to vector<16x32xi32>
    %50 = arith.subi %49, %48 : vector<16x32xi32>
    %51 = vector.extract_strided_slice %47 {offsets = [0, 1], sizes = [16, 31], strides = [1, 1]} : vector<16x32xf32> to vector<16x31xf32>
    %52 = vector.extract_strided_slice %47 {offsets = [0, 0], sizes = [16, 1], strides = [1, 1]} : vector<16x32xf32> to vector<16x1xf32>
    %53 = tpu.concatenate %51, %52 in 1 : vector<16x31xf32>, vector<16x1xf32> -> vector<16x32xf32>
    %c1_i32 = arith.constant 1 : i32
    %54 = vector.broadcast %c1_i32 : i32 to vector<16x32xi32>
    %55 = arith.andi %50, %54 : vector<16x32xi32>
    %c0_i32_34 = arith.constant 0 : i32
    %56 = vector.broadcast %c0_i32_34 : i32 to vector<16x32xi32>
    %57 = arith.cmpi ne, %55, %56 : vector<16x32xi32>
    %58 = arith.select %57, %53, %47 : vector<16x32xi1>, vector<16x32xf32>
    %59 = vector.extract_strided_slice %58 {offsets = [0, 2], sizes = [16, 30], strides = [1, 1]} : vector<16x32xf32> to vector<16x30xf32>
    %60 = vector.extract_strided_slice %58 {offsets = [0, 0], sizes = [16, 2], strides = [1, 1]} : vector<16x32xf32> to vector<16x2xf32>
    %61 = tpu.concatenate %59, %60 in 1 : vector<16x30xf32>, vector<16x2xf32> -> vector<16x32xf32>
    %c2_i32 = arith.constant 2 : i32
    %62 = vector.broadcast %c2_i32 : i32 to vector<16x32xi32>
    %63 = arith.andi %50, %62 : vector<16x32xi32>
    %c0_i32_35 = arith.constant 0 : i32
    %64 = vector.broadcast %c0_i32_35 : i32 to vector<16x32xi32>
    %65 = arith.cmpi ne, %63, %64 : vector<16x32xi32>
    %66 = arith.select %65, %61, %58 : vector<16x32xi1>, vector<16x32xf32>
    %67 = vector.extract_strided_slice %66 {offsets = [0, 4], sizes = [16, 28], strides = [1, 1]} : vector<16x32xf32> to vector<16x28xf32>
    %68 = vector.extract_strided_slice %66 {offsets = [0, 0], sizes = [16, 4], strides = [1, 1]} : vector<16x32xf32> to vector<16x4xf32>
    %69 = tpu.concatenate %67, %68 in 1 : vector<16x28xf32>, vector<16x4xf32> -> vector<16x32xf32>
    %c4_i32 = arith.constant 4 : i32
    %70 = vector.broadcast %c4_i32 : i32 to vector<16x32xi32>
    %71 = arith.andi %50, %70 : vector<16x32xi32>
    %c0_i32_36 = arith.constant 0 : i32
    %72 = vector.broadcast %c0_i32_36 : i32 to vector<16x32xi32>
    %73 = arith.cmpi ne, %71, %72 : vector<16x32xi32>
    %74 = arith.select %73, %69, %66 : vector<16x32xi1>, vector<16x32xf32>
    %75 = vector.extract_strided_slice %74 {offsets = [0, 8], sizes = [16, 24], strides = [1, 1]} : vector<16x32xf32> to vector<16x24xf32>
    %76 = vector.extract_strided_slice %74 {offsets = [0, 0], sizes = [16, 8], strides = [1, 1]} : vector<16x32xf32> to vector<16x8xf32>
    %77 = tpu.concatenate %75, %76 in 1 : vector<16x24xf32>, vector<16x8xf32> -> vector<16x32xf32>
    %c8_i32 = arith.constant 8 : i32
    %78 = vector.broadcast %c8_i32 : i32 to vector<16x32xi32>
    %79 = arith.andi %50, %78 : vector<16x32xi32>
    %c0_i32_37 = arith.constant 0 : i32
    %80 = vector.broadcast %c0_i32_37 : i32 to vector<16x32xi32>
    %81 = arith.cmpi ne, %79, %80 : vector<16x32xi32>
    %82 = arith.select %81, %77, %74 : vector<16x32xi1>, vector<16x32xf32>
    %83 = vector.extract_strided_slice %82 {offsets = [0, 16], sizes = [16, 16], strides = [1, 1]} : vector<16x32xf32> to vector<16x16xf32>
    %84 = vector.extract_strided_slice %82 {offsets = [0, 0], sizes = [16, 16], strides = [1, 1]} : vector<16x32xf32> to vector<16x16xf32>
    %85 = tpu.concatenate %83, %84 in 1 : vector<16x16xf32>, vector<16x16xf32> -> vector<16x32xf32>
    %c16_i32_38 = arith.constant 16 : i32
    %86 = vector.broadcast %c16_i32_38 : i32 to vector<16x32xi32>
    %87 = arith.andi %50, %86 : vector<16x32xi32>
    %c0_i32_39 = arith.constant 0 : i32
    %88 = vector.broadcast %c0_i32_39 : i32 to vector<16x32xi32>
    %89 = arith.cmpi ne, %87, %88 : vector<16x32xi32>
    %90 = arith.select %89, %85, %82 : vector<16x32xi1>, vector<16x32xf32>
    %91 = vector.extract_strided_slice %90 {offsets = [0, 0], sizes = [16, 16], strides = [1, 1]} : vector<16x32xf32> to vector<16x16xf32>
    %92 = vector.extract_strided_slice %20 {offsets = [0, 0], sizes = [1, 64], strides = [1, 1]} : vector<2x128xf32> to vector<1x64xf32>
    %93 = vector.broadcast %92 : vector<1x64xf32> to vector<16x64xf32>
    %94 = arith.mulf %45, %93 : vector<16x64xf32>
    %cst_40 = arith.constant dense<0.000000e+00> : vector<16xf32>
    %95 = vector.multi_reduction <add>, %94, %cst_40 [1] : vector<16x64xf32> to vector<16xf32>
    %96 = vector.shape_cast %95 : vector<16xf32> to vector<16x1xf32>
    %97 = vector.extract_strided_slice %20 {offsets = [1, 0], sizes = [1, 64], strides = [1, 1]} : vector<2x128xf32> to vector<1x64xf32>
    %98 = vector.broadcast %97 : vector<1x64xf32> to vector<16x64xf32>
    %99 = arith.mulf %45, %98 : vector<16x64xf32>
    %cst_41 = arith.constant dense<0.000000e+00> : vector<16xf32>
    %100 = vector.multi_reduction <add>, %99, %cst_41 [1] : vector<16x64xf32> to vector<16xf32>
    %101 = vector.shape_cast %100 : vector<16xf32> to vector<16x1xf32>
    %102 = vector.shape_cast %101 : vector<16x1xf32> to vector<16x1xf32>
    %103 = vector.broadcast %102 : vector<16x1xf32> to vector<16x16xf32>
    %104 = vector.shape_cast %96 : vector<16x1xf32> to vector<16x1xf32>
    %105 = vector.broadcast %104 : vector<16x1xf32> to vector<16x16xf32>
    %106 = arith.select %18, %103, %105 : vector<16x16xi1>, vector<16x16xf32>
    %107 = arith.addf %46, %91 : vector<16x16xf32>
    %108 = arith.addf %107, %106 : vector<16x16xf32>
    %cst_42 = arith.constant -1.000000e+30 : f32
    %109 = vector.broadcast %cst_42 : f32 to vector<16x16xf32>
    %110 = arith.select %11, %109, %108 : vector<16x16xi1>, vector<16x16xf32>
    %cst_43 = arith.constant dense<0xFF800000> : vector<16xf32>
    %111 = vector.multi_reduction <maximumf>, %110, %cst_43 [1] : vector<16x16xf32> to vector<16xf32>
    %112 = vector.shape_cast %111 : vector<16xf32> to vector<16x1xf32>
    %113 = vector.broadcast %112 : vector<16x1xf32> to vector<16x16xf32>
    %114 = arith.subf %110, %113 : vector<16x16xf32>
    %115 = math.exp %114 : vector<16x16xf32>
    %cst_44 = arith.constant dense<0.000000e+00> : vector<16xf32>
    %116 = vector.multi_reduction <add>, %115, %cst_44 [1] : vector<16x16xf32> to vector<16xf32>
    %117 = vector.shape_cast %116 : vector<16xf32> to vector<16x1xf32>
    %118 = tpu.reciprocal %117 {approx = true} : vector<16x1xf32> -> vector<16x1xf32>
    %119 = vector.broadcast %118 : vector<16x1xf32> to vector<16x16xf32>
    %120 = arith.mulf %115, %119 : vector<16x16xf32>
    %121 = arith.truncf %120 : vector<16x16xf32> to vector<16x16xbf16>
    %cst_45 = arith.constant dense<0.000000e+00> : vector<16x64xf32>
    %122 = tpu.matmul %121, %24, %cst_45 {dimension_numbers = #tpu.dot_dimension_numbers<[1], [0], [0], [1], [0, 0, 1, 1], [], []>} : vector<16x16xbf16>, vector<16x64xbf16>, vector<16x64xf32> -> vector<16x64xf32>
    %c0_46 = arith.constant 0 : index
    %c64 = arith.constant 64 : index
    %123 = vector.load %arg2[%c0_46, %c64] : memref<16x128xbf16, #tpu.memory_space<vmem>>, vector<16x64xbf16>
    %124 = arith.extf %123 : vector<16x64xbf16> to vector<16x64xf32>
    %c0_47 = arith.constant 0 : index
    %c64_48 = arith.constant 64 : index
    %125 = vector.load %arg3[%c0_47, %c64_48] : memref<16x128xbf16, #tpu.memory_space<vmem>>, vector<16x64xbf16>
    %c0_49 = arith.constant 0 : index
    %c64_50 = arith.constant 64 : index
    %126 = vector.load %arg4[%c0_49, %c64_50] : memref<16x128xbf16, #tpu.memory_space<vmem>>, vector<16x64xbf16>
    %c0_51 = arith.constant 0 : index
    %c64_52 = arith.constant 64 : index
    %127 = vector.load %arg5[%c0_51, %c64_52] : memref<32x128xbf16, #tpu.memory_space<vmem>>, vector<32x64xbf16>
    %c0_53 = arith.constant 0 : index
    %c0_54 = arith.constant 0 : index
    %c64_55 = arith.constant 64 : index
    %128 = vector.load %arg6[%c0_53, %c0_54, %c64_55] : memref<1x1x128xf32, #tpu.memory_space<vmem>>, vector<1x1x64xf32>
    %129 = vector.shape_cast %128 : vector<1x1x64xf32> to vector<1x64xf32>
    %c0_56 = arith.constant 0 : index
    %c0_57 = arith.constant 0 : index
    %c64_58 = arith.constant 64 : index
    %130 = vector.load %arg7[%c0_56, %c0_57, %c64_58] : memref<1x1x128xf32, #tpu.memory_space<vmem>>, vector<1x1x64xf32>
    %131 = vector.shape_cast %130 : vector<1x1x64xf32> to vector<1x64xf32>
    %c0_59 = arith.constant 0 : index
    %c0_60 = arith.constant 0 : index
    %c64_61 = arith.constant 64 : index
    %132 = vector.load %arg8[%c0_59, %c0_60, %c64_61] : memref<1x1x128xf32, #tpu.memory_space<vmem>>, vector<1x1x64xf32>
    %133 = vector.shape_cast %132 : vector<1x1x64xf32> to vector<1x64xf32>
    %134 = vector.broadcast %129 : vector<1x64xf32> to vector<16x64xf32>
    %135 = arith.addf %124, %134 : vector<16x64xf32>
    %cst_62 = arith.constant 1.250000e-01 : f32
    %136 = vector.broadcast %cst_62 : f32 to vector<16x64xf32>
    %137 = arith.mulf %135, %136 : vector<16x64xf32>
    %138 = arith.truncf %137 : vector<16x64xf32> to vector<16x64xbf16>
    %139 = vector.broadcast %131 : vector<1x64xf32> to vector<16x64xf32>
    %140 = arith.addf %124, %139 : vector<16x64xf32>
    %cst_63 = arith.constant 1.250000e-01 : f32
    %141 = vector.broadcast %cst_63 : f32 to vector<16x64xf32>
    %142 = arith.mulf %140, %141 : vector<16x64xf32>
    %143 = arith.truncf %142 : vector<16x64xf32> to vector<16x64xbf16>
    %144 = vector.broadcast %133 : vector<1x64xf32> to vector<16x64xf32>
    %145 = arith.addf %124, %144 : vector<16x64xf32>
    %cst_64 = arith.constant 1.250000e-01 : f32
    %146 = vector.broadcast %cst_64 : f32 to vector<16x64xf32>
    %147 = arith.mulf %145, %146 : vector<16x64xf32>
    %cst_65 = arith.constant dense<0.000000e+00> : vector<16x16xf32>
    %148 = tpu.matmul %138, %125, %cst_65 {dimension_numbers = #tpu.dot_dimension_numbers<[1], [1], [0], [0], [0, 0, 1, 0], [], []>} : vector<16x64xbf16>, vector<16x64xbf16>, vector<16x16xf32> -> vector<16x16xf32>
    %cst_66 = arith.constant dense<0.000000e+00> : vector<16x32xf32>
    %149 = tpu.matmul %143, %127, %cst_66 {dimension_numbers = #tpu.dot_dimension_numbers<[1], [1], [0], [0], [0, 0, 1, 0], [], []>} : vector<16x64xbf16>, vector<32x64xbf16>, vector<16x32xf32> -> vector<16x32xf32>
    %150 = tpu.iota {dimensions = array<i32: 0>} : vector<16x32xi32>
    %c16_i32_67 = arith.constant 16 : i32
    %151 = vector.broadcast %c16_i32_67 : i32 to vector<16x32xi32>
    %152 = arith.subi %151, %150 : vector<16x32xi32>
    %153 = vector.extract_strided_slice %149 {offsets = [0, 1], sizes = [16, 31], strides = [1, 1]} : vector<16x32xf32> to vector<16x31xf32>
    %154 = vector.extract_strided_slice %149 {offsets = [0, 0], sizes = [16, 1], strides = [1, 1]} : vector<16x32xf32> to vector<16x1xf32>
    %155 = tpu.concatenate %153, %154 in 1 : vector<16x31xf32>, vector<16x1xf32> -> vector<16x32xf32>
    %c1_i32_68 = arith.constant 1 : i32
    %156 = vector.broadcast %c1_i32_68 : i32 to vector<16x32xi32>
    %157 = arith.andi %152, %156 : vector<16x32xi32>
    %c0_i32_69 = arith.constant 0 : i32
    %158 = vector.broadcast %c0_i32_69 : i32 to vector<16x32xi32>
    %159 = arith.cmpi ne, %157, %158 : vector<16x32xi32>
    %160 = arith.select %159, %155, %149 : vector<16x32xi1>, vector<16x32xf32>
    %161 = vector.extract_strided_slice %160 {offsets = [0, 2], sizes = [16, 30], strides = [1, 1]} : vector<16x32xf32> to vector<16x30xf32>
    %162 = vector.extract_strided_slice %160 {offsets = [0, 0], sizes = [16, 2], strides = [1, 1]} : vector<16x32xf32> to vector<16x2xf32>
    %163 = tpu.concatenate %161, %162 in 1 : vector<16x30xf32>, vector<16x2xf32> -> vector<16x32xf32>
    %c2_i32_70 = arith.constant 2 : i32
    %164 = vector.broadcast %c2_i32_70 : i32 to vector<16x32xi32>
    %165 = arith.andi %152, %164 : vector<16x32xi32>
    %c0_i32_71 = arith.constant 0 : i32
    %166 = vector.broadcast %c0_i32_71 : i32 to vector<16x32xi32>
    %167 = arith.cmpi ne, %165, %166 : vector<16x32xi32>
    %168 = arith.select %167, %163, %160 : vector<16x32xi1>, vector<16x32xf32>
    %169 = vector.extract_strided_slice %168 {offsets = [0, 4], sizes = [16, 28], strides = [1, 1]} : vector<16x32xf32> to vector<16x28xf32>
    %170 = vector.extract_strided_slice %168 {offsets = [0, 0], sizes = [16, 4], strides = [1, 1]} : vector<16x32xf32> to vector<16x4xf32>
    %171 = tpu.concatenate %169, %170 in 1 : vector<16x28xf32>, vector<16x4xf32> -> vector<16x32xf32>
    %c4_i32_72 = arith.constant 4 : i32
    %172 = vector.broadcast %c4_i32_72 : i32 to vector<16x32xi32>
    %173 = arith.andi %152, %172 : vector<16x32xi32>
    %c0_i32_73 = arith.constant 0 : i32
    %174 = vector.broadcast %c0_i32_73 : i32 to vector<16x32xi32>
    %175 = arith.cmpi ne, %173, %174 : vector<16x32xi32>
    %176 = arith.select %175, %171, %168 : vector<16x32xi1>, vector<16x32xf32>
    %177 = vector.extract_strided_slice %176 {offsets = [0, 8], sizes = [16, 24], strides = [1, 1]} : vector<16x32xf32> to vector<16x24xf32>
    %178 = vector.extract_strided_slice %176 {offsets = [0, 0], sizes = [16, 8], strides = [1, 1]} : vector<16x32xf32> to vector<16x8xf32>
    %179 = tpu.concatenate %177, %178 in 1 : vector<16x24xf32>, vector<16x8xf32> -> vector<16x32xf32>
    %c8_i32_74 = arith.constant 8 : i32
    %180 = vector.broadcast %c8_i32_74 : i32 to vector<16x32xi32>
    %181 = arith.andi %152, %180 : vector<16x32xi32>
    %c0_i32_75 = arith.constant 0 : i32
    %182 = vector.broadcast %c0_i32_75 : i32 to vector<16x32xi32>
    %183 = arith.cmpi ne, %181, %182 : vector<16x32xi32>
    %184 = arith.select %183, %179, %176 : vector<16x32xi1>, vector<16x32xf32>
    %185 = vector.extract_strided_slice %184 {offsets = [0, 16], sizes = [16, 16], strides = [1, 1]} : vector<16x32xf32> to vector<16x16xf32>
    %186 = vector.extract_strided_slice %184 {offsets = [0, 0], sizes = [16, 16], strides = [1, 1]} : vector<16x32xf32> to vector<16x16xf32>
    %187 = tpu.concatenate %185, %186 in 1 : vector<16x16xf32>, vector<16x16xf32> -> vector<16x32xf32>
    %c16_i32_76 = arith.constant 16 : i32
    %188 = vector.broadcast %c16_i32_76 : i32 to vector<16x32xi32>
    %189 = arith.andi %152, %188 : vector<16x32xi32>
    %c0_i32_77 = arith.constant 0 : i32
    %190 = vector.broadcast %c0_i32_77 : i32 to vector<16x32xi32>
    %191 = arith.cmpi ne, %189, %190 : vector<16x32xi32>
    %192 = arith.select %191, %187, %184 : vector<16x32xi1>, vector<16x32xf32>
    %193 = vector.extract_strided_slice %192 {offsets = [0, 0], sizes = [16, 16], strides = [1, 1]} : vector<16x32xf32> to vector<16x16xf32>
    %194 = vector.extract_strided_slice %20 {offsets = [0, 64], sizes = [1, 64], strides = [1, 1]} : vector<2x128xf32> to vector<1x64xf32>
    %195 = vector.broadcast %194 : vector<1x64xf32> to vector<16x64xf32>
    %196 = arith.mulf %147, %195 : vector<16x64xf32>
    %cst_78 = arith.constant dense<0.000000e+00> : vector<16xf32>
    %197 = vector.multi_reduction <add>, %196, %cst_78 [1] : vector<16x64xf32> to vector<16xf32>
    %198 = vector.shape_cast %197 : vector<16xf32> to vector<16x1xf32>
    %199 = vector.extract_strided_slice %20 {offsets = [1, 64], sizes = [1, 64], strides = [1, 1]} : vector<2x128xf32> to vector<1x64xf32>
    %200 = vector.broadcast %199 : vector<1x64xf32> to vector<16x64xf32>
    %201 = arith.mulf %147, %200 : vector<16x64xf32>
    %cst_79 = arith.constant dense<0.000000e+00> : vector<16xf32>
    %202 = vector.multi_reduction <add>, %201, %cst_79 [1] : vector<16x64xf32> to vector<16xf32>
    %203 = vector.shape_cast %202 : vector<16xf32> to vector<16x1xf32>
    %204 = vector.shape_cast %203 : vector<16x1xf32> to vector<16x1xf32>
    %205 = vector.broadcast %204 : vector<16x1xf32> to vector<16x16xf32>
    %206 = vector.shape_cast %198 : vector<16x1xf32> to vector<16x1xf32>
    %207 = vector.broadcast %206 : vector<16x1xf32> to vector<16x16xf32>
    %208 = arith.select %18, %205, %207 : vector<16x16xi1>, vector<16x16xf32>
    %209 = arith.addf %148, %193 : vector<16x16xf32>
    %210 = arith.addf %209, %208 : vector<16x16xf32>
    %cst_80 = arith.constant -1.000000e+30 : f32
    %211 = vector.broadcast %cst_80 : f32 to vector<16x16xf32>
    %212 = arith.select %11, %211, %210 : vector<16x16xi1>, vector<16x16xf32>
    %cst_81 = arith.constant dense<0xFF800000> : vector<16xf32>
    %213 = vector.multi_reduction <maximumf>, %212, %cst_81 [1] : vector<16x16xf32> to vector<16xf32>
    %214 = vector.shape_cast %213 : vector<16xf32> to vector<16x1xf32>
    %215 = vector.broadcast %214 : vector<16x1xf32> to vector<16x16xf32>
    %216 = arith.subf %212, %215 : vector<16x16xf32>
    %217 = math.exp %216 : vector<16x16xf32>
    %cst_82 = arith.constant dense<0.000000e+00> : vector<16xf32>
    %218 = vector.multi_reduction <add>, %217, %cst_82 [1] : vector<16x16xf32> to vector<16xf32>
    %219 = vector.shape_cast %218 : vector<16xf32> to vector<16x1xf32>
    %220 = tpu.reciprocal %219 {approx = true} : vector<16x1xf32> -> vector<16x1xf32>
    %221 = vector.broadcast %220 : vector<16x1xf32> to vector<16x16xf32>
    %222 = arith.mulf %217, %221 : vector<16x16xf32>
    %223 = arith.truncf %222 : vector<16x16xf32> to vector<16x16xbf16>
    %cst_83 = arith.constant dense<0.000000e+00> : vector<16x64xf32>
    %224 = tpu.matmul %223, %126, %cst_83 {dimension_numbers = #tpu.dot_dimension_numbers<[1], [0], [0], [1], [0, 0, 1, 1], [], []>} : vector<16x16xbf16>, vector<16x64xbf16>, vector<16x64xf32> -> vector<16x64xf32>
    %225 = tpu.concatenate %122, %224 in 1 : vector<16x64xf32>, vector<16x64xf32> -> vector<16x128xf32>
    %c0_84 = arith.constant 0 : index
    %c0_85 = arith.constant 0 : index
    %226 = vector.load %arg18[%c0_84, %c0_85] : memref<16x128xf32, #tpu.memory_space<vmem>>, vector<16x128xf32>
    %227 = arith.truncf %225 : vector<16x128xf32> to vector<16x128xbf16>
    %c0_86 = arith.constant 0 : index
    %c0_87 = arith.constant 0 : index
    %228 = vector.load %arg13[%c0_86, %c0_87] : memref<128x128xbf16, #tpu.memory_space<vmem>>, vector<128x128xbf16>
    %cst_88 = arith.constant dense<0.000000e+00> : vector<16x128xf32>
    %229 = tpu.matmul %227, %228, %cst_88 {dimension_numbers = #tpu.dot_dimension_numbers<[1], [0], [0], [1], [0, 0, 1, 1], [], []>} : vector<16x128xbf16>, vector<128x128xbf16>, vector<16x128xf32> -> vector<16x128xf32>
    %230 = arith.addf %226, %229 : vector<16x128xf32>
    %c0_89 = arith.constant 0 : index
    %c0_90 = arith.constant 0 : index
    %231 = vector.load %arg18[%c0_89, %c0_90] : memref<16x128xf32, #tpu.memory_space<vmem>>, vector<16x128xf32>
    tpu.vector_store %arg18[%c0_89, %c0_90], %230 {strides = array<i32>} : memref<16x128xf32, #tpu.memory_space<vmem>>, vector<16x128xf32>,
    %c0_i32_91 = arith.constant 0 : i32
    %232 = arith.cmpi eq, %arg1, %c0_i32_91 : i32
    %233 = arith.extui %232 : i1 to i32
    %c0_i32_92 = arith.constant 0 : i32
    %234 = arith.cmpi ne, %233, %c0_i32_92 : i32
    scf.if %234 {
      %c0_93 = arith.constant 0 : index
      %c0_94 = arith.constant 0 : index
      %235 = vector.load %arg18[%c0_93, %c0_94] : memref<16x128xf32, #tpu.memory_space<vmem>>, vector<16x128xf32>
      %c0_95 = arith.constant 0 : index
      %c0_96 = arith.constant 0 : index
      %236 = vector.load %arg14[%c0_95, %c0_96] : memref<16x128xbf16, #tpu.memory_space<vmem>>, vector<16x128xbf16>
      %237 = arith.extf %236 : vector<16x128xbf16> to vector<16x128xf32>
      %238 = arith.addf %235, %237 : vector<16x128xf32>
      %cst_97 = arith.constant dense<0.000000e+00> : vector<16xf32>
      %239 = vector.multi_reduction <add>, %238, %cst_97 [1] : vector<16x128xf32> to vector<16xf32>
      %240 = vector.shape_cast %239 : vector<16xf32> to vector<16x1xf32>
      %cst_98 = arith.constant 1.280000e+02 : f32
      %241 = vector.broadcast %cst_98 : f32 to vector<16x1xf32>
      %242 = arith.divf %240, %241 : vector<16x1xf32>
      %243 = vector.broadcast %242 : vector<16x1xf32> to vector<16x128xf32>
      %244 = arith.subf %238, %243 : vector<16x128xf32>
      %245 = arith.mulf %244, %244 : vector<16x128xf32>
      %cst_99 = arith.constant dense<0.000000e+00> : vector<16xf32>
      %246 = vector.multi_reduction <add>, %245, %cst_99 [1] : vector<16x128xf32> to vector<16xf32>
      %247 = vector.shape_cast %246 : vector<16xf32> to vector<16x1xf32>
      %cst_100 = arith.constant 1.280000e+02 : f32
      %248 = vector.broadcast %cst_100 : f32 to vector<16x1xf32>
      %249 = arith.divf %247, %248 : vector<16x1xf32>
      %cst_101 = arith.constant 9.99999996E-13 : f32
      %250 = vector.broadcast %cst_101 : f32 to vector<16x1xf32>
      %251 = arith.addf %249, %250 : vector<16x1xf32>
      %252 = math.rsqrt %251 : vector<16x1xf32>
      %253 = vector.broadcast %242 : vector<16x1xf32> to vector<16x128xf32>
      %254 = arith.subf %238, %253 : vector<16x128xf32>
      %255 = vector.broadcast %252 : vector<16x1xf32> to vector<16x128xf32>
      %256 = arith.mulf %254, %255 : vector<16x128xf32>
      %c0_102 = arith.constant 0 : index
      %c0_103 = arith.constant 0 : index
      %257 = vector.load %arg15[%c0_102, %c0_103] : memref<1x128xf32, #tpu.memory_space<vmem>>, vector<1x128xf32>
      %258 = vector.broadcast %257 : vector<1x128xf32> to vector<16x128xf32>
      %259 = arith.mulf %256, %258 : vector<16x128xf32>
      %c0_104 = arith.constant 0 : index
      %c0_105 = arith.constant 0 : index
      %260 = vector.load %arg16[%c0_104, %c0_105] : memref<1x128xf32, #tpu.memory_space<vmem>>, vector<1x128xf32>
      %261 = vector.broadcast %260 : vector<1x128xf32> to vector<16x128xf32>
      %262 = arith.addf %259, %261 : vector<16x128xf32>
      %263 = arith.truncf %262 : vector<16x128xf32> to vector<16x128xbf16>
      %c0_106 = arith.constant 0 : index
      %c0_107 = arith.constant 0 : index
      %264 = vector.load %arg17[%c0_106, %c0_107] : memref<16x128xbf16, #tpu.memory_space<vmem>>, vector<16x128xbf16>
      tpu.vector_store %arg17[%c0_106, %c0_107], %263 {strides = array<i32>} : memref<16x128xbf16, #tpu.memory_space<vmem>>, vector<16x128xbf16>,
    } else {
    }
    return
  }
  func.func @transform_0(%arg0: i32, %arg1: i32) -> (i32, i32) {
    %c0_i32 = arith.constant 0 : i32
    return %arg0, %arg1 : i32, i32
  }
  func.func @transform_1(%arg0: i32, %arg1: i32) -> (i32, i32) {
    %c1_i32 = arith.constant 1 : i32
    %0 = arith.addi %c1_i32, %arg1 : i32
    %c0_i32 = arith.constant 0 : i32
    return %arg0, %0 : i32, i32
  }
  func.func @transform_2(%arg0: i32, %arg1: i32) -> (i32, i32) {
    %c2_i32 = arith.constant 2 : i32
    %0 = arith.addi %c2_i32, %arg1 : i32
    %c0_i32 = arith.constant 0 : i32
    return %arg0, %0 : i32, i32
  }
  func.func @transform_3(%arg0: i32, %arg1: i32) -> (i32, i32) {
    %c0_i32 = arith.constant 0 : i32
    %c0_i32_0 = arith.constant 0 : i32
    return %c0_i32, %arg1 : i32, i32
  }
  func.func @transform_4(%arg0: i32, %arg1: i32) -> (i32, i32, i32) {
    %c0_i32 = arith.constant 0 : i32
    %c0_i32_0 = arith.constant 0 : i32
    %c0_i32_1 = arith.constant 0 : i32
    return %arg1, %c0_i32, %c0_i32_0 : i32, i32, i32
  }
  func.func @transform_5(%arg0: i32, %arg1: i32) -> (i32, i32, i32) {
    %c0_i32 = arith.constant 0 : i32
    %c0_i32_0 = arith.constant 0 : i32
    %c0_i32_1 = arith.constant 0 : i32
    return %arg1, %c0_i32, %c0_i32_0 : i32, i32, i32
  }
  func.func @transform_6(%arg0: i32, %arg1: i32) -> (i32, i32, i32) {
    %c0_i32 = arith.constant 0 : i32
    %c0_i32_0 = arith.constant 0 : i32
    %c0_i32_1 = arith.constant 0 : i32
    return %arg1, %c0_i32, %c0_i32_0 : i32, i32, i32
  }
  func.func @transform_7(%arg0: i32, %arg1: i32) -> (i32, i32, i32) {
    %c0_i32 = arith.constant 0 : i32
    %c0_i32_0 = arith.constant 0 : i32
    %c0_i32_1 = arith.constant 0 : i32
    return %arg1, %c0_i32, %c0_i32_0 : i32, i32, i32
  }
  func.func @transform_8(%arg0: i32, %arg1: i32) -> (i32, i32, i32) {
    %c0_i32 = arith.constant 0 : i32
    %c0_i32_0 = arith.constant 0 : i32
    %c0_i32_1 = arith.constant 0 : i32
    return %arg0, %c0_i32, %c0_i32_0 : i32, i32, i32
  }
  func.func @transform_9(%arg0: i32, %arg1: i32) -> (i32, i32, i32) {
    %c0_i32 = arith.constant 0 : i32
    %c0_i32_0 = arith.constant 0 : i32
    %c0_i32_1 = arith.constant 0 : i32
    return %arg0, %c0_i32, %c0_i32_0 : i32, i32, i32
  }
  func.func @transform_10(%arg0: i32, %arg1: i32) -> (i32, i32, i32) {
    %c0_i32 = arith.constant 0 : i32
    %c0_i32_0 = arith.constant 0 : i32
    %c0_i32_1 = arith.constant 0 : i32
    return %arg0, %c0_i32, %c0_i32_0 : i32, i32, i32
  }
  func.func @transform_11(%arg0: i32, %arg1: i32) -> (i32, i32) {
    %c0_i32 = arith.constant 0 : i32
    %c0_i32_0 = arith.constant 0 : i32
    return %arg1, %c0_i32 : i32, i32
  }
  func.func @transform_12(%arg0: i32, %arg1: i32) -> (i32, i32) {
    %c0_i32 = arith.constant 0 : i32
    %c0_i32_0 = arith.constant 0 : i32
    return %arg0, %c0_i32 : i32, i32
  }
  func.func @transform_13(%arg0: i32, %arg1: i32) -> (i32, i32) {
    %c0_i32 = arith.constant 0 : i32
    %c0_i32_0 = arith.constant 0 : i32
    %c0_i32_1 = arith.constant 0 : i32
    return %c0_i32, %c0_i32_0 : i32, i32
  }
  func.func @transform_14(%arg0: i32, %arg1: i32) -> (i32, i32) {
    %c0_i32 = arith.constant 0 : i32
    %c0_i32_0 = arith.constant 0 : i32
    %c0_i32_1 = arith.constant 0 : i32
    return %c0_i32, %c0_i32_0 : i32, i32
  }
  func.func @transform_15(%arg0: i32, %arg1: i32) -> (i32, i32) {
    %c0_i32 = arith.constant 0 : i32
    %c0_i32_0 = arith.constant 0 : i32
    return %arg0, %c0_i32 : i32, i32
  }
}

module attributes {stable_mosaic.version = 11 : i64} {
  func.func @_mm_bias_gelu_kernel(%arg0: i32, %arg1: i32, %arg2: i32, %arg3: memref<32x128xbf16, #tpu.memory_space<vmem>>, %arg4: memref<128x256xbf16, #tpu.memory_space<vmem>>, %arg5: memref<1x256xf32, #tpu.memory_space<vmem>>, %arg6: memref<32x256xbf16, #tpu.memory_space<vmem>>, %arg7: memref<32x256xf32, #tpu.memory_space<vmem>>) attributes {dimension_semantics = [#tpu.dimension_semantics<parallel>, #tpu.dimension_semantics<parallel>, #tpu.dimension_semantics<arbitrary>], iteration_bounds = array<i64: 1, 1, 1>, scalar_prefetch = 0 : i64, scratch_operands = 1 : i64, tpu.core_type = #tpu.core_type<tc>, window_params = [{transform_indices = @transform_0, window_bounds = array<i64: 32, 128>}, {transform_indices = @transform_1, window_bounds = array<i64: 128, 256>}, {transform_indices = @transform_2, window_bounds = array<i64: 1, 256>}, {transform_indices = @transform_3, window_bounds = array<i64: 32, 256>}]} {
    %c0_i32 = arith.constant 0 : i32
    %0 = arith.cmpi eq, %arg2, %c0_i32 : i32
    %1 = arith.extui %0 : i1 to i32
    %c0_i32_0 = arith.constant 0 : i32
    %2 = arith.cmpi ne, %1, %c0_i32_0 : i32
    scf.if %2 {
      %cst_10 = arith.constant 0.000000e+00 : f32
      %12 = vector.broadcast %cst_10 : f32 to vector<32x256xf32>
      %c0_11 = arith.constant 0 : index
      %c0_12 = arith.constant 0 : index
      %13 = vector.load %arg7[%c0_11, %c0_12] : memref<32x256xf32, #tpu.memory_space<vmem>>, vector<32x256xf32>
      tpu.vector_store %arg7[%c0_11, %c0_12], %12 {strides = array<i32>} : memref<32x256xf32, #tpu.memory_space<vmem>>, vector<32x256xf32>,
    } else {
    }
    %c0 = arith.constant 0 : index
    %c0_1 = arith.constant 0 : index
    %3 = vector.load %arg7[%c0, %c0_1] : memref<32x256xf32, #tpu.memory_space<vmem>>, vector<32x256xf32>
    %c0_2 = arith.constant 0 : index
    %c0_3 = arith.constant 0 : index
    %4 = vector.load %arg3[%c0_2, %c0_3] : memref<32x128xbf16, #tpu.memory_space<vmem>>, vector<32x128xbf16>
    %c0_4 = arith.constant 0 : index
    %c0_5 = arith.constant 0 : index
    %5 = vector.load %arg4[%c0_4, %c0_5] : memref<128x256xbf16, #tpu.memory_space<vmem>>, vector<128x256xbf16>
    %cst = arith.constant dense<0.000000e+00> : vector<32x256xf32>
    %6 = tpu.matmul %4, %5, %cst {dimension_numbers = #tpu.dot_dimension_numbers<[1], [0], [0], [1], [0, 0, 1, 1], [], []>} : vector<32x128xbf16>, vector<128x256xbf16>, vector<32x256xf32> -> vector<32x256xf32>
    %7 = arith.addf %3, %6 : vector<32x256xf32>
    %c0_6 = arith.constant 0 : index
    %c0_7 = arith.constant 0 : index
    %8 = vector.load %arg7[%c0_6, %c0_7] : memref<32x256xf32, #tpu.memory_space<vmem>>, vector<32x256xf32>
    tpu.vector_store %arg7[%c0_6, %c0_7], %7 {strides = array<i32>} : memref<32x256xf32, #tpu.memory_space<vmem>>, vector<32x256xf32>,
    %c0_i32_8 = arith.constant 0 : i32
    %9 = arith.cmpi eq, %arg2, %c0_i32_8 : i32
    %10 = arith.extui %9 : i1 to i32
    %c0_i32_9 = arith.constant 0 : i32
    %11 = arith.cmpi ne, %10, %c0_i32_9 : i32
    scf.if %11 {
      %c0_10 = arith.constant 0 : index
      %c0_11 = arith.constant 0 : index
      %12 = vector.load %arg7[%c0_10, %c0_11] : memref<32x256xf32, #tpu.memory_space<vmem>>, vector<32x256xf32>
      %c0_12 = arith.constant 0 : index
      %c0_13 = arith.constant 0 : index
      %13 = vector.load %arg5[%c0_12, %c0_13] : memref<1x256xf32, #tpu.memory_space<vmem>>, vector<1x256xf32>
      %14 = vector.broadcast %13 : vector<1x256xf32> to vector<32x256xf32>
      %15 = arith.addf %12, %14 : vector<32x256xf32>
      %cst_14 = arith.constant 5.000000e-01 : f32
      %16 = vector.broadcast %cst_14 : f32 to vector<32x256xf32>
      %17 = arith.mulf %16, %15 : vector<32x256xf32>
      %cst_15 = arith.constant 4.471500e-02 : f32
      %18 = vector.broadcast %cst_15 : f32 to vector<32x256xf32>
      %19 = arith.mulf %18, %15 : vector<32x256xf32>
      %20 = arith.mulf %19, %15 : vector<32x256xf32>
      %21 = arith.mulf %20, %15 : vector<32x256xf32>
      %22 = arith.addf %15, %21 : vector<32x256xf32>
      %cst_16 = arith.constant 0.797884583 : f32
      %23 = vector.broadcast %cst_16 : f32 to vector<32x256xf32>
      %24 = arith.mulf %23, %22 : vector<32x256xf32>
      %25 = math.tanh %24 : vector<32x256xf32>
      %cst_17 = arith.constant 1.000000e+00 : f32
      %26 = vector.broadcast %cst_17 : f32 to vector<32x256xf32>
      %27 = arith.addf %26, %25 : vector<32x256xf32>
      %28 = arith.mulf %17, %27 : vector<32x256xf32>
      %29 = arith.truncf %28 : vector<32x256xf32> to vector<32x256xbf16>
      %c0_18 = arith.constant 0 : index
      %c0_19 = arith.constant 0 : index
      %30 = vector.load %arg6[%c0_18, %c0_19] : memref<32x256xbf16, #tpu.memory_space<vmem>>, vector<32x256xbf16>
      tpu.vector_store %arg6[%c0_18, %c0_19], %29 {strides = array<i32>} : memref<32x256xbf16, #tpu.memory_space<vmem>>, vector<32x256xbf16>,
    } else {
    }
    return
  }
  func.func @transform_0(%arg0: i32, %arg1: i32, %arg2: i32) -> (i32, i32) {
    %c0_i32 = arith.constant 0 : i32
    return %arg0, %arg2 : i32, i32
  }
  func.func @transform_1(%arg0: i32, %arg1: i32, %arg2: i32) -> (i32, i32) {
    %c0_i32 = arith.constant 0 : i32
    return %arg2, %arg1 : i32, i32
  }
  func.func @transform_2(%arg0: i32, %arg1: i32, %arg2: i32) -> (i32, i32) {
    %c0_i32 = arith.constant 0 : i32
    %c0_i32_0 = arith.constant 0 : i32
    return %c0_i32, %arg1 : i32, i32
  }
  func.func @transform_3(%arg0: i32, %arg1: i32, %arg2: i32) -> (i32, i32) {
    %c0_i32 = arith.constant 0 : i32
    return %arg0, %arg1 : i32, i32
  }
}

module attributes {stable_mosaic.version = 11 : i64} {
  func.func @_mm_bias_res_ln_kernel(%arg0: i32, %arg1: i32, %arg2: memref<32x256xbf16, #tpu.memory_space<vmem>>, %arg3: memref<256x128xbf16, #tpu.memory_space<vmem>>, %arg4: memref<1x128xf32, #tpu.memory_space<vmem>>, %arg5: memref<32x128xbf16, #tpu.memory_space<vmem>>, %arg6: memref<1x128xf32, #tpu.memory_space<vmem>>, %arg7: memref<1x128xf32, #tpu.memory_space<vmem>>, %arg8: memref<32x128xbf16, #tpu.memory_space<vmem>>, %arg9: memref<32x128xf32, #tpu.memory_space<vmem>>) attributes {dimension_semantics = [#tpu.dimension_semantics<parallel>, #tpu.dimension_semantics<arbitrary>], iteration_bounds = array<i64: 1, 1>, scalar_prefetch = 0 : i64, scratch_operands = 1 : i64, tpu.core_type = #tpu.core_type<tc>, window_params = [{transform_indices = @transform_0, window_bounds = array<i64: 32, 256>}, {transform_indices = @transform_1, window_bounds = array<i64: 256, 128>}, {pipeline_mode = #tpu.pipeline_mode<synchronous>, transform_indices = @transform_2, window_bounds = array<i64: 1, 128>}, {transform_indices = @transform_3, window_bounds = array<i64: 32, 128>}, {pipeline_mode = #tpu.pipeline_mode<synchronous>, transform_indices = @transform_4, window_bounds = array<i64: 1, 128>}, {pipeline_mode = #tpu.pipeline_mode<synchronous>, transform_indices = @transform_5, window_bounds = array<i64: 1, 128>}, {transform_indices = @transform_6, window_bounds = array<i64: 32, 128>}]} {
    %c0_i32 = arith.constant 0 : i32
    %0 = arith.cmpi eq, %arg1, %c0_i32 : i32
    %1 = arith.extui %0 : i1 to i32
    %c0_i32_0 = arith.constant 0 : i32
    %2 = arith.cmpi ne, %1, %c0_i32_0 : i32
    scf.if %2 {
      %cst_10 = arith.constant 0.000000e+00 : f32
      %12 = vector.broadcast %cst_10 : f32 to vector<32x128xf32>
      %c0_11 = arith.constant 0 : index
      %c0_12 = arith.constant 0 : index
      %13 = vector.load %arg9[%c0_11, %c0_12] : memref<32x128xf32, #tpu.memory_space<vmem>>, vector<32x128xf32>
      tpu.vector_store %arg9[%c0_11, %c0_12], %12 {strides = array<i32>} : memref<32x128xf32, #tpu.memory_space<vmem>>, vector<32x128xf32>,
    } else {
    }
    %c0 = arith.constant 0 : index
    %c0_1 = arith.constant 0 : index
    %3 = vector.load %arg9[%c0, %c0_1] : memref<32x128xf32, #tpu.memory_space<vmem>>, vector<32x128xf32>
    %c0_2 = arith.constant 0 : index
    %c0_3 = arith.constant 0 : index
    %4 = vector.load %arg2[%c0_2, %c0_3] : memref<32x256xbf16, #tpu.memory_space<vmem>>, vector<32x256xbf16>
    %c0_4 = arith.constant 0 : index
    %c0_5 = arith.constant 0 : index
    %5 = vector.load %arg3[%c0_4, %c0_5] : memref<256x128xbf16, #tpu.memory_space<vmem>>, vector<256x128xbf16>
    %cst = arith.constant dense<0.000000e+00> : vector<32x128xf32>
    %6 = tpu.matmul %4, %5, %cst {dimension_numbers = #tpu.dot_dimension_numbers<[1], [0], [0], [1], [0, 0, 1, 1], [], []>} : vector<32x256xbf16>, vector<256x128xbf16>, vector<32x128xf32> -> vector<32x128xf32>
    %7 = arith.addf %3, %6 : vector<32x128xf32>
    %c0_6 = arith.constant 0 : index
    %c0_7 = arith.constant 0 : index
    %8 = vector.load %arg9[%c0_6, %c0_7] : memref<32x128xf32, #tpu.memory_space<vmem>>, vector<32x128xf32>
    tpu.vector_store %arg9[%c0_6, %c0_7], %7 {strides = array<i32>} : memref<32x128xf32, #tpu.memory_space<vmem>>, vector<32x128xf32>,
    %c0_i32_8 = arith.constant 0 : i32
    %9 = arith.cmpi eq, %arg1, %c0_i32_8 : i32
    %10 = arith.extui %9 : i1 to i32
    %c0_i32_9 = arith.constant 0 : i32
    %11 = arith.cmpi ne, %10, %c0_i32_9 : i32
    scf.if %11 {
      %c0_10 = arith.constant 0 : index
      %c0_11 = arith.constant 0 : index
      %12 = vector.load %arg9[%c0_10, %c0_11] : memref<32x128xf32, #tpu.memory_space<vmem>>, vector<32x128xf32>
      %c0_12 = arith.constant 0 : index
      %c0_13 = arith.constant 0 : index
      %13 = vector.load %arg4[%c0_12, %c0_13] : memref<1x128xf32, #tpu.memory_space<vmem>>, vector<1x128xf32>
      %14 = vector.broadcast %13 : vector<1x128xf32> to vector<32x128xf32>
      %15 = arith.addf %12, %14 : vector<32x128xf32>
      %c0_14 = arith.constant 0 : index
      %c0_15 = arith.constant 0 : index
      %16 = vector.load %arg5[%c0_14, %c0_15] : memref<32x128xbf16, #tpu.memory_space<vmem>>, vector<32x128xbf16>
      %17 = arith.extf %16 : vector<32x128xbf16> to vector<32x128xf32>
      %18 = arith.addf %15, %17 : vector<32x128xf32>
      %cst_16 = arith.constant dense<0.000000e+00> : vector<32xf32>
      %19 = vector.multi_reduction <add>, %18, %cst_16 [1] : vector<32x128xf32> to vector<32xf32>
      %20 = vector.shape_cast %19 : vector<32xf32> to vector<32x1xf32>
      %cst_17 = arith.constant 1.280000e+02 : f32
      %21 = vector.broadcast %cst_17 : f32 to vector<32x1xf32>
      %22 = arith.divf %20, %21 : vector<32x1xf32>
      %23 = vector.broadcast %22 : vector<32x1xf32> to vector<32x128xf32>
      %24 = arith.subf %18, %23 : vector<32x128xf32>
      %25 = arith.mulf %24, %24 : vector<32x128xf32>
      %cst_18 = arith.constant dense<0.000000e+00> : vector<32xf32>
      %26 = vector.multi_reduction <add>, %25, %cst_18 [1] : vector<32x128xf32> to vector<32xf32>
      %27 = vector.shape_cast %26 : vector<32xf32> to vector<32x1xf32>
      %cst_19 = arith.constant 1.280000e+02 : f32
      %28 = vector.broadcast %cst_19 : f32 to vector<32x1xf32>
      %29 = arith.divf %27, %28 : vector<32x1xf32>
      %cst_20 = arith.constant 9.99999996E-13 : f32
      %30 = vector.broadcast %cst_20 : f32 to vector<32x1xf32>
      %31 = arith.addf %29, %30 : vector<32x1xf32>
      %32 = math.rsqrt %31 : vector<32x1xf32>
      %33 = vector.broadcast %22 : vector<32x1xf32> to vector<32x128xf32>
      %34 = arith.subf %18, %33 : vector<32x128xf32>
      %35 = vector.broadcast %32 : vector<32x1xf32> to vector<32x128xf32>
      %36 = arith.mulf %34, %35 : vector<32x128xf32>
      %c0_21 = arith.constant 0 : index
      %c0_22 = arith.constant 0 : index
      %37 = vector.load %arg6[%c0_21, %c0_22] : memref<1x128xf32, #tpu.memory_space<vmem>>, vector<1x128xf32>
      %38 = vector.broadcast %37 : vector<1x128xf32> to vector<32x128xf32>
      %39 = arith.mulf %36, %38 : vector<32x128xf32>
      %c0_23 = arith.constant 0 : index
      %c0_24 = arith.constant 0 : index
      %40 = vector.load %arg7[%c0_23, %c0_24] : memref<1x128xf32, #tpu.memory_space<vmem>>, vector<1x128xf32>
      %41 = vector.broadcast %40 : vector<1x128xf32> to vector<32x128xf32>
      %42 = arith.addf %39, %41 : vector<32x128xf32>
      %43 = arith.truncf %42 : vector<32x128xf32> to vector<32x128xbf16>
      %c0_25 = arith.constant 0 : index
      %c0_26 = arith.constant 0 : index
      %44 = vector.load %arg8[%c0_25, %c0_26] : memref<32x128xbf16, #tpu.memory_space<vmem>>, vector<32x128xbf16>
      tpu.vector_store %arg8[%c0_25, %c0_26], %43 {strides = array<i32>} : memref<32x128xbf16, #tpu.memory_space<vmem>>, vector<32x128xbf16>,
    } else {
    }
    return
  }
  func.func @transform_0(%arg0: i32, %arg1: i32) -> (i32, i32) {
    %c0_i32 = arith.constant 0 : i32
    return %arg0, %arg1 : i32, i32
  }
  func.func @transform_1(%arg0: i32, %arg1: i32) -> (i32, i32) {
    %c0_i32 = arith.constant 0 : i32
    %c0_i32_0 = arith.constant 0 : i32
    return %arg1, %c0_i32 : i32, i32
  }
  func.func @transform_2(%arg0: i32, %arg1: i32) -> (i32, i32) {
    %c0_i32 = arith.constant 0 : i32
    %c0_i32_0 = arith.constant 0 : i32
    %c0_i32_1 = arith.constant 0 : i32
    return %c0_i32, %c0_i32_0 : i32, i32
  }
  func.func @transform_3(%arg0: i32, %arg1: i32) -> (i32, i32) {
    %c0_i32 = arith.constant 0 : i32
    %c0_i32_0 = arith.constant 0 : i32
    return %arg0, %c0_i32 : i32, i32
  }
  func.func @transform_4(%arg0: i32, %arg1: i32) -> (i32, i32) {
    %c0_i32 = arith.constant 0 : i32
    %c0_i32_0 = arith.constant 0 : i32
    %c0_i32_1 = arith.constant 0 : i32
    return %c0_i32, %c0_i32_0 : i32, i32
  }
  func.func @transform_5(%arg0: i32, %arg1: i32) -> (i32, i32) {
    %c0_i32 = arith.constant 0 : i32
    %c0_i32_0 = arith.constant 0 : i32
    %c0_i32_1 = arith.constant 0 : i32
    return %c0_i32, %c0_i32_0 : i32, i32
  }
  func.func @transform_6(%arg0: i32, %arg1: i32) -> (i32, i32) {
    %c0_i32 = arith.constant 0 : i32
    %c0_i32_0 = arith.constant 0 : i32
    return %arg0, %c0_i32 : i32, i32
  }
}

module attributes {stable_mosaic.version = 11 : i64} {
  func.func @_qa_head_kernel(%arg0: i32, %arg1: memref<16x128xbf16, #tpu.memory_space<vmem>>, %arg2: memref<128x128xbf16, #tpu.memory_space<vmem>>, %arg3: memref<1x128xf32, #tpu.memory_space<vmem>>, %arg4: memref<16x128xf32, #tpu.memory_space<vmem>>) attributes {dimension_semantics = [#tpu.dimension_semantics<parallel>], iteration_bounds = array<i64: 2>, scalar_prefetch = 0 : i64, scratch_operands = 0 : i64, tpu.core_type = #tpu.core_type<tc>, window_params = [{transform_indices = @transform_0, window_bounds = array<i64: 16, 128>}, {pipeline_mode = #tpu.pipeline_mode<synchronous>, transform_indices = @transform_1, window_bounds = array<i64: 128, 128>}, {pipeline_mode = #tpu.pipeline_mode<synchronous>, transform_indices = @transform_2, window_bounds = array<i64: 1, 128>}, {transform_indices = @transform_3, window_bounds = array<i64: 16, 128>}]} {
    %c0 = arith.constant 0 : index
    %c0_0 = arith.constant 0 : index
    %0 = vector.load %arg1[%c0, %c0_0] : memref<16x128xbf16, #tpu.memory_space<vmem>>, vector<16x128xbf16>
    %c0_1 = arith.constant 0 : index
    %c0_2 = arith.constant 0 : index
    %1 = vector.load %arg2[%c0_1, %c0_2] : memref<128x128xbf16, #tpu.memory_space<vmem>>, vector<128x128xbf16>
    %cst = arith.constant dense<0.000000e+00> : vector<16x128xf32>
    %2 = tpu.matmul %0, %1, %cst {dimension_numbers = #tpu.dot_dimension_numbers<[1], [0], [0], [1], [0, 0, 1, 1], [], []>} : vector<16x128xbf16>, vector<128x128xbf16>, vector<16x128xf32> -> vector<16x128xf32>
    %c0_3 = arith.constant 0 : index
    %c0_4 = arith.constant 0 : index
    %3 = vector.load %arg3[%c0_3, %c0_4] : memref<1x128xf32, #tpu.memory_space<vmem>>, vector<1x128xf32>
    %4 = vector.broadcast %3 : vector<1x128xf32> to vector<16x128xf32>
    %5 = arith.addf %2, %4 : vector<16x128xf32>
    %cst_5 = arith.constant dense<0xFF800000> : vector<128xf32>
    %6 = vector.multi_reduction <maximumf>, %5, %cst_5 [0] : vector<16x128xf32> to vector<128xf32>
    %7 = vector.shape_cast %6 : vector<128xf32> to vector<1x128xf32>
    %8 = vector.broadcast %7 : vector<1x128xf32> to vector<16x128xf32>
    %9 = arith.subf %5, %8 : vector<16x128xf32>
    %10 = math.exp %9 : vector<16x128xf32>
    %cst_6 = arith.constant dense<0.000000e+00> : vector<128xf32>
    %11 = vector.multi_reduction <add>, %10, %cst_6 [0] : vector<16x128xf32> to vector<128xf32>
    %12 = vector.shape_cast %11 : vector<128xf32> to vector<1x128xf32>
    %13 = vector.broadcast %12 : vector<1x128xf32> to vector<16x128xf32>
    %14 = arith.divf %10, %13 : vector<16x128xf32>
    %c0_7 = arith.constant 0 : index
    %c0_8 = arith.constant 0 : index
    %15 = vector.load %arg4[%c0_7, %c0_8] : memref<16x128xf32, #tpu.memory_space<vmem>>, vector<16x128xf32>
    tpu.vector_store %arg4[%c0_7, %c0_8], %14 {strides = array<i32>} : memref<16x128xf32, #tpu.memory_space<vmem>>, vector<16x128xf32>,
    return
  }
  func.func @transform_0(%arg0: i32) -> (i32, i32) {
    %c0_i32 = arith.constant 0 : i32
    %c0_i32_0 = arith.constant 0 : i32
    return %arg0, %c0_i32 : i32, i32
  }
  func.func @transform_1(%arg0: i32) -> (i32, i32) {
    %c0_i32 = arith.constant 0 : i32
    %c0_i32_0 = arith.constant 0 : i32
    %c0_i32_1 = arith.constant 0 : i32
    return %c0_i32, %c0_i32_0 : i32, i32
  }
  func.func @transform_2(%arg0: i32) -> (i32, i32) {
    %c0_i32 = arith.constant 0 : i32
    %c0_i32_0 = arith.constant 0 : i32
    %c0_i32_1 = arith.constant 0 : i32
    return %c0_i32, %c0_i32_0 : i32, i32
  }
  func.func @transform_3(%arg0: i32) -> (i32, i32) {
    %c0_i32 = arith.constant 0 : i32
    %c0_i32_0 = arith.constant 0 : i32
    return %arg0, %c0_i32 : i32, i32
  }
}

</mosaic_0001>

<llo_original>
// kernel: _xlnet_qa_forward_jit.17
$region0: #{_xlnet_qa_forward_jit.17}
  #allocation0 [shape = 'u32[]', space=smem, size = 0x4, offset = 0x4, fixed_abs, tag = 'smem constant byte address 0x4 - core index']
  #allocation1 [shape = 'u32[144,128]{1,0:T(1,128)}', space=vmem, size = 0x12000, scoped, tag = 'internal scratch']
  #allocation2 [shape = 'f32[32,128]{1,0:T(8,128)}', space=vmem, size = 0x4000, scoped, tag = 'scratch operand']
  %s0 = inlined_call_operand.hbm [shape: bf16[32,128], index: 0, kind: input, shape index: {}]
  %s1 = inlined_call_operand.hbm [shape: bf16[128,128], index: 1, kind: input, shape index: {}]
  %s2 = inlined_call_operand.hbm [shape: bf16[32,128], index: 2, kind: output, shape index: {}]
  %s3 = sld [smem:[#allocation0]]
  $region34: #{_xlnet_qa_forward_jit.17} parent=0
    _
  %s5 = ssub.s32 1, %s3
  %s6 = scalar_select 0, %s5, %s3
  $region1: #{_xlnet_qa_forward_jit.17} parent=0
    #allocation3 [shape = 'u8[8192]{0}', space=vmem, size = 0x2000, scoped, tag = 'input window, operand 0, single buffered']
    #allocation4 [shape = 's32[1]{0}', space=sflag, size = 0x4, scoped, tag = 'scoped memory for _xlnet_qa_forward_jit.17']
    #allocation5 [shape = 's32[1]{0}', space=sflag, size = 0x4, scoped, tag = 'scoped memory for _xlnet_qa_forward_jit.17']
    #allocation6 [shape = 'u8[32768]{0}', space=vmem, size = 0x8000, scoped, tag = 'input window, operand 1, single buffered']
    #allocation7 [shape = 's32[1]{0}', space=sflag, size = 0x4, scoped, tag = 'scoped memory for _xlnet_qa_forward_jit.17']
    #allocation8 [shape = 'u8[8192]{0}', space=vmem, size = 0x2000, scoped, tag = 'output window, operand 0, single buffered']
    %7 = vsyncpa [#allocation4], 0
    %8 = vsyncpa [#allocation7], 0
    %9 = vsyncpa [#allocation5], 0
    // Predicated region
    $region2: #{_xlnet_qa_forward_jit.17} parent=1 // pred_check
      _
    $region3: #{_xlnet_qa_forward_jit.17} parent=1 // pred_check_branch
      %11 = sbr.rel (0) target = $region5
    $region4: #{_xlnet_qa_forward_jit.17} parent=1 // pred_region
      %s13 = ssub.s32 256, 256
      %14 = vsyncadd [#allocation4], %s13
      %s15 = sshll.u32 [#allocation3], 4
      %s16 = int_to_ptr.vmem [resolvable:$true] %s15
      %21 = dma.hbm_to_vmem [thread:$0]  %s0, 256, %s16, [#allocation4], 64, 64, 4
    $region5: #{_xlnet_qa_forward_jit.17} parent=1 // pred_fallthru
      _
    // Predicated region
    $region6: #{_xlnet_qa_forward_jit.17} parent=1 // pred_check
      _
    $region7: #{_xlnet_qa_forward_jit.17} parent=1 // pred_check_branch
      %23 = sbr.rel (0) target = $region9
    $region8: #{_xlnet_qa_forward_jit.17} parent=1 // pred_region
      %s25 = ssub.s32 1024, 1024
      %26 = vsyncadd [#allocation7], %s25
      %s27 = sshll.u32 [#allocation6], 4
      %s28 = int_to_ptr.vmem [resolvable:$true] %s27
      %33 = dma.hbm_to_vmem [thread:$0]  %s1, 1024, %s28, [#allocation7], 64, 64, 4
    $region9: #{_xlnet_qa_forward_jit.17} parent=1 // pred_fallthru
      _
    // Predicated region
    $region10: #{_xlnet_qa_forward_jit.17} parent=1 // pred_check
      _
    $region11: #{_xlnet_qa_forward_jit.17} parent=1 // pred_check_branch
      %35 = sbr.rel (0) target = $region13
    $region12: #{_xlnet_qa_forward_jit.17} parent=1 // pred_region
      %36 = dma.done [#allocation4], 256
    $region13: #{_xlnet_qa_forward_jit.17} parent=1 // pred_fallthru
      _
    // Predicated region
    $region14: #{_xlnet_qa_forward_jit.17} parent=1 // pred_check
      _
    $region15: #{_xlnet_qa_forward_jit.17} parent=1 // pred_check_branch
      %38 = sbr.rel (0) target = $region17
    $region16: #{_xlnet_qa_forward_jit.17} parent=1 // pred_region
      %39 = dma.done [#allocation7], 1024
    $region17: #{_xlnet_qa_forward_jit.17} parent=1 // pred_fallthru
      _
    %p41 = scmp.eq.s32.totalorder 0, 0
    // Predicated region
    $region18: #{_xlnet_qa_forward_jit.17} parent=1 // pred_check
      %p42 = pneg %p41
    $region19: #{_xlnet_qa_forward_jit.17} parent=1 // pred_check_branch
      %44 = sbr.rel (%p42) target = $region21
    $region20: #{_xlnet_qa_forward_jit.17} parent=1 // pred_region
      %45 = vst [vmem:[#allocation2] sm:$0xff] 0.0
      %46 = vst [vmem:[#allocation2 + $0x8] sm:$0xff] 0.0
      %47 = vst [vmem:[#allocation2 + $0x10] sm:$0xff] 0.0
      %48 = vst [vmem:[#allocation2 + $0x18] sm:$0xff] 0.0
    $region21: #{_xlnet_qa_forward_jit.17} parent=1 // pred_fallthru
      _
    %v49 = vld [vmem:[#allocation2] sm:$0xff]
    %v50 = vld [vmem:[#allocation2 + $0x8] sm:$0xff]
    %v51 = vld [vmem:[#allocation2 + $0x10] sm:$0xff]
    %v52 = vld [vmem:[#allocation2 + $0x18] sm:$0xff]
    %v53 = vld [vmem:[#allocation3] sm:$0xf]
    %v54 = vld [vmem:[#allocation3 + $0x4] sm:$0xf]
    %v55 = vld [vmem:[#allocation3 + $0x8] sm:$0xf]
    %v56 = vld [vmem:[#allocation3 + $0xc] sm:$0xf]
    %v57 = vld [vmem:[#allocation6] sm:$0xf]
    %v58 = vld [vmem:[#allocation6 + $0x4] sm:$0xf]
    %v59 = vld [vmem:[#allocation6 + $0x8] sm:$0xf]
    %v60 = vld [vmem:[#allocation6 + $0xc] sm:$0xf]
    %v61 = vld [vmem:[#allocation6 + $0x10] sm:$0xf]
    %v62 = vld [vmem:[#allocation6 + $0x14] sm:$0xf]
    %v63 = vld [vmem:[#allocation6 + $0x18] sm:$0xf]
    %v64 = vld [vmem:[#allocation6 + $0x1c] sm:$0xf]
    %v65 = vld [vmem:[#allocation6 + $0x20] sm:$0xf]
    %v66 = vld [vmem:[#allocation6 + $0x24] sm:$0xf]
    %v67 = vld [vmem:[#allocation6 + $0x28] sm:$0xf]
    %v68 = vld [vmem:[#allocation6 + $0x2c] sm:$0xf]
    %v69 = vld [vmem:[#allocation6 + $0x30] sm:$0xf]
    %v70 = vld [vmem:[#allocation6 + $0x34] sm:$0xf]
    %v71 = vld [vmem:[#allocation6 + $0x38] sm:$0xf]
    %v72 = vld [vmem:[#allocation6 + $0x3c] sm:$0xf]
    %v77 = vunpack.c.l.b16 %v53
    %v78 = vunpack.c.l.b16 %v54
    %v79 = vunpack.c.l.b16 %v55
    %v80 = vunpack.c.l.b16 %v56
    %v81 = vpack.c.b16 %v78, %v77
    %v82 = vpack.c.b16 %v80, %v79
    %v101 = vunpack.c.l.b16 %v57
    %v102 = vunpack.c.l.b16 %v58
    %v103 = vunpack.c.l.b16 %v59
    %v104 = vunpack.c.l.b16 %v60
    %v105 = vunpack.c.l.b16 %v61
    %v106 = vunpack.c.l.b16 %v62
    %v107 = vunpack.c.l.b16 %v63
    %v108 = vunpack.c.l.b16 %v64
    %v109 = vunpack.c.l.b16 %v65
    %v110 = vunpack.c.l.b16 %v66
    %v111 = vunpack.c.l.b16 %v67
    %v112 = vunpack.c.l.b16 %v68
    %v113 = vunpack.c.l.b16 %v69
    %v114 = vunpack.c.l.b16 %v70
    %v115 = vunpack.c.l.b16 %v71
    %v116 = vunpack.c.l.b16 %v72
    %v117 = vpack.c.b16 %v102, %v101
    %v118 = vpack.c.b16 %v104, %v103
    %v119 = vpack.c.b16 %v106, %v105
    %v120 = vpack.c.b16 %v108, %v107
    %v121 = vpack.c.b16 %v110, %v109
    %v122 = vpack.c.b16 %v112, %v111
    %v123 = vpack.c.b16 %v114, %v113
    %v124 = vpack.c.b16 %v116, %v115
    %133 = vmatprep.subr.bf16.mxu0 0
    %134 = vmatpush1.bf16.msra.mxu0 %v117
    %135 = vmatprep.subr.bf16.mxu0 0
    %136 = vmatpush1.bf16.msra.mxu0 %v118
    %137 = vmatprep.subr.bf16.mxu0 0
    %138 = vmatpush1.bf16.msra.mxu0 %v119
    %139 = vmatprep.subr.bf16.mxu0 0
    %140 = vmatpush1.bf16.msra.mxu0 %v120
    %141 = vmatprep.subr.bf16.mxu0 0
    %142 = vmatpush1.bf16.msra.mxu0 %v121
    %143 = vmatprep.subr.bf16.mxu0 0
    %144 = vmatpush1.bf16.msra.mxu0 %v122
    %145 = vmatprep.subr.bf16.mxu0 0
    %146 = vmatpush1.bf16.msra.mxu0 %v123
    %147 = vmatprep.subr.bf16.mxu0 0
    %148 = vmatpush1.bf16.msra.mxu0 %v124
    %149 = vmatprep.subr.bf16.mxu0 0
    %150 = vmatpush1.bf16.msra.mxu0 0
    %151 = vmatprep.subr.bf16.mxu0 0
    %152 = vmatpush1.bf16.msra.mxu0 0
    %153 = vmatprep.subr.bf16.mxu0 0
    %154 = vmatpush1.bf16.msra.mxu0 0
    %155 = vmatprep.subr.bf16.mxu0 0
    %156 = vmatpush1.bf16.msra.mxu0 0
    %157 = vmatprep.subr.bf16.mxu0 0
    %158 = vmatpush1.bf16.msra.mxu0 0
    %159 = vmatprep.subr.bf16.mxu0 0
    %160 = vmatpush1.bf16.msra.mxu0 0
    %161 = vmatprep.subr.bf16.mxu0 0
    %162 = vmatpush1.bf16.msra.mxu0 0
    %163 = vmatprep.subr.bf16.mxu0 0
    %164 = vmatpush1.bf16.msra.mxu0 0
    %165 = vmatprep.mubr.bf16.mxu0 0
    %166 = vmatmul.mubr.bf16.gmra.mrb[0].mxu0 %v81
    %v167 = vpop.f32.mrb[0].mxu0
    %v168 = vadd.f32 0.0, %v167
    %v169 = vpop.f32.mrb[0].mxu0
    %v170 = vpop.f32.mrb[0].mxu0
    %v171 = vadd.f32 0.0, %v170
    %v172 = vpop.f32.mrb[0].mxu0
    %173 = vmatprep.mubr.bf16.mxu0 0
    %174 = vmatmul.mubr.bf16.gmra.mrb[0].mxu0 %v82
    %v175 = vpop.f32.mrb[0].mxu0
    %v176 = vadd.f32 0.0, %v175
    %v177 = vpop.f32.mrb[0].mxu0
    %v178 = vpop.f32.mrb[0].mxu0
    %v179 = vadd.f32 0.0, %v178
    %v180 = vpop.f32.mrb[0].mxu0
    %181 = vdwg.mxu0
    %v182 = vadd.f32 %v49, %v168
    %v183 = vadd.f32 %v50, %v171
    %v184 = vadd.f32 %v51, %v176
    %v185 = vadd.f32 %v52, %v179
    %186 = vst [vmem:[#allocation2] sm:$0xff] %v182
    %187 = vst [vmem:[#allocation2 + $0x8] sm:$0xff] %v183
    %188 = vst [vmem:[#allocation2 + $0x10] sm:$0xff] %v184
    %189 = vst [vmem:[#allocation2 + $0x18] sm:$0xff] %v185
    // Predicated region
    $region22: #{_xlnet_qa_forward_jit.17} parent=1 // pred_check
      %p190 = pneg %p41
    $region23: #{_xlnet_qa_forward_jit.17} parent=1 // pred_check_branch
      %192 = sbr.rel (%p190) target = $region25
    $region24: #{_xlnet_qa_forward_jit.17} parent=1 // pred_region
      %v193 = vld [vmem:[#allocation2] sm:$0xff]
      %v194 = vld [vmem:[#allocation2 + $0x8] sm:$0xff]
      %v195 = vld [vmem:[#allocation2 + $0x10] sm:$0xff]
      %v196 = vld [vmem:[#allocation2 + $0x18] sm:$0xff]
      %v197 = vpack.c.bf16 %v194, %v193
      %v198 = vpack.c.bf16 %v196, %v195
      %v201 = vunpack.c.l.b16 %v197
      %v202 = vunpack.c.h.b16 %v197
      %v203 = vunpack.c.l.b16 %v198
      %v204 = vunpack.c.h.b16 %v198
      %v205 = vpack.c.b16 %v201, %v201
      %v206 = vpack.c.b16 %v202, %v202
      %v207 = vpack.c.b16 %v203, %v203
      %v208 = vpack.c.b16 %v204, %v204
      %213 = vst [vmem:[#allocation8] sm:$0xf] %v205
      %214 = vst [vmem:[#allocation8 + $0x4] sm:$0xf] %v206
      %215 = vst [vmem:[#allocation8 + $0x8] sm:$0xf] %v207
      %216 = vst [vmem:[#allocation8 + $0xc] sm:$0xf] %v208
    $region25: #{_xlnet_qa_forward_jit.17} parent=1 // pred_fallthru
      _
    // Predicated region
    $region26: #{_xlnet_qa_forward_jit.17} parent=1 // pred_check
      _
    $region27: #{_xlnet_qa_forward_jit.17} parent=1 // pred_check_branch
      %218 = sbr.rel (0) target = $region29
    $region28: #{_xlnet_qa_forward_jit.17} parent=1 // pred_region
      %s220 = ssub.s32 256, 256
      %221 = vsyncadd [#allocation5], %s220
      %s222 = sshll.u32 [#allocation8], 4
      %s223 = int_to_ptr.vmem [resolvable:$true] %s222
      %228 = dma.vmem_to_hbm [thread:$0]  %s223, 256, %s2, [#allocation5], 64, 64, 4
    $region29: #{_xlnet_qa_forward_jit.17} parent=1 // pred_fallthru
      _
    // Predicated region
    $region30: #{_xlnet_qa_forward_jit.17} parent=1 // pred_check
      _
    $region31: #{_xlnet_qa_forward_jit.17} parent=1 // pred_check_branch
      %230 = sbr.rel (0) target = $region33
    $region32: #{_xlnet_qa_forward_jit.17} parent=1 // pred_region
      %231 = dma.done [#allocation5], 256
    $region33: #{_xlnet_qa_forward_jit.17} parent=1 // pred_fallthru
      _
    %232 = vsyncpa [#allocation4], 1
    %233 = vsyncpa [#allocation7], 1
    %234 = vsyncpa [#allocation5], 1

// kernel: _xlnet_qa_forward_jit.11
$region0: #{_xlnet_qa_forward_jit.11}
  #allocation0 [shape = 'u32[]', space=smem, size = 0x4, offset = 0x4, fixed_abs, tag = 'smem constant byte address 0x4 - core index']
  #allocation1 [shape = 'u32[144,128]{1,0:T(1,128)}', space=vmem, size = 0x12000, scoped, tag = 'internal scratch']
  #allocation2 [shape = 'f32[32,384]{1,0:T(8,128)}', space=vmem, size = 0xc000, scoped, tag = 'scratch operand']
  %s0 = inlined_call_operand.hbm [shape: bf16[32,128], index: 0, kind: input, shape index: {}]
  %s1 = inlined_call_operand.hbm [shape: bf16[128,384], index: 1, kind: input, shape index: {}]
  %s2 = inlined_call_operand.hbm [shape: bf16[32,384], index: 2, kind: output, shape index: {}]
  %s3 = sld [smem:[#allocation0]]
  $region34: #{_xlnet_qa_forward_jit.11} parent=0
    _
  %s5 = ssub.s32 1, %s3
  %s6 = scalar_select 0, %s5, %s3
  $region1: #{_xlnet_qa_forward_jit.11} parent=0
    #allocation3 [shape = 'u8[8192]{0}', space=vmem, size = 0x2000, scoped, tag = 'input window, operand 0, single buffered']
    #allocation4 [shape = 's32[1]{0}', space=sflag, size = 0x4, scoped, tag = 'scoped memory for _xlnet_qa_forward_jit.11']
    #allocation5 [shape = 's32[1]{0}', space=sflag, size = 0x4, scoped, tag = 'scoped memory for _xlnet_qa_forward_jit.11']
    #allocation6 [shape = 'u8[98304]{0}', space=vmem, size = 0x18000, scoped, tag = 'input window, operand 1, single buffered']
    #allocation7 [shape = 's32[1]{0}', space=sflag, size = 0x4, scoped, tag = 'scoped memory for _xlnet_qa_forward_jit.11']
    #allocation8 [shape = 'u8[24576]{0}', space=vmem, size = 0x6000, scoped, tag = 'output window, operand 0, single buffered']
    %7 = vsyncpa [#allocation4], 0
    %8 = vsyncpa [#allocation7], 0
    %9 = vsyncpa [#allocation5], 0
    // Predicated region
    $region2: #{_xlnet_qa_forward_jit.11} parent=1 // pred_check
      _
    $region3: #{_xlnet_qa_forward_jit.11} parent=1 // pred_check_branch
      %11 = sbr.rel (0) target = $region5
    $region4: #{_xlnet_qa_forward_jit.11} parent=1 // pred_region
      %s13 = ssub.s32 256, 256
      %14 = vsyncadd [#allocation4], %s13
      %s15 = sshll.u32 [#allocation3], 4
      %s16 = int_to_ptr.vmem [resolvable:$true] %s15
      %21 = dma.hbm_to_vmem [thread:$0]  %s0, 256, %s16, [#allocation4], 64, 64, 4
    $region5: #{_xlnet_qa_forward_jit.11} parent=1 // pred_fallthru
      _
    // Predicated region
    $region6: #{_xlnet_qa_forward_jit.11} parent=1 // pred_check
      _
    $region7: #{_xlnet_qa_forward_jit.11} parent=1 // pred_check_branch
      %23 = sbr.rel (0) target = $region9
    $region8: #{_xlnet_qa_forward_jit.11} parent=1 // pred_region
      %s25 = ssub.s32 3072, 3072
      %26 = vsyncadd [#allocation7], %s25
      %s27 = sshll.u32 [#allocation6], 4
      %s28 = int_to_ptr.vmem [resolvable:$true] %s27
      %33 = dma.hbm_to_vmem [thread:$0]  %s1, 3072, %s28, [#allocation7], 192, 192, 12
    $region9: #{_xlnet_qa_forward_jit.11} parent=1 // pred_fallthru
      _
    // Predicated region
    $region10: #{_xlnet_qa_forward_jit.11} parent=1 // pred_check
      _
    $region11: #{_xlnet_qa_forward_jit.11} parent=1 // pred_check_branch
      %35 = sbr.rel (0) target = $region13
    $region12: #{_xlnet_qa_forward_jit.11} parent=1 // pred_region
      %36 = dma.done [#allocation4], 256
    $region13: #{_xlnet_qa_forward_jit.11} parent=1 // pred_fallthru
      _
    // Predicated region
    $region14: #{_xlnet_qa_forward_jit.11} parent=1 // pred_check
      _
    $region15: #{_xlnet_qa_forward_jit.11} parent=1 // pred_check_branch
      %38 = sbr.rel (0) target = $region17
    $region16: #{_xlnet_qa_forward_jit.11} parent=1 // pred_region
      %39 = dma.done [#allocation7], 3072
    $region17: #{_xlnet_qa_forward_jit.11} parent=1 // pred_fallthru
      _
    %p41 = scmp.eq.s32.totalorder 0, 0
    // Predicated region
    $region18: #{_xlnet_qa_forward_jit.11} parent=1 // pred_check
      %p42 = pneg %p41
    $region19: #{_xlnet_qa_forward_jit.11} parent=1 // pred_check_branch
      %44 = sbr.rel (%p42) target = $region21
    $region20: #{_xlnet_qa_forward_jit.11} parent=1 // pred_region
      %45 = vst [vmem:[#allocation2] sm:$0xff] 0.0
      %46 = vst [vmem:[#allocation2 + $0x8] sm:$0xff] 0.0
      %47 = vst [vmem:[#allocation2 + $0x10] sm:$0xff] 0.0
      %48 = vst [vmem:[#allocation2 + $0x18] sm:$0xff] 0.0
      %49 = vst [vmem:[#allocation2 + $0x20] sm:$0xff] 0.0
      %50 = vst [vmem:[#allocation2 + $0x28] sm:$0xff] 0.0
      %51 = vst [vmem:[#allocation2 + $0x30] sm:$0xff] 0.0
      %52 = vst [vmem:[#allocation2 + $0x38] sm:$0xff] 0.0
      %53 = vst [vmem:[#allocation2 + $0x40] sm:$0xff] 0.0
      %54 = vst [vmem:[#allocation2 + $0x48] sm:$0xff] 0.0
      %55 = vst [vmem:[#allocation2 + $0x50] sm:$0xff] 0.0
      %56 = vst [vmem:[#allocation2 + $0x58] sm:$0xff] 0.0
    $region21: #{_xlnet_qa_forward_jit.11} parent=1 // pred_fallthru
      _
    %v57 = vld [vmem:[#allocation2] sm:$0xff]
    %v58 = vld [vmem:[#allocation2 + $0x8] sm:$0xff]
    %v59 = vld [vmem:[#allocation2 + $0x10] sm:$0xff]
    %v60 = vld [vmem:[#allocation2 + $0x18] sm:$0xff]
    %v61 = vld [vmem:[#allocation2 + $0x20] sm:$0xff]
    %v62 = vld [vmem:[#allocation2 + $0x28] sm:$0xff]
    %v63 = vld [vmem:[#allocation2 + $0x30] sm:$0xff]
    %v64 = vld [vmem:[#allocation2 + $0x38] sm:$0xff]
    %v65 = vld [vmem:[#allocation2 + $0x40] sm:$0xff]
    %v66 = vld [vmem:[#allocation2 + $0x48] sm:$0xff]
    %v67 = vld [vmem:[#allocation2 + $0x50] sm:$0xff]
    %v68 = vld [vmem:[#allocation2 + $0x58] sm:$0xff]
    %v69 = vld [vmem:[#allocation3] sm:$0xf]
    %v70 = vld [vmem:[#allocation3 + $0x4] sm:$0xf]
    %v71 = vld [vmem:[#allocation3 + $0x8] sm:$0xf]
    %v72 = vld [vmem:[#allocation3 + $0xc] sm:$0xf]
    %v73 = vld [vmem:[#allocation6] sm:$0xff]
    %v74 = vld [vmem:[#allocation6 + $0x8] sm:$0xf]
    %v75 = vld [vmem:[#allocation6 + $0xc] sm:$0xff]
    %v76 = vld [vmem:[#allocation6 + $0x14] sm:$0xf]
    %v77 = vld [vmem:[#allocation6 + $0x18] sm:$0xff]
    %v78 = vld [vmem:[#allocation6 + $0x20] sm:$0xf]
    %v79 = vld [vmem:[#allocation6 + $0x24] sm:$0xff]
    %v80 = vld [vmem:[#allocation6 + $0x2c] sm:$0xf]
    %v81 = vld [vmem:[#allocation6 + $0x30] sm:$0xff]
    %v82 = vld [vmem:[#allocation6 + $0x38] sm:$0xf]
    %v83 = vld [vmem:[#allocation6 + $0x3c] sm:$0xff]
    %v84 = vld [vmem:[#allocation6 + $0x44] sm:$0xf]
    %v85 = vld [vmem:[#allocation6 + $0x48] sm:$0xff]
    %v86 = vld [vmem:[#allocation6 + $0x50] sm:$0xf]
    %v87 = vld [vmem:[#allocation6 + $0x54] sm:$0xff]
    %v88 = vld [vmem:[#allocation6 + $0x5c] sm:$0xf]
    %v89 = vld [vmem:[#allocation6 + $0x60] sm:$0xff]
    %v90 = vld [vmem:[#allocation6 + $0x68] sm:$0xf]
    %v91 = vld [vmem:[#allocation6 + $0x6c] sm:$0xff]
    %v92 = vld [vmem:[#allocation6 + $0x74] sm:$0xf]
    %v93 = vld [vmem:[#allocation6 + $0x78] sm:$0xff]
    %v94 = vld [vmem:[#allocation6 + $0x80] sm:$0xf]
    %v95 = vld [vmem:[#allocation6 + $0x84] sm:$0xff]
    %v96 = vld [vmem:[#allocation6 + $0x8c] sm:$0xf]
    %v97 = vld [vmem:[#allocation6 + $0x90] sm:$0xff]
    %v98 = vld [vmem:[#allocation6 + $0x98] sm:$0xf]
    %v99 = vld [vmem:[#allocation6 + $0x9c] sm:$0xff]
    %v100 = vld [vmem:[#allocation6 + $0xa4] sm:$0xf]
    %v101 = vld [vmem:[#allocation6 + $0xa8] sm:$0xff]
    %v102 = vld [vmem:[#allocation6 + $0xb0] sm:$0xf]
    %v103 = vld [vmem:[#allocation6 + $0xb4] sm:$0xff]
    %v104 = vld [vmem:[#allocation6 + $0xbc] sm:$0xf]
    %v109 = vunpack.c.l.b16 %v69
    %v110 = vunpack.c.l.b16 %v70
    %v111 = vunpack.c.l.b16 %v71
    %v112 = vunpack.c.l.b16 %v72
    %v113 = vpack.c.b16 %v110, %v109
    %v114 = vpack.c.b16 %v112, %v111
    %v149 = vunpack.c.l.b16 %v73
    %v150 = vunpack.c.h.b16 %v73
    %v151 = vunpack.c.l.b16 %v74
    %v152 = vunpack.c.l.b16 %v75
    %v153 = vunpack.c.h.b16 %v75
    %v154 = vunpack.c.l.b16 %v76
    %v155 = vunpack.c.l.b16 %v77
    %v156 = vunpack.c.h.b16 %v77
    %v157 = vunpack.c.l.b16 %v78
    %v158 = vunpack.c.l.b16 %v79
    %v159 = vunpack.c.h.b16 %v79
    %v160 = vunpack.c.l.b16 %v80
    %v161 = vunpack.c.l.b16 %v81
    %v162 = vunpack.c.h.b16 %v81
    %v163 = vunpack.c.l.b16 %v82
    %v164 = vunpack.c.l.b16 %v83
    %v165 = vunpack.c.h.b16 %v83
    %v166 = vunpack.c.l.b16 %v84
    %v167 = vunpack.c.l.b16 %v85
    %v168 = vunpack.c.h.b16 %v85
    %v169 = vunpack.c.l.b16 %v86
    %v170 = vunpack.c.l.b16 %v87
    %v171 = vunpack.c.h.b16 %v87
    %v172 = vunpack.c.l.b16 %v88
    %v173 = vunpack.c.l.b16 %v89
    %v174 = vunpack.c.h.b16 %v89
    %v175 = vunpack.c.l.b16 %v90
    %v176 = vunpack.c.l.b16 %v91
    %v177 = vunpack.c.h.b16 %v91
    %v178 = vunpack.c.l.b16 %v92
    %v179 = vunpack.c.l.b16 %v93
    %v180 = vunpack.c.h.b16 %v93
    %v181 = vunpack.c.l.b16 %v94
    %v182 = vunpack.c.l.b16 %v95
    %v183 = vunpack.c.h.b16 %v95
    %v184 = vunpack.c.l.b16 %v96
    %v185 = vunpack.c.l.b16 %v97
    %v186 = vunpack.c.h.b16 %v97
    %v187 = vunpack.c.l.b16 %v98
    %v188 = vunpack.c.l.b16 %v99
    %v189 = vunpack.c.h.b16 %v99
    %v190 = vunpack.c.l.b16 %v100
    %v191 = vunpack.c.l.b16 %v101
    %v192 = vunpack.c.h.b16 %v101
    %v193 = vunpack.c.l.b16 %v102
    %v194 = vunpack.c.l.b16 %v103
    %v195 = vunpack.c.h.b16 %v103
    %v196 = vunpack.c.l.b16 %v104
    %v197 = vpack.c.b16 %v152, %v149
    %v198 = vpack.c.b16 %v153, %v150
    %v199 = vpack.c.b16 %v154, %v151
    %v200 = vpack.c.b16 %v158, %v155
    %v201 = vpack.c.b16 %v159, %v156
    %v202 = vpack.c.b16 %v160, %v157
    %v203 = vpack.c.b16 %v164, %v161
    %v204 = vpack.c.b16 %v165, %v162
    %v205 = vpack.c.b16 %v166, %v163
    %v206 = vpack.c.b16 %v170, %v167
    %v207 = vpack.c.b16 %v171, %v168
    %v208 = vpack.c.b16 %v172, %v169
    %v209 = vpack.c.b16 %v176, %v173
    %v210 = vpack.c.b16 %v177, %v174
    %v211 = vpack.c.b16 %v178, %v175
    %v212 = vpack.c.b16 %v182, %v179
    %v213 = vpack.c.b16 %v183, %v180
    %v214 = vpack.c.b16 %v184, %v181
    %v215 = vpack.c.b16 %v188, %v185
    %v216 = vpack.c.b16 %v189, %v186
    %v217 = vpack.c.b16 %v190, %v187
    %v218 = vpack.c.b16 %v194, %v191
    %v219 = vpack.c.b16 %v195, %v192
    %v220 = vpack.c.b16 %v196, %v193
    %245 = vmatprep.subr.bf16.mxu0 %v198
    %246 = vmatpush1.bf16.msra.mxu0 %v197
    %247 = vmatprep.subr.bf16.mxu0 %v201
    %248 = vmatpush1.bf16.msra.mxu0 %v200
    %249 = vmatprep.subr.bf16.mxu0 %v204
    %250 = vmatpush1.bf16.msra.mxu0 %v203
    %251 = vmatprep.subr.bf16.mxu0 %v207
    %252 = vmatpush1.bf16.msra.mxu0 %v206
    %253 = vmatprep.subr.bf16.mxu0 %v210
    %254 = vmatpush1.bf16.msra.mxu0 %v209
    %255 = vmatprep.subr.bf16.mxu0 %v213
    %256 = vmatpush1.bf16.msra.mxu0 %v212
    %257 = vmatprep.subr.bf16.mxu0 %v216
    %258 = vmatpush1.bf16.msra.mxu0 %v215
    %259 = vmatprep.subr.bf16.mxu0 %v219
    %260 = vmatpush1.bf16.msra.mxu0 %v218
    %261 = vmatprep.subr.bf16.mxu0 0
    %262 = vmatpush1.bf16.msra.mxu0 0
    %263 = vmatprep.subr.bf16.mxu0 0
    %264 = vmatpush1.bf16.msra.mxu0 0
    %265 = vmatprep.subr.bf16.mxu0 0
    %266 = vmatpush1.bf16.msra.mxu0 0
    %267 = vmatprep.subr.bf16.mxu0 0
    %268 = vmatpush1.bf16.msra.mxu0 0
    %269 = vmatprep.subr.bf16.mxu0 0
    %270 = vmatpush1.bf16.msra.mxu0 0
    %271 = vmatprep.subr.bf16.mxu0 0
    %272 = vmatpush1.bf16.msra.mxu0 0
    %273 = vmatprep.subr.bf16.mxu0 0
    %274 = vmatpush1.bf16.msra.mxu0 0
    %275 = vmatprep.subr.bf16.mxu0 0
    %276 = vmatpush1.bf16.msra.mxu0 0
    %277 = vmatprep.mubr.bf16.mxu0 0
    %278 = vmatmul.mubr.bf16.gmra.mrb[0].mxu0 %v113
    %v279 = vpop.f32.mrb[0].mxu0
    %v280 = vadd.f32 0.0, %v279
    %v281 = vpop.f32.mrb[0].mxu0
    %v282 = vadd.f32 0.0, %v281
    %v283 = vpop.f32.mrb[0].mxu0
    %v284 = vadd.f32 0.0, %v283
    %v285 = vpop.f32.mrb[0].mxu0
    %v286 = vadd.f32 0.0, %v285
    %287 = vmatprep.mubr.bf16.mxu0 0
    %288 = vmatmul.mubr.bf16.gmra.mrb[0].mxu0 %v114
    %v289 = vpop.f32.mrb[0].mxu0
    %v290 = vadd.f32 0.0, %v289
    %v291 = vpop.f32.mrb[0].mxu0
    %v292 = vadd.f32 0.0, %v291
    %v293 = vpop.f32.mrb[0].mxu0
    %v294 = vadd.f32 0.0, %v293
    %v295 = vpop.f32.mrb[0].mxu0
    %v296 = vadd.f32 0.0, %v295
    %297 = vdwg.mxu0
    %298 = vmatprep.subr.bf16.mxu0 0
    %299 = vmatpush1.bf16.msra.mxu0 %v199
    %300 = vmatprep.subr.bf16.mxu0 0
    %301 = vmatpush1.bf16.msra.mxu0 %v202
    %302 = vmatprep.subr.bf16.mxu0 0
    %303 = vmatpush1.bf16.msra.mxu0 %v205
    %304 = vmatprep.subr.bf16.mxu0 0
    %305 = vmatpush1.bf16.msra.mxu0 %v208
    %306 = vmatprep.subr.bf16.mxu0 0
    %307 = vmatpush1.bf16.msra.mxu0 %v211
    %308 = vmatprep.subr.bf16.mxu0 0
    %309 = vmatpush1.bf16.msra.mxu0 %v214
    %310 = vmatprep.subr.bf16.mxu0 0
    %311 = vmatpush1.bf16.msra.mxu0 %v217
    %312 = vmatprep.subr.bf16.mxu0 0
    %313 = vmatpush1.bf16.msra.mxu0 %v220
    %314 = vmatprep.subr.bf16.mxu0 0
    %315 = vmatpush1.bf16.msra.mxu0 0
    %316 = vmatprep.subr.bf16.mxu0 0
    %317 = vmatpush1.bf16.msra.mxu0 0
    %318 = vmatprep.subr.bf16.mxu0 0
    %319 = vmatpush1.bf16.msra.mxu0 0
    %320 = vmatprep.subr.bf16.mxu0 0
    %321 = vmatpush1.bf16.msra.mxu0 0
    %322 = vmatprep.subr.bf16.mxu0 0
    %323 = vmatpush1.bf16.msra.mxu0 0
    %324 = vmatprep.subr.bf16.mxu0 0
    %325 = vmatpush1.bf16.msra.mxu0 0
    %326 = vmatprep.subr.bf16.mxu0 0
    %327 = vmatpush1.bf16.msra.mxu0 0
    %328 = vmatprep.subr.bf16.mxu0 0
    %329 = vmatpush1.bf16.msra.mxu0 0
    %330 = vmatprep.mubr.bf16.mxu0 0
    %331 = vmatmul.mubr.bf16.gmra.mrb[0].mxu0 %v113
    %v332 = vpop.f32.mrb[0].mxu0
    %v333 = vadd.f32 0.0, %v332
    %v334 = vpop.f32.mrb[0].mxu0
    %v335 = vpop.f32.mrb[0].mxu0
    %v336 = vadd.f32 0.0, %v335
    %v337 = vpop.f32.mrb[0].mxu0
    %338 = vmatprep.mubr.bf16.mxu0 0
    %339 = vmatmul.mubr.bf16.gmra.mrb[0].mxu0 %v114
    %v340 = vpop.f32.mrb[0].mxu0
    %v341 = vadd.f32 0.0, %v340
    %v342 = vpop.f32.mrb[0].mxu0
    %v343 = vpop.f32.mrb[0].mxu0
    %v344 = vadd.f32 0.0, %v343
    %v345 = vpop.f32.mrb[0].mxu0
    %346 = vdwg.mxu0
    %v347 = vadd.f32 %v57, %v280
    %v348 = vadd.f32 %v58, %v282
    %v349 = vadd.f32 %v59, %v333
    %v350 = vadd.f32 %v60, %v284
    %v351 = vadd.f32 %v61, %v286
    %v352 = vadd.f32 %v62, %v336
    %v353 = vadd.f32 %v63, %v290
    %v354 = vadd.f32 %v64, %v292
    %v355 = vadd.f32 %v65, %v341
    %v356 = vadd.f32 %v66, %v294
    %v357 = vadd.f32 %v67, %v296
    %v358 = vadd.f32 %v68, %v344
    %359 = vst [vmem:[#allocation2] sm:$0xff] %v347
    %360 = vst [vmem:[#allocation2 + $0x8] sm:$0xff] %v348
    %361 = vst [vmem:[#allocation2 + $0x10] sm:$0xff] %v349
    %362 = vst [vmem:[#allocation2 + $0x18] sm:$0xff] %v350
    %363 = vst [vmem:[#allocation2 + $0x20] sm:$0xff] %v351
    %364 = vst [vmem:[#allocation2 + $0x28] sm:$0xff] %v352
    %365 = vst [vmem:[#allocation2 + $0x30] sm:$0xff] %v353
    %366 = vst [vmem:[#allocation2 + $0x38] sm:$0xff] %v354
    %367 = vst [vmem:[#allocation2 + $0x40] sm:$0xff] %v355
    %368 = vst [vmem:[#allocation2 + $0x48] sm:$0xff] %v356
    %369 = vst [vmem:[#allocation2 + $0x50] sm:$0xff] %v357
    %370 = vst [vmem:[#allocation2 + $0x58] sm:$0xff] %v358
    // Predicated region
    $region22: #{_xlnet_qa_forward_jit.11} parent=1 // pred_check
      %p371 = pneg %p41
    $region23: #{_xlnet_qa_forward_jit.11} parent=1 // pred_check_branch
      %373 = sbr.rel (%p371) target = $region25
    $region24: #{_xlnet_qa_forward_jit.11} parent=1 // pred_region
      %v374 = vld [vmem:[#allocation2] sm:$0xff]
      %v375 = vld [vmem:[#allocation2 + $0x8] sm:$0xff]
      %v376 = vld [vmem:[#allocation2 + $0x10] sm:$0xff]
      %v377 = vld [vmem:[#allocation2 + $0x18] sm:$0xff]
      %v378 = vld [vmem:[#allocation2 + $0x20] sm:$0xff]
      %v379 = vld [vmem:[#allocation2 + $0x28] sm:$0xff]
      %v380 = vld [vmem:[#allocation2 + $0x30] sm:$0xff]
      %v381 = vld [vmem:[#allocation2 + $0x38] sm:$0xff]
      %v382 = vld [vmem:[#allocation2 + $0x40] sm:$0xff]
      %v383 = vld [vmem:[#allocation2 + $0x48] sm:$0xff]
      %v384 = vld [vmem:[#allocation2 + $0x50] sm:$0xff]
      %v385 = vld [vmem:[#allocation2 + $0x58] sm:$0xff]
      %v386 = vpack.c.bf16 %v377, %v374
      %v387 = vpack.c.bf16 %v378, %v375
      %v388 = vpack.c.bf16 %v379, %v376
      %v389 = vpack.c.bf16 %v383, %v380
      %v390 = vpack.c.bf16 %v384, %v381
      %v391 = vpack.c.bf16 %v385, %v382
      %v398 = vunpack.c.l.b16 %v386
      %v399 = vunpack.c.l.b16 %v387
      %v400 = vunpack.c.l.b16 %v388
      %v401 = vunpack.c.h.b16 %v386
      %v402 = vunpack.c.h.b16 %v387
      %v403 = vunpack.c.h.b16 %v388
      %v404 = vunpack.c.l.b16 %v389
      %v405 = vunpack.c.l.b16 %v390
      %v406 = vunpack.c.l.b16 %v391
      %v407 = vunpack.c.h.b16 %v389
      %v408 = vunpack.c.h.b16 %v390
      %v409 = vunpack.c.h.b16 %v391
      %v410 = vpack.c.b16 %v399, %v398
      %v411 = vpack.c.b16 %v400, %v400
      %v412 = vpack.c.b16 %v402, %v401
      %v413 = vpack.c.b16 %v403, %v403
      %v414 = vpack.c.b16 %v405, %v404
      %v415 = vpack.c.b16 %v406, %v406
      %v416 = vpack.c.b16 %v408, %v407
      %v417 = vpack.c.b16 %v409, %v409
      %426 = vst [vmem:[#allocation8] sm:$0xff] %v410
      %427 = vst [vmem:[#allocation8 + $0x8] sm:$0xf] %v411
      %428 = vst [vmem:[#allocation8 + $0xc] sm:$0xff] %v412
      %429 = vst [vmem:[#allocation8 + $0x14] sm:$0xf] %v413
      %430 = vst [vmem:[#allocation8 + $0x18] sm:$0xff] %v414
      %431 = vst [vmem:[#allocation8 + $0x20] sm:$0xf] %v415
      %432 = vst [vmem:[#allocation8 + $0x24] sm:$0xff] %v416
      %433 = vst [vmem:[#allocation8 + $0x2c] sm:$0xf] %v417
    $region25: #{_xlnet_qa_forward_jit.11} parent=1 // pred_fallthru
      _
    // Predicated region
    $region26: #{_xlnet_qa_forward_jit.11} parent=1 // pred_check
      _
    $region27: #{_xlnet_qa_forward_jit.11} parent=1 // pred_check_branch
      %435 = sbr.rel (0) target = $region29
    $region28: #{_xlnet_qa_forward_jit.11} parent=1 // pred_region
      %s437 = ssub.s32 768, 768
      %438 = vsyncadd [#allocation5], %s437
      %s439 = sshll.u32 [#allocation8], 4
      %s440 = int_to_ptr.vmem [resolvable:$true] %s439
      %445 = dma.vmem_to_hbm [thread:$0]  %s440, 768, %s2, [#allocation5], 192, 192, 12
    $region29: #{_xlnet_qa_forward_jit.11} parent=1 // pred_fallthru
      _
    // Predicated region
    $region30: #{_xlnet_qa_forward_jit.11} parent=1 // pred_check
      _
    $region31: #{_xlnet_qa_forward_jit.11} parent=1 // pred_check_branch
      %447 = sbr.rel (0) target = $region33
    $region32: #{_xlnet_qa_forward_jit.11} parent=1 // pred_region
      %448 = dma.done [#allocation5], 768
    $region33: #{_xlnet_qa_forward_jit.11} parent=1 // pred_fallthru
      _
    %449 = vsyncpa [#allocation4], 1
    %450 = vsyncpa [#allocation7], 1
    %451 = vsyncpa [#allocation5], 1

// kernel: _xlnet_qa_forward_jit.14
$region0: #{_xlnet_qa_forward_jit.14}
  #allocation0 [shape = 'u32[]', space=smem, size = 0x4, offset = 0x4, fixed_abs, tag = 'smem constant byte address 0x4 - core index']
  #allocation1 [shape = 'u32[144,128]{1,0:T(1,128)}', space=vmem, size = 0x12000, scoped, tag = 'internal scratch']
  #allocation2 [shape = 'f32[32,256]{1,0:T(8,128)}', space=vmem, size = 0x8000, scoped, tag = 'scratch operand']
  %s0 = inlined_call_operand.hbm [shape: bf16[32,128], index: 0, kind: input, shape index: {}]
  %s1 = inlined_call_operand.hbm [shape: bf16[128,256], index: 1, kind: input, shape index: {}]
  %s2 = inlined_call_operand.hbm [shape: f32[1,256], index: 2, kind: input, shape index: {}]
  %s3 = inlined_call_operand.hbm [shape: bf16[32,256], index: 3, kind: output, shape index: {}]
  %s4 = sld [smem:[#allocation0]]
  $region42: #{_xlnet_qa_forward_jit.14} parent=0
    _
  %s6 = ssub.s32 1, %s4
  %s7 = scalar_select 0, %s6, %s4
  $region1: #{_xlnet_qa_forward_jit.14} parent=0
    #allocation3 [shape = 'u8[8192]{0}', space=vmem, size = 0x2000, scoped, tag = 'input window, operand 0, single buffered']
    #allocation4 [shape = 's32[1]{0}', space=sflag, size = 0x4, scoped, tag = 'scoped memory for _xlnet_qa_forward_jit.14']
    #allocation5 [shape = 's32[1]{0}', space=sflag, size = 0x4, scoped, tag = 'scoped memory for _xlnet_qa_forward_jit.14']
    #allocation6 [shape = 'u8[65536]{0}', space=vmem, size = 0x10000, scoped, tag = 'input window, operand 1, single buffered']
    #allocation7 [shape = 's32[1]{0}', space=sflag, size = 0x4, scoped, tag = 'scoped memory for _xlnet_qa_forward_jit.14']
    #allocation8 [shape = 'u8[1024]{0}', space=vmem, size = 0x400, scoped, tag = 'input window, operand 2, single buffered']
    #allocation9 [shape = 'u8[16384]{0}', space=vmem, size = 0x4000, scoped, tag = 'output window, operand 0, single buffered']
    %8 = vsyncpa [#allocation4], 0
    %9 = vsyncpa [#allocation7], 0
    %10 = vsyncpa [#allocation5], 0
    // Predicated region
    $region2: #{_xlnet_qa_forward_jit.14} parent=1 // pred_check
      _
    $region3: #{_xlnet_qa_forward_jit.14} parent=1 // pred_check_branch
      %12 = sbr.rel (0) target = $region5
    $region4: #{_xlnet_qa_forward_jit.14} parent=1 // pred_region
      %s14 = ssub.s32 256, 256
      %15 = vsyncadd [#allocation4], %s14
      %s16 = sshll.u32 [#allocation3], 4
      %s17 = int_to_ptr.vmem [resolvable:$true] %s16
      %22 = dma.hbm_to_vmem [thread:$0]  %s0, 256, %s17, [#allocation4], 64, 64, 4
    $region5: #{_xlnet_qa_forward_jit.14} parent=1 // pred_fallthru
      _
    // Predicated region
    $region6: #{_xlnet_qa_forward_jit.14} parent=1 // pred_check
      _
    $region7: #{_xlnet_qa_forward_jit.14} parent=1 // pred_check_branch
      %24 = sbr.rel (0) target = $region9
    $region8: #{_xlnet_qa_forward_jit.14} parent=1 // pred_region
      %s26 = ssub.s32 2048, 2048
      %27 = vsyncadd [#allocation7], %s26
      %s28 = sshll.u32 [#allocation6], 4
      %s29 = int_to_ptr.vmem [resolvable:$true] %s28
      %34 = dma.hbm_to_vmem [thread:$0]  %s1, 2048, %s29, [#allocation7], 128, 128, 8
    $region9: #{_xlnet_qa_forward_jit.14} parent=1 // pred_fallthru
      _
    // Predicated region
    $region10: #{_xlnet_qa_forward_jit.14} parent=1 // pred_check
      _
    $region11: #{_xlnet_qa_forward_jit.14} parent=1 // pred_check_branch
      %36 = sbr.rel (0) target = $region13
    $region12: #{_xlnet_qa_forward_jit.14} parent=1 // pred_region
      %s38 = ssub.s32 32, 32
      %39 = vsyncadd [#allocation7], %s38
      %s41 = sshll.u32 [#allocation8], 4
      %s42 = int_to_ptr.vmem [resolvable:$true] %s41
      %44 = dma.hbm_to_vmem [thread:$0]  %s2, 32, %s42, [#allocation7]
    $region13: #{_xlnet_qa_forward_jit.14} parent=1 // pred_fallthru
      _
    // Predicated region
    $region14: #{_xlnet_qa_forward_jit.14} parent=1 // pred_check
      _
    $region15: #{_xlnet_qa_forward_jit.14} parent=1 // pred_check_branch
      %46 = sbr.rel (0) target = $region17
    $region16: #{_xlnet_qa_forward_jit.14} parent=1 // pred_region
      %47 = dma.done [#allocation4], 256
    $region17: #{_xlnet_qa_forward_jit.14} parent=1 // pred_fallthru
      _
    // Predicated region
    $region18: #{_xlnet_qa_forward_jit.14} parent=1 // pred_check
      _
    $region19: #{_xlnet_qa_forward_jit.14} parent=1 // pred_check_branch
      %49 = sbr.rel (0) target = $region21
    $region20: #{_xlnet_qa_forward_jit.14} parent=1 // pred_region
      %50 = dma.done [#allocation7], 2048
    $region21: #{_xlnet_qa_forward_jit.14} parent=1 // pred_fallthru
      _
    // Predicated region
    $region22: #{_xlnet_qa_forward_jit.14} parent=1 // pred_check
      _
    $region23: #{_xlnet_qa_forward_jit.14} parent=1 // pred_check_branch
      %52 = sbr.rel (0) target = $region25
    $region24: #{_xlnet_qa_forward_jit.14} parent=1 // pred_region
      %53 = dma.done [#allocation7], 32
    $region25: #{_xlnet_qa_forward_jit.14} parent=1 // pred_fallthru
      _
    %p55 = scmp.eq.s32.totalorder 0, 0
    // Predicated region
    $region26: #{_xlnet_qa_forward_jit.14} parent=1 // pred_check
      %p56 = pneg %p55
    $region27: #{_xlnet_qa_forward_jit.14} parent=1 // pred_check_branch
      %58 = sbr.rel (%p56) target = $region29
    $region28: #{_xlnet_qa_forward_jit.14} parent=1 // pred_region
      %59 = vst [vmem:[#allocation2] sm:$0xff] 0.0
      %60 = vst [vmem:[#allocation2 + $0x8] sm:$0xff] 0.0
      %61 = vst [vmem:[#allocation2 + $0x10] sm:$0xff] 0.0
      %62 = vst [vmem:[#allocation2 + $0x18] sm:$0xff] 0.0
      %63 = vst [vmem:[#allocation2 + $0x20] sm:$0xff] 0.0
      %64 = vst [vmem:[#allocation2 + $0x28] sm:$0xff] 0.0
      %65 = vst [vmem:[#allocation2 + $0x30] sm:$0xff] 0.0
      %66 = vst [vmem:[#allocation2 + $0x38] sm:$0xff] 0.0
    $region29: #{_xlnet_qa_forward_jit.14} parent=1 // pred_fallthru
      _
    %v67 = vld [vmem:[#allocation2] sm:$0xff]
    %v68 = vld [vmem:[#allocation2 + $0x8] sm:$0xff]
    %v69 = vld [vmem:[#allocation2 + $0x10] sm:$0xff]
    %v70 = vld [vmem:[#allocation2 + $0x18] sm:$0xff]
    %v71 = vld [vmem:[#allocation2 + $0x20] sm:$0xff]
    %v72 = vld [vmem:[#allocation2 + $0x28] sm:$0xff]
    %v73 = vld [vmem:[#allocation2 + $0x30] sm:$0xff]
    %v74 = vld [vmem:[#allocation2 + $0x38] sm:$0xff]
    %v75 = vld [vmem:[#allocation3] sm:$0xf]
    %v76 = vld [vmem:[#allocation3 + $0x4] sm:$0xf]
    %v77 = vld [vmem:[#allocation3 + $0x8] sm:$0xf]
    %v78 = vld [vmem:[#allocation3 + $0xc] sm:$0xf]
    %v79 = vld [vmem:[#allocation6] sm:$0xff]
    %v80 = vld [vmem:[#allocation6 + $0x8] sm:$0xff]
    %v81 = vld [vmem:[#allocation6 + $0x10] sm:$0xff]
    %v82 = vld [vmem:[#allocation6 + $0x18] sm:$0xff]
    %v83 = vld [vmem:[#allocation6 + $0x20] sm:$0xff]
    %v84 = vld [vmem:[#allocation6 + $0x28] sm:$0xff]
    %v85 = vld [vmem:[#allocation6 + $0x30] sm:$0xff]
    %v86 = vld [vmem:[#allocation6 + $0x38] sm:$0xff]
    %v87 = vld [vmem:[#allocation6 + $0x40] sm:$0xff]
    %v88 = vld [vmem:[#allocation6 + $0x48] sm:$0xff]
    %v89 = vld [vmem:[#allocation6 + $0x50] sm:$0xff]
    %v90 = vld [vmem:[#allocation6 + $0x58] sm:$0xff]
    %v91 = vld [vmem:[#allocation6 + $0x60] sm:$0xff]
    %v92 = vld [vmem:[#allocation6 + $0x68] sm:$0xff]
    %v93 = vld [vmem:[#allocation6 + $0x70] sm:$0xff]
    %v94 = vld [vmem:[#allocation6 + $0x78] sm:$0xff]
    %v99 = vunpack.c.l.b16 %v75
    %v100 = vunpack.c.l.b16 %v76
    %v101 = vunpack.c.l.b16 %v77
    %v102 = vunpack.c.l.b16 %v78
    %v103 = vpack.c.b16 %v100, %v99
    %v104 = vpack.c.b16 %v102, %v101
    %v123 = vunpack.c.l.b16 %v79
    %v124 = vunpack.c.h.b16 %v79
    %v125 = vunpack.c.l.b16 %v80
    %v126 = vunpack.c.h.b16 %v80
    %v127 = vunpack.c.l.b16 %v81
    %v128 = vunpack.c.h.b16 %v81
    %v129 = vunpack.c.l.b16 %v82
    %v130 = vunpack.c.h.b16 %v82
    %v131 = vunpack.c.l.b16 %v83
    %v132 = vunpack.c.h.b16 %v83
    %v133 = vunpack.c.l.b16 %v84
    %v134 = vunpack.c.h.b16 %v84
    %v135 = vunpack.c.l.b16 %v85
    %v136 = vunpack.c.h.b16 %v85
    %v137 = vunpack.c.l.b16 %v86
    %v138 = vunpack.c.h.b16 %v86
    %v139 = vunpack.c.l.b16 %v87
    %v140 = vunpack.c.h.b16 %v87
    %v141 = vunpack.c.l.b16 %v88
    %v142 = vunpack.c.h.b16 %v88
    %v143 = vunpack.c.l.b16 %v89
    %v144 = vunpack.c.h.b16 %v89
    %v145 = vunpack.c.l.b16 %v90
    %v146 = vunpack.c.h.b16 %v90
    %v147 = vunpack.c.l.b16 %v91
    %v148 = vunpack.c.h.b16 %v91
    %v149 = vunpack.c.l.b16 %v92
    %v150 = vunpack.c.h.b16 %v92
    %v151 = vunpack.c.l.b16 %v93
    %v152 = vunpack.c.h.b16 %v93
    %v153 = vunpack.c.l.b16 %v94
    %v154 = vunpack.c.h.b16 %v94
    %v155 = vpack.c.b16 %v125, %v123
    %v156 = vpack.c.b16 %v126, %v124
    %v157 = vpack.c.b16 %v129, %v127
    %v158 = vpack.c.b16 %v130, %v128
    %v159 = vpack.c.b16 %v133, %v131
    %v160 = vpack.c.b16 %v134, %v132
    %v161 = vpack.c.b16 %v137, %v135
    %v162 = vpack.c.b16 %v138, %v136
    %v163 = vpack.c.b16 %v141, %v139
    %v164 = vpack.c.b16 %v142, %v140
    %v165 = vpack.c.b16 %v145, %v143
    %v166 = vpack.c.b16 %v146, %v144
    %v167 = vpack.c.b16 %v149, %v147
    %v168 = vpack.c.b16 %v150, %v148
    %v169 = vpack.c.b16 %v153, %v151
    %v170 = vpack.c.b16 %v154, %v152
    %187 = vmatprep.subr.bf16.mxu0 %v156
    %188 = vmatpush1.bf16.msra.mxu0 %v155
    %189 = vmatprep.subr.bf16.mxu0 %v158
    %190 = vmatpush1.bf16.msra.mxu0 %v157
    %191 = vmatprep.subr.bf16.mxu0 %v160
    %192 = vmatpush1.bf16.msra.mxu0 %v159
    %193 = vmatprep.subr.bf16.mxu0 %v162
    %194 = vmatpush1.bf16.msra.mxu0 %v161
    %195 = vmatprep.subr.bf16.mxu0 %v164
    %196 = vmatpush1.bf16.msra.mxu0 %v163
    %197 = vmatprep.subr.bf16.mxu0 %v166
    %198 = vmatpush1.bf16.msra.mxu0 %v165
    %199 = vmatprep.subr.bf16.mxu0 %v168
    %200 = vmatpush1.bf16.msra.mxu0 %v167
    %201 = vmatprep.subr.bf16.mxu0 %v170
    %202 = vmatpush1.bf16.msra.mxu0 %v169
    %203 = vmatprep.subr.bf16.mxu0 0
    %204 = vmatpush1.bf16.msra.mxu0 0
    %205 = vmatprep.subr.bf16.mxu0 0
    %206 = vmatpush1.bf16.msra.mxu0 0
    %207 = vmatprep.subr.bf16.mxu0 0
    %208 = vmatpush1.bf16.msra.mxu0 0
    %209 = vmatprep.subr.bf16.mxu0 0
    %210 = vmatpush1.bf16.msra.mxu0 0
    %211 = vmatprep.subr.bf16.mxu0 0
    %212 = vmatpush1.bf16.msra.mxu0 0
    %213 = vmatprep.subr.bf16.mxu0 0
    %214 = vmatpush1.bf16.msra.mxu0 0
    %215 = vmatprep.subr.bf16.mxu0 0
    %216 = vmatpush1.bf16.msra.mxu0 0
    %217 = vmatprep.subr.bf16.mxu0 0
    %218 = vmatpush1.bf16.msra.mxu0 0
    %219 = vmatprep.mubr.bf16.mxu0 0
    %220 = vmatmul.mubr.bf16.gmra.mrb[0].mxu0 %v103
    %v221 = vpop.f32.mrb[0].mxu0
    %v222 = vadd.f32 0.0, %v221
    %v223 = vpop.f32.mrb[0].mxu0
    %v224 = vadd.f32 0.0, %v223
    %v225 = vpop.f32.mrb[0].mxu0
    %v226 = vadd.f32 0.0, %v225
    %v227 = vpop.f32.mrb[0].mxu0
    %v228 = vadd.f32 0.0, %v227
    %229 = vmatprep.mubr.bf16.mxu0 0
    %230 = vmatmul.mubr.bf16.gmra.mrb[0].mxu0 %v104
    %v231 = vpop.f32.mrb[0].mxu0
    %v232 = vadd.f32 0.0, %v231
    %v233 = vpop.f32.mrb[0].mxu0
    %v234 = vadd.f32 0.0, %v233
    %v235 = vpop.f32.mrb[0].mxu0
    %v236 = vadd.f32 0.0, %v235
    %v237 = vpop.f32.mrb[0].mxu0
    %v238 = vadd.f32 0.0, %v237
    %239 = vdwg.mxu0
    %v240 = vadd.f32 %v67, %v222
    %v241 = vadd.f32 %v68, %v224
    %v242 = vadd.f32 %v69, %v226
    %v243 = vadd.f32 %v70, %v228
    %v244 = vadd.f32 %v71, %v232
    %v245 = vadd.f32 %v72, %v234
    %v246 = vadd.f32 %v73, %v236
    %v247 = vadd.f32 %v74, %v238
    %248 = vst [vmem:[#allocation2] sm:$0xff] %v240
    %249 = vst [vmem:[#allocation2 + $0x8] sm:$0xff] %v241
    %250 = vst [vmem:[#allocation2 + $0x10] sm:$0xff] %v242
    %251 = vst [vmem:[#allocation2 + $0x18] sm:$0xff] %v243
    %252 = vst [vmem:[#allocation2 + $0x20] sm:$0xff] %v244
    %253 = vst [vmem:[#allocation2 + $0x28] sm:$0xff] %v245
    %254 = vst [vmem:[#allocation2 + $0x30] sm:$0xff] %v246
    %255 = vst [vmem:[#allocation2 + $0x38] sm:$0xff] %v247
    // Predicated region
    $region30: #{_xlnet_qa_forward_jit.14} parent=1 // pred_check
      %p256 = pneg %p55
    $region31: #{_xlnet_qa_forward_jit.14} parent=1 // pred_check_branch
      %258 = sbr.rel (%p256) target = $region33
    $region32: #{_xlnet_qa_forward_jit.14} parent=1 // pred_region
      %v259 = vld [vmem:[#allocation2] sm:$0xff]
      %v260 = vld [vmem:[#allocation2 + $0x8] sm:$0xff]
      %v261 = vld [vmem:[#allocation2 + $0x10] sm:$0xff]
      %v262 = vld [vmem:[#allocation2 + $0x18] sm:$0xff]
      %v263 = vld [vmem:[#allocation2 + $0x20] sm:$0xff]
      %v264 = vld [vmem:[#allocation2 + $0x28] sm:$0xff]
      %v265 = vld [vmem:[#allocation2 + $0x30] sm:$0xff]
      %v266 = vld [vmem:[#allocation2 + $0x38] sm:$0xff]
      %v267 = vld [vmem:[#allocation8] sm:$0x3]
      %v269 = vlaneseq
      %v270 = vshrl.u32 %v269, 7
      %v271 = vsub.s32 0, %v270
      %v272 = vrot.slane %v267, %v271
      %v273 = vlaneseq
      %v274 = vshrl.u32 %v273, 7
      %v275 = vsub.s32 1, %v274
      %v276 = vrot.slane %v267, %v275
      %v279 = vadd.f32 %v259, %v272
      %v280 = vadd.f32 %v260, %v276
      %v281 = vadd.f32 %v261, %v272
      %v282 = vadd.f32 %v262, %v276
      %v283 = vadd.f32 %v263, %v272
      %v284 = vadd.f32 %v264, %v276
      %v285 = vadd.f32 %v265, %v272
      %v286 = vadd.f32 %v266, %v276
      %v287 = vmul.f32 %v279, 0.5
      %v288 = vmul.f32 %v280, 0.5
      %v289 = vmul.f32 %v281, 0.5
      %v290 = vmul.f32 %v282, 0.5
      %v291 = vmul.f32 %v283, 0.5
      %v292 = vmul.f32 %v284, 0.5
      %v293 = vmul.f32 %v285, 0.5
      %v294 = vmul.f32 %v286, 0.5
      %v295 = vmul.f32 %v279, 0.044715
      %v296 = vmul.f32 %v280, 0.044715
      %v297 = vmul.f32 %v281, 0.044715
      %v298 = vmul.f32 %v282, 0.044715
      %v299 = vmul.f32 %v283, 0.044715
      %v300 = vmul.f32 %v284, 0.044715
      %v301 = vmul.f32 %v285, 0.044715
      %v302 = vmul.f32 %v286, 0.044715
      %v303 = vmul.f32 %v295, %v279
      %v304 = vmul.f32 %v296, %v280
      %v305 = vmul.f32 %v297, %v281
      %v306 = vmul.f32 %v298, %v282
      %v307 = vmul.f32 %v299, %v283
      %v308 = vmul.f32 %v300, %v284
      %v309 = vmul.f32 %v301, %v285
      %v310 = vmul.f32 %v302, %v286
      %v311 = vmul.f32 %v303, %v279
      %v312 = vmul.f32 %v304, %v280
      %v313 = vmul.f32 %v305, %v281
      %v314 = vmul.f32 %v306, %v282
      %v315 = vmul.f32 %v307, %v283
      %v316 = vmul.f32 %v308, %v284
      %v317 = vmul.f32 %v309, %v285
      %v318 = vmul.f32 %v310, %v286
      %v319 = vadd.f32 %v279, %v311
      %v320 = vadd.f32 %v280, %v312
      %v321 = vadd.f32 %v281, %v313
      %v322 = vadd.f32 %v282, %v314
      %v323 = vadd.f32 %v283, %v315
      %v324 = vadd.f32 %v284, %v316
      %v325 = vadd.f32 %v285, %v317
      %v326 = vadd.f32 %v286, %v318
      %v327 = vmul.f32 %v319, 0.7978846
      %v328 = vmul.f32 %v320, 0.7978846
      %v329 = vmul.f32 %v321, 0.7978846
      %v330 = vmul.f32 %v322, 0.7978846
      %v331 = vmul.f32 %v323, 0.7978846
      %v332 = vmul.f32 %v324, 0.7978846
      %v333 = vmul.f32 %v325, 0.7978846
      %v334 = vmul.f32 %v326, 0.7978846
      %v335 = vtanh.pop %v327
      %v336 = vtanh.pop %v328
      %v337 = vtanh.pop %v329
      %v338 = vtanh.pop %v330
      %v339 = vtanh.pop %v331
      %v340 = vtanh.pop %v332
      %v341 = vtanh.pop %v333
      %v342 = vtanh.pop %v334
      %v343 = vadd.f32 %v335, 1.0
      %v344 = vadd.f32 %v336, 1.0
      %v345 = vadd.f32 %v337, 1.0
      %v346 = vadd.f32 %v338, 1.0
      %v347 = vadd.f32 %v339, 1.0
      %v348 = vadd.f32 %v340, 1.0
      %v349 = vadd.f32 %v341, 1.0
      %v350 = vadd.f32 %v342, 1.0
      %v351 = vmul.f32 %v287, %v343
      %v352 = vmul.f32 %v288, %v344
      %v353 = vmul.f32 %v289, %v345
      %v354 = vmul.f32 %v290, %v346
      %v355 = vmul.f32 %v291, %v347
      %v356 = vmul.f32 %v292, %v348
      %v357 = vmul.f32 %v293, %v349
      %v358 = vmul.f32 %v294, %v350
      %v359 = vpack.c.bf16 %v353, %v351
      %v360 = vpack.c.bf16 %v354, %v352
      %v361 = vpack.c.bf16 %v357, %v355
      %v362 = vpack.c.bf16 %v358, %v356
      %v367 = vunpack.c.l.b16 %v359
      %v368 = vunpack.c.l.b16 %v360
      %v369 = vunpack.c.h.b16 %v359
      %v370 = vunpack.c.h.b16 %v360
      %v371 = vunpack.c.l.b16 %v361
      %v372 = vunpack.c.l.b16 %v362
      %v373 = vunpack.c.h.b16 %v361
      %v374 = vunpack.c.h.b16 %v362
      %v375 = vpack.c.b16 %v368, %v367
      %v376 = vpack.c.b16 %v370, %v369
      %v377 = vpack.c.b16 %v372, %v371
      %v378 = vpack.c.b16 %v374, %v373
      %383 = vst [vmem:[#allocation9] sm:$0xff] %v375
      %384 = vst [vmem:[#allocation9 + $0x8] sm:$0xff] %v376
      %385 = vst [vmem:[#allocation9 + $0x10] sm:$0xff] %v377
      %386 = vst [vmem:[#allocation9 + $0x18] sm:$0xff] %v378
    $region33: #{_xlnet_qa_forward_jit.14} parent=1 // pred_fallthru
      _
    // Predicated region
    $region34: #{_xlnet_qa_forward_jit.14} parent=1 // pred_check
      _
    $region35: #{_xlnet_qa_forward_jit.14} parent=1 // pred_check_branch
      %388 = sbr.rel (0) target = $region37
    $region36: #{_xlnet_qa_forward_jit.14} parent=1 // pred_region
      %s390 = ssub.s32 512, 512
      %391 = vsyncadd [#allocation5], %s390
      %s392 = sshll.u32 [#allocation9], 4
      %s393 = int_to_ptr.vmem [resolvable:$true] %s392
      %398 = dma.vmem_to_hbm [thread:$0]  %s393, 512, %s3, [#allocation5], 128, 128, 8
    $region37: #{_xlnet_qa_forward_jit.14} parent=1 // pred_fallthru
      _
    // Predicated region
    $region38: #{_xlnet_qa_forward_jit.14} parent=1 // pred_check
      _
    $region39: #{_xlnet_qa_forward_jit.14} parent=1 // pred_check_branch
      %400 = sbr.rel (0) target = $region41
    $region40: #{_xlnet_qa_forward_jit.14} parent=1 // pred_region
      %401 = dma.done [#allocation5], 512
    $region41: #{_xlnet_qa_forward_jit.14} parent=1 // pred_fallthru
      _
    %402 = vsyncpa [#allocation4], 1
    %403 = vsyncpa [#allocation7], 1
    %404 = vsyncpa [#allocation5], 1

// kernel: _xlnet_qa_forward_jit.15
$region0: #{_xlnet_qa_forward_jit.15}
  #allocation0 [shape = 'u32[]', space=smem, size = 0x4, offset = 0x4, fixed_abs, tag = 'smem constant byte address 0x4 - core index']
  #allocation1 [shape = 'u32[144,128]{1,0:T(1,128)}', space=vmem, size = 0x12000, scoped, tag = 'internal scratch']
  #allocation2 [shape = 'f32[32,128]{1,0:T(8,128)}', space=vmem, size = 0x4000, scoped, tag = 'scratch operand']
  %s0 = inlined_call_operand.hbm [shape: bf16[32,256], index: 0, kind: input, shape index: {}]
  %s1 = inlined_call_operand.hbm [shape: bf16[256,128], index: 1, kind: input, shape index: {}]
  %s2 = inlined_call_operand.hbm [shape: f32[1,128], index: 2, kind: input, shape index: {}]
  %s3 = inlined_call_operand.hbm [shape: bf16[32,128], index: 3, kind: input, shape index: {}]
  %s4 = inlined_call_operand.hbm [shape: f32[1,128], index: 4, kind: input, shape index: {}]
  %s5 = inlined_call_operand.hbm [shape: f32[1,128], index: 5, kind: input, shape index: {}]
  %s6 = inlined_call_operand.hbm [shape: bf16[32,128], index: 6, kind: output, shape index: {}]
  %s7 = sld [smem:[#allocation0]]
  $region66: #{_xlnet_qa_forward_jit.15} parent=0
    _
  %s9 = ssub.s32 1, %s7
  %s10 = scalar_select 0, %s9, %s7
  $region1: #{_xlnet_qa_forward_jit.15} parent=0
    #allocation3 [shape = 'u8[16384]{0}', space=vmem, size = 0x4000, scoped, tag = 'input window, operand 0, single buffered']
    #allocation4 [shape = 's32[1]{0}', space=sflag, size = 0x4, scoped, tag = 'scoped memory for _xlnet_qa_forward_jit.15']
    #allocation5 [shape = 's32[1]{0}', space=sflag, size = 0x4, scoped, tag = 'scoped memory for _xlnet_qa_forward_jit.15']
    #allocation6 [shape = 'u8[65536]{0}', space=vmem, size = 0x10000, scoped, tag = 'input window, operand 1, single buffered']
    #allocation7 [shape = 's32[1]{0}', space=sflag, size = 0x4, scoped, tag = 'scoped memory for _xlnet_qa_forward_jit.15']
    #allocation8 [shape = 'u8[512]{0}', space=vmem, size = 0x400, scoped, tag = 'input window, operand 2, single buffered']
    #allocation9 [shape = 'u8[8192]{0}', space=vmem, size = 0x2000, scoped, tag = 'input window, operand 3, single buffered']
    #allocation10 [shape = 's32[1]{0}', space=sflag, size = 0x4, scoped, tag = 'scoped memory for _xlnet_qa_forward_jit.15']
    #allocation11 [shape = 'u8[512]{0}', space=vmem, size = 0x400, scoped, tag = 'input window, operand 4, single buffered']
    #allocation12 [shape = 'u8[512]{0}', space=vmem, size = 0x400, scoped, tag = 'input window, operand 5, single buffered']
    #allocation13 [shape = 's32[1]{0}', space=sflag, size = 0x4, scoped, tag = 'scoped memory for _xlnet_qa_forward_jit.15']
    #allocation14 [shape = 'u8[8192]{0}', space=vmem, size = 0x2000, scoped, tag = 'output window, operand 0, single buffered']
    %11 = vsyncpa [#allocation4], 0
    %12 = vsyncpa [#allocation7], 0
    %13 = vsyncpa [#allocation10], 0
    %14 = vsyncpa [#allocation13], 0
    %15 = vsyncpa [#allocation5], 0
    // Predicated region
    $region2: #{_xlnet_qa_forward_jit.15} parent=1 // pred_check
      _
    $region3: #{_xlnet_qa_forward_jit.15} parent=1 // pred_check_branch
      %17 = sbr.rel (0) target = $region5
    $region4: #{_xlnet_qa_forward_jit.15} parent=1 // pred_region
      %s19 = ssub.s32 512, 512
      %20 = vsyncadd [#allocation4], %s19
      %s21 = sshll.u32 [#allocation3], 4
      %s22 = int_to_ptr.vmem [resolvable:$true] %s21
      %27 = dma.hbm_to_vmem [thread:$0]  %s0, 512, %s22, [#allocation4], 128, 128, 8
    $region5: #{_xlnet_qa_forward_jit.15} parent=1 // pred_fallthru
      _
    // Predicated region
    $region6: #{_xlnet_qa_forward_jit.15} parent=1 // pred_check
      _
    $region7: #{_xlnet_qa_forward_jit.15} parent=1 // pred_check_branch
      %29 = sbr.rel (0) target = $region9
    $region8: #{_xlnet_qa_forward_jit.15} parent=1 // pred_region
      %s31 = ssub.s32 2048, 2048
      %32 = vsyncadd [#allocation7], %s31
      %s33 = sshll.u32 [#allocation6], 4
      %s34 = int_to_ptr.vmem [resolvable:$true] %s33
      %39 = dma.hbm_to_vmem [thread:$0]  %s1, 2048, %s34, [#allocation7], 64, 64, 4
    $region9: #{_xlnet_qa_forward_jit.15} parent=1 // pred_fallthru
      _
    // Predicated region
    $region10: #{_xlnet_qa_forward_jit.15} parent=1 // pred_check
      _
    $region11: #{_xlnet_qa_forward_jit.15} parent=1 // pred_check_branch
      %41 = sbr.rel (0) target = $region13
    $region12: #{_xlnet_qa_forward_jit.15} parent=1 // pred_region
      %s43 = ssub.s32 16, 16
      %44 = vsyncadd [#allocation7], %s43
      %s46 = sshll.u32 [#allocation8], 4
      %s47 = int_to_ptr.vmem [resolvable:$true] %s46
      %49 = dma.hbm_to_vmem [thread:$0]  %s2, 16, %s47, [#allocation7]
    $region13: #{_xlnet_qa_forward_jit.15} parent=1 // pred_fallthru
      _
    // Predicated region
    $region14: #{_xlnet_qa_forward_jit.15} parent=1 // pred_check
      _
    $region15: #{_xlnet_qa_forward_jit.15} parent=1 // pred_check_branch
      %51 = sbr.rel (0) target = $region17
    $region16: #{_xlnet_qa_forward_jit.15} parent=1 // pred_region
      %s53 = ssub.s32 256, 256
      %54 = vsyncadd [#allocation10], %s53
      %s55 = sshll.u32 [#allocation9], 4
      %s56 = int_to_ptr.vmem [resolvable:$true] %s55
      %61 = dma.hbm_to_vmem [thread:$0]  %s3, 256, %s56, [#allocation10], 64, 64, 4
    $region17: #{_xlnet_qa_forward_jit.15} parent=1 // pred_fallthru
      _
    // Predicated region
    $region18: #{_xlnet_qa_forward_jit.15} parent=1 // pred_check
      _
    $region19: #{_xlnet_qa_forward_jit.15} parent=1 // pred_check_branch
      %63 = sbr.rel (0) target = $region21
    $region20: #{_xlnet_qa_forward_jit.15} parent=1 // pred_region
      %s65 = ssub.s32 16, 16
      %66 = vsyncadd [#allocation10], %s65
      %s68 = sshll.u32 [#allocation11], 4
      %s69 = int_to_ptr.vmem [resolvable:$true] %s68
      %71 = dma.hbm_to_vmem [thread:$0]  %s4, 16, %s69, [#allocation10]
    $region21: #{_xlnet_qa_forward_jit.15} parent=1 // pred_fallthru
      _
    // Predicated region
    $region22: #{_xlnet_qa_forward_jit.15} parent=1 // pred_check
      _
    $region23: #{_xlnet_qa_forward_jit.15} parent=1 // pred_check_branch
      %73 = sbr.rel (0) target = $region25
    $region24: #{_xlnet_qa_forward_jit.15} parent=1 // pred_region
      %s75 = ssub.s32 16, 16
      %76 = vsyncadd [#allocation13], %s75
      %s78 = sshll.u32 [#allocation12], 4
      %s79 = int_to_ptr.vmem [resolvable:$true] %s78
      %81 = dma.hbm_to_vmem [thread:$0]  %s5, 16, %s79, [#allocation13]
    $region25: #{_xlnet_qa_forward_jit.15} parent=1 // pred_fallthru
      _
    // Predicated region
    $region26: #{_xlnet_qa_forward_jit.15} parent=1 // pred_check
      _
    $region27: #{_xlnet_qa_forward_jit.15} parent=1 // pred_check_branch
      %83 = sbr.rel (0) target = $region29
    $region28: #{_xlnet_qa_forward_jit.15} parent=1 // pred_region
      %84 = dma.done [#allocation4], 512
    $region29: #{_xlnet_qa_forward_jit.15} parent=1 // pred_fallthru
      _
    // Predicated region
    $region30: #{_xlnet_qa_forward_jit.15} parent=1 // pred_check
      _
    $region31: #{_xlnet_qa_forward_jit.15} parent=1 // pred_check_branch
      %86 = sbr.rel (0) target = $region33
    $region32: #{_xlnet_qa_forward_jit.15} parent=1 // pred_region
      %87 = dma.done [#allocation7], 2048
    $region33: #{_xlnet_qa_forward_jit.15} parent=1 // pred_fallthru
      _
    // Predicated region
    $region34: #{_xlnet_qa_forward_jit.15} parent=1 // pred_check
      _
    $region35: #{_xlnet_qa_forward_jit.15} parent=1 // pred_check_branch
      %89 = sbr.rel (0) target = $region37
    $region36: #{_xlnet_qa_forward_jit.15} parent=1 // pred_region
      %90 = dma.done [#allocation7], 16
    $region37: #{_xlnet_qa_forward_jit.15} parent=1 // pred_fallthru
      _
    // Predicated region
    $region38: #{_xlnet_qa_forward_jit.15} parent=1 // pred_check
      _
    $region39: #{_xlnet_qa_forward_jit.15} parent=1 // pred_check_branch
      %92 = sbr.rel (0) target = $region41
    $region40: #{_xlnet_qa_forward_jit.15} parent=1 // pred_region
      %93 = dma.done [#allocation10], 256
    $region41: #{_xlnet_qa_forward_jit.15} parent=1 // pred_fallthru
      _
    // Predicated region
    $region42: #{_xlnet_qa_forward_jit.15} parent=1 // pred_check
      _
    $region43: #{_xlnet_qa_forward_jit.15} parent=1 // pred_check_branch
      %95 = sbr.rel (0) target = $region45
    $region44: #{_xlnet_qa_forward_jit.15} parent=1 // pred_region
      %96 = dma.done [#allocation10], 16
    $region45: #{_xlnet_qa_forward_jit.15} parent=1 // pred_fallthru
      _
    // Predicated region
    $region46: #{_xlnet_qa_forward_jit.15} parent=1 // pred_check
      _
    $region47: #{_xlnet_qa_forward_jit.15} parent=1 // pred_check_branch
      %98 = sbr.rel (0) target = $region49
    $region48: #{_xlnet_qa_forward_jit.15} parent=1 // pred_region
      %99 = dma.done [#allocation13], 16
    $region49: #{_xlnet_qa_forward_jit.15} parent=1 // pred_fallthru
      _
    %p101 = scmp.eq.s32.totalorder 0, 0
    // Predicated region
    $region50: #{_xlnet_qa_forward_jit.15} parent=1 // pred_check
      %p102 = pneg %p101
    $region51: #{_xlnet_qa_forward_jit.15} parent=1 // pred_check_branch
      %104 = sbr.rel (%p102) target = $region53
    $region52: #{_xlnet_qa_forward_jit.15} parent=1 // pred_region
      %105 = vst [vmem:[#allocation2] sm:$0xff] 0.0
      %106 = vst [vmem:[#allocation2 + $0x8] sm:$0xff] 0.0
      %107 = vst [vmem:[#allocation2 + $0x10] sm:$0xff] 0.0
      %108 = vst [vmem:[#allocation2 + $0x18] sm:$0xff] 0.0
    $region53: #{_xlnet_qa_forward_jit.15} parent=1 // pred_fallthru
      _
    %v109 = vld [vmem:[#allocation2] sm:$0xff]
    %v110 = vld [vmem:[#allocation2 + $0x8] sm:$0xff]
    %v111 = vld [vmem:[#allocation2 + $0x10] sm:$0xff]
    %v112 = vld [vmem:[#allocation2 + $0x18] sm:$0xff]
    %v113 = vld [vmem:[#allocation3] sm:$0xff]
    %v114 = vld [vmem:[#allocation3 + $0x8] sm:$0xff]
    %v115 = vld [vmem:[#allocation3 + $0x10] sm:$0xff]
    %v116 = vld [vmem:[#allocation3 + $0x18] sm:$0xff]
    %v117 = vld [vmem:[#allocation6] sm:$0xf]
    %v118 = vld [vmem:[#allocation6 + $0x4] sm:$0xf]
    %v119 = vld [vmem:[#allocation6 + $0x8] sm:$0xf]
    %v120 = vld [vmem:[#allocation6 + $0xc] sm:$0xf]
    %v121 = vld [vmem:[#allocation6 + $0x10] sm:$0xf]
    %v122 = vld [vmem:[#allocation6 + $0x14] sm:$0xf]
    %v123 = vld [vmem:[#allocation6 + $0x18] sm:$0xf]
    %v124 = vld [vmem:[#allocation6 + $0x1c] sm:$0xf]
    %v125 = vld [vmem:[#allocation6 + $0x20] sm:$0xf]
    %v126 = vld [vmem:[#allocation6 + $0x24] sm:$0xf]
    %v127 = vld [vmem:[#allocation6 + $0x28] sm:$0xf]
    %v128 = vld [vmem:[#allocation6 + $0x2c] sm:$0xf]
    %v129 = vld [vmem:[#allocation6 + $0x30] sm:$0xf]
    %v130 = vld [vmem:[#allocation6 + $0x34] sm:$0xf]
    %v131 = vld [vmem:[#allocation6 + $0x38] sm:$0xf]
    %v132 = vld [vmem:[#allocation6 + $0x3c] sm:$0xf]
    %v133 = vld [vmem:[#allocation6 + $0x40] sm:$0xf]
    %v134 = vld [vmem:[#allocation6 + $0x44] sm:$0xf]
    %v135 = vld [vmem:[#allocation6 + $0x48] sm:$0xf]
    %v136 = vld [vmem:[#allocation6 + $0x4c] sm:$0xf]
    %v137 = vld [vmem:[#allocation6 + $0x50] sm:$0xf]
    %v138 = vld [vmem:[#allocation6 + $0x54] sm:$0xf]
    %v139 = vld [vmem:[#allocation6 + $0x58] sm:$0xf]
    %v140 = vld [vmem:[#allocation6 + $0x5c] sm:$0xf]
    %v141 = vld [vmem:[#allocation6 + $0x60] sm:$0xf]
    %v142 = vld [vmem:[#allocation6 + $0x64] sm:$0xf]
    %v143 = vld [vmem:[#allocation6 + $0x68] sm:$0xf]
    %v144 = vld [vmem:[#allocation6 + $0x6c] sm:$0xf]
    %v145 = vld [vmem:[#allocation6 + $0x70] sm:$0xf]
    %v146 = vld [vmem:[#allocation6 + $0x74] sm:$0xf]
    %v147 = vld [vmem:[#allocation6 + $0x78] sm:$0xf]
    %v148 = vld [vmem:[#allocation6 + $0x7c] sm:$0xf]
    %v153 = vunpack.c.l.b16 %v113
    %v154 = vunpack.c.h.b16 %v113
    %v155 = vunpack.c.l.b16 %v114
    %v156 = vunpack.c.h.b16 %v114
    %v157 = vunpack.c.l.b16 %v115
    %v158 = vunpack.c.h.b16 %v115
    %v159 = vunpack.c.l.b16 %v116
    %v160 = vunpack.c.h.b16 %v116
    %v161 = vpack.c.b16 %v155, %v153
    %v162 = vpack.c.b16 %v156, %v154
    %v163 = vpack.c.b16 %v159, %v157
    %v164 = vpack.c.b16 %v160, %v158
    %v201 = vunpack.c.l.b16 %v117
    %v202 = vunpack.c.l.b16 %v118
    %v203 = vunpack.c.l.b16 %v119
    %v204 = vunpack.c.l.b16 %v120
    %v205 = vunpack.c.l.b16 %v121
    %v206 = vunpack.c.l.b16 %v122
    %v207 = vunpack.c.l.b16 %v123
    %v208 = vunpack.c.l.b16 %v124
    %v209 = vunpack.c.l.b16 %v125
    %v210 = vunpack.c.l.b16 %v126
    %v211 = vunpack.c.l.b16 %v127
    %v212 = vunpack.c.l.b16 %v128
    %v213 = vunpack.c.l.b16 %v129
    %v214 = vunpack.c.l.b16 %v130
    %v215 = vunpack.c.l.b16 %v131
    %v216 = vunpack.c.l.b16 %v132
    %v217 = vunpack.c.l.b16 %v133
    %v218 = vunpack.c.l.b16 %v134
    %v219 = vunpack.c.l.b16 %v135
    %v220 = vunpack.c.l.b16 %v136
    %v221 = vunpack.c.l.b16 %v137
    %v222 = vunpack.c.l.b16 %v138
    %v223 = vunpack.c.l.b16 %v139
    %v224 = vunpack.c.l.b16 %v140
    %v225 = vunpack.c.l.b16 %v141
    %v226 = vunpack.c.l.b16 %v142
    %v227 = vunpack.c.l.b16 %v143
    %v228 = vunpack.c.l.b16 %v144
    %v229 = vunpack.c.l.b16 %v145
    %v230 = vunpack.c.l.b16 %v146
    %v231 = vunpack.c.l.b16 %v147
    %v232 = vunpack.c.l.b16 %v148
    %v233 = vpack.c.b16 %v202, %v201
    %v234 = vpack.c.b16 %v204, %v203
    %v235 = vpack.c.b16 %v206, %v205
    %v236 = vpack.c.b16 %v208, %v207
    %v237 = vpack.c.b16 %v210, %v209
    %v238 = vpack.c.b16 %v212, %v211
    %v239 = vpack.c.b16 %v214, %v213
    %v240 = vpack.c.b16 %v216, %v215
    %v241 = vpack.c.b16 %v218, %v217
    %v242 = vpack.c.b16 %v220, %v219
    %v243 = vpack.c.b16 %v222, %v221
    %v244 = vpack.c.b16 %v224, %v223
    %v245 = vpack.c.b16 %v226, %v225
    %v246 = vpack.c.b16 %v228, %v227
    %v247 = vpack.c.b16 %v230, %v229
    %v248 = vpack.c.b16 %v232, %v231
    %265 = vmatprep.subr.bf16.mxu0 0
    %266 = vmatpush1.bf16.msra.mxu0 %v233
    %267 = vmatprep.subr.bf16.mxu0 0
    %268 = vmatpush1.bf16.msra.mxu0 %v234
    %269 = vmatprep.subr.bf16.mxu0 0
    %270 = vmatpush1.bf16.msra.mxu0 %v235
    %271 = vmatprep.subr.bf16.mxu0 0
    %272 = vmatpush1.bf16.msra.mxu0 %v236
    %273 = vmatprep.subr.bf16.mxu0 0
    %274 = vmatpush1.bf16.msra.mxu0 %v237
    %275 = vmatprep.subr.bf16.mxu0 0
    %276 = vmatpush1.bf16.msra.mxu0 %v238
    %277 = vmatprep.subr.bf16.mxu0 0
    %278 = vmatpush1.bf16.msra.mxu0 %v239
    %279 = vmatprep.subr.bf16.mxu0 0
    %280 = vmatpush1.bf16.msra.mxu0 %v240
    %281 = vmatprep.subr.bf16.mxu0 0
    %282 = vmatpush1.bf16.msra.mxu0 %v241
    %283 = vmatprep.subr.bf16.mxu0 0
    %284 = vmatpush1.bf16.msra.mxu0 %v242
    %285 = vmatprep.subr.bf16.mxu0 0
    %286 = vmatpush1.bf16.msra.mxu0 %v243
    %287 = vmatprep.subr.bf16.mxu0 0
    %288 = vmatpush1.bf16.msra.mxu0 %v244
    %289 = vmatprep.subr.bf16.mxu0 0
    %290 = vmatpush1.bf16.msra.mxu0 %v245
    %291 = vmatprep.subr.bf16.mxu0 0
    %292 = vmatpush1.bf16.msra.mxu0 %v246
    %293 = vmatprep.subr.bf16.mxu0 0
    %294 = vmatpush1.bf16.msra.mxu0 %v247
    %295 = vmatprep.subr.bf16.mxu0 0
    %296 = vmatpush1.bf16.msra.mxu0 %v248
    %297 = vmatprep.mubr.bf16.mxu0 %v162
    %298 = vmatmul.mubr.bf16.gmra.mrb[0].mxu0 %v161
    %v299 = vpop.f32.mrb[0].mxu0
    %v300 = vadd.f32 0.0, %v299
    %v301 = vpop.f32.mrb[0].mxu0
    %v302 = vpop.f32.mrb[0].mxu0
    %v303 = vadd.f32 0.0, %v302
    %v304 = vpop.f32.mrb[0].mxu0
    %305 = vmatprep.mubr.bf16.mxu0 %v164
    %306 = vmatmul.mubr.bf16.gmra.mrb[0].mxu0 %v163
    %v307 = vpop.f32.mrb[0].mxu0
    %v308 = vadd.f32 0.0, %v307
    %v309 = vpop.f32.mrb[0].mxu0
    %v310 = vpop.f32.mrb[0].mxu0
    %v311 = vadd.f32 0.0, %v310
    %v312 = vpop.f32.mrb[0].mxu0
    %313 = vdwg.mxu0
    %v314 = vadd.f32 %v109, %v300
    %v315 = vadd.f32 %v110, %v303
    %v316 = vadd.f32 %v111, %v308
    %v317 = vadd.f32 %v112, %v311
    %318 = vst [vmem:[#allocation2] sm:$0xff] %v314
    %319 = vst [vmem:[#allocation2 + $0x8] sm:$0xff] %v315
    %320 = vst [vmem:[#allocation2 + $0x10] sm:$0xff] %v316
    %321 = vst [vmem:[#allocation2 + $0x18] sm:$0xff] %v317
    // Predicated region
    $region54: #{_xlnet_qa_forward_jit.15} parent=1 // pred_check
      %p322 = pneg %p101
    $region55: #{_xlnet_qa_forward_jit.15} parent=1 // pred_check_branch
      %324 = sbr.rel (%p322) target = $region57
    $region56: #{_xlnet_qa_forward_jit.15} parent=1 // pred_region
      %v325 = vld [vmem:[#allocation2] sm:$0xff]
      %v326 = vld [vmem:[#allocation2 + $0x8] sm:$0xff]
      %v327 = vld [vmem:[#allocation2 + $0x10] sm:$0xff]
      %v328 = vld [vmem:[#allocation2 + $0x18] sm:$0xff]
      %v329 = vld [vmem:[#allocation8] sm:$0x1]
      %v331 = vlaneseq
      %v332 = vshrl.u32 %v331, 7
      %v333 = vsub.s32 0, %v332
      %v334 = vrot.slane %v329, %v333
      %v336 = vadd.f32 %v325, %v334
      %v337 = vadd.f32 %v326, %v334
      %v338 = vadd.f32 %v327, %v334
      %v339 = vadd.f32 %v328, %v334
      %v340 = vld [vmem:[#allocation9] sm:$0xf]
      %v341 = vld [vmem:[#allocation9 + $0x4] sm:$0xf]
      %v342 = vld [vmem:[#allocation9 + $0x8] sm:$0xf]
      %v343 = vld [vmem:[#allocation9 + $0xc] sm:$0xf]
      %v344 = vunpack.c.l.bf16 %v340
      %v345 = vunpack.c.l.bf16 %v341
      %v346 = vunpack.c.l.bf16 %v342
      %v347 = vunpack.c.l.bf16 %v343
      %v348 = vadd.f32 %v336, %v344
      %v349 = vadd.f32 %v337, %v345
      %v350 = vadd.f32 %v338, %v346
      %v351 = vadd.f32 %v339, %v347
      %352 = vadd.xlane.f32.xlu0 %v348
      %v353 = vpop.xlane.xlu0 %352
      %354 = vadd.xlane.f32.xlu0 %v349
      %v355 = vpop.xlane.xlu0 %354
      %356 = vadd.xlane.f32.xlu0 %v350
      %v357 = vpop.xlane.xlu0 %356
      %358 = vadd.xlane.f32.xlu0 %v351
      %v359 = vpop.xlane.xlu0 %358
      %v360 = vrcp.pop 128.0
      %v361 = vmul.f32 %v353, %v360
      %v362 = vmul.f32 %v355, %v360
      %v363 = vmul.f32 %v357, %v360
      %v364 = vmul.f32 %v359, %v360
      %v365 = vsub.f32 %v348, %v361
      %v366 = vsub.f32 %v349, %v362
      %v367 = vsub.f32 %v350, %v363
      %v368 = vsub.f32 %v351, %v364
      %v369 = vmul.f32 %v365, %v365
      %v370 = vmul.f32 %v366, %v366
      %v371 = vmul.f32 %v367, %v367
      %v372 = vmul.f32 %v368, %v368
      %373 = vadd.xlane.f32.xlu0 %v369
      %v374 = vpop.xlane.xlu0 %373
      %375 = vadd.xlane.f32.xlu0 %v370
      %v376 = vpop.xlane.xlu0 %375
      %377 = vadd.xlane.f32.xlu0 %v371
      %v378 = vpop.xlane.xlu0 %377
      %379 = vadd.xlane.f32.xlu0 %v372
      %v380 = vpop.xlane.xlu0 %379
      %v381 = vmul.f32 %v374, %v360
      %v382 = vmul.f32 %v376, %v360
      %v383 = vmul.f32 %v378, %v360
      %v384 = vmul.f32 %v380, %v360
      %v385 = vadd.f32 %v381, 1e-12
      %v386 = vadd.f32 %v382, 1e-12
      %v387 = vadd.f32 %v383, 1e-12
      %v388 = vadd.f32 %v384, 1e-12
      %v389 = vrsqrt.pop %v385
      %v390 = vrsqrt.pop %v386
      %v391 = vrsqrt.pop %v387
      %v392 = vrsqrt.pop %v388
      %v393 = vmul.f32 %v365, %v389
      %v394 = vmul.f32 %v366, %v390
      %v395 = vmul.f32 %v367, %v391
      %v396 = vmul.f32 %v368, %v392
      %v397 = vld [vmem:[#allocation11] sm:$0x1]
      %v399 = vlaneseq
      %v400 = vshrl.u32 %v399, 7
      %v401 = vsub.s32 0, %v400
      %v402 = vrot.slane %v397, %v401
      %v404 = vmul.f32 %v393, %v402
      %v405 = vmul.f32 %v394, %v402
      %v406 = vmul.f32 %v395, %v402
      %v407 = vmul.f32 %v396, %v402
      %v408 = vld [vmem:[#allocation12] sm:$0x1]
      %v410 = vlaneseq
      %v411 = vshrl.u32 %v410, 7
      %v412 = vsub.s32 0, %v411
      %v413 = vrot.slane %v408, %v412
      %v415 = vadd.f32 %v404, %v413
      %v416 = vadd.f32 %v405, %v413
      %v417 = vadd.f32 %v406, %v413
      %v418 = vadd.f32 %v407, %v413
      %v419 = vpack.c.bf16 %v416, %v415
      %v420 = vpack.c.bf16 %v418, %v417
      %v423 = vunpack.c.l.b16 %v419
      %v424 = vunpack.c.h.b16 %v419
      %v425 = vunpack.c.l.b16 %v420
      %v426 = vunpack.c.h.b16 %v420
      %v427 = vpack.c.b16 %v423, %v423
      %v428 = vpack.c.b16 %v424, %v424
      %v429 = vpack.c.b16 %v425, %v425
      %v430 = vpack.c.b16 %v426, %v426
      %435 = vst [vmem:[#allocation14] sm:$0xf] %v427
      %436 = vst [vmem:[#allocation14 + $0x4] sm:$0xf] %v428
      %437 = vst [vmem:[#allocation14 + $0x8] sm:$0xf] %v429
      %438 = vst [vmem:[#allocation14 + $0xc] sm:$0xf] %v430
    $region57: #{_xlnet_qa_forward_jit.15} parent=1 // pred_fallthru
      _
    // Predicated region
    $region58: #{_xlnet_qa_forward_jit.15} parent=1 // pred_check
      _
    $region59: #{_xlnet_qa_forward_jit.15} parent=1 // pred_check_branch
      %440 = sbr.rel (0) target = $region61
    $region60: #{_xlnet_qa_forward_jit.15} parent=1 // pred_region
      %s442 = ssub.s32 256, 256
      %443 = vsyncadd [#allocation5], %s442
      %s444 = sshll.u32 [#allocation14], 4
      %s445 = int_to_ptr.vmem [resolvable:$true] %s444
      %450 = dma.vmem_to_hbm [thread:$0]  %s445, 256, %s6, [#allocation5], 64, 64, 4
    $region61: #{_xlnet_qa_forward_jit.15} parent=1 // pred_fallthru
      _
    // Predicated region
    $region62: #{_xlnet_qa_forward_jit.15} parent=1 // pred_check
      _
    $region63: #{_xlnet_qa_forward_jit.15} parent=1 // pred_check_branch
      %452 = sbr.rel (0) target = $region65
    $region64: #{_xlnet_qa_forward_jit.15} parent=1 // pred_region
      %453 = dma.done [#allocation5], 256
    $region65: #{_xlnet_qa_forward_jit.15} parent=1 // pred_fallthru
      _
    %454 = vsyncpa [#allocation4], 1
    %455 = vsyncpa [#allocation7], 1
    %456 = vsyncpa [#allocation10], 1
    %457 = vsyncpa [#allocation13], 1
    %458 = vsyncpa [#allocation5], 1

// kernel: _xlnet_qa_forward_jit.13
$region0: #{_xlnet_qa_forward_jit.13}
  #allocation0 [shape = 'u32[]', space=smem, size = 0x4, offset = 0x4, fixed_abs, tag = 'smem constant byte address 0x4 - core index']
  #allocation1 [shape = 'u32[144,128]{1,0:T(1,128)}', space=vmem, size = 0x12000, scoped, tag = 'internal scratch']
  #allocation2 [shape = 'f32[16,128]{1,0:T(8,128)}', space=vmem, size = 0x2000, scoped, tag = 'scratch operand']
  %s0 = inlined_call_operand.hbm [shape: bf16[32,384], index: 0, kind: input, shape index: {}, may-alias: {0,1,2}]
  %s1 = inlined_call_operand.hbm [shape: bf16[32,384], index: 1, kind: input, shape index: {}, may-alias: {0,1,2}]
  %s2 = inlined_call_operand.hbm [shape: bf16[32,384], index: 2, kind: input, shape index: {}, may-alias: {0,1,2}]
  %s3 = inlined_call_operand.hbm [shape: bf16[32,128], index: 3, kind: input, shape index: {}]
  %s4 = inlined_call_operand.hbm [shape: f32[1,1,128], index: 4, kind: input, shape index: {}]
  %s5 = inlined_call_operand.hbm [shape: f32[1,1,128], index: 5, kind: input, shape index: {}]
  %s6 = inlined_call_operand.hbm [shape: f32[1,1,128], index: 6, kind: input, shape index: {}]
  %s7 = inlined_call_operand.hbm [shape: f32[1,2,128], index: 7, kind: input, shape index: {}]
  %s8 = inlined_call_operand.hbm [shape: f32[2,1,16], index: 8, kind: input, shape index: {}]
  %s9 = inlined_call_operand.hbm [shape: f32[2,16,1], index: 9, kind: input, shape index: {}]
  %s10 = inlined_call_operand.hbm [shape: f32[2,1,16], index: 10, kind: input, shape index: {}]
  %s11 = inlined_call_operand.hbm [shape: bf16[128,128], index: 11, kind: input, shape index: {}]
  %s12 = inlined_call_operand.hbm [shape: bf16[32,128], index: 12, kind: input, shape index: {}]
  %s13 = inlined_call_operand.hbm [shape: f32[1,128], index: 13, kind: input, shape index: {}]
  %s14 = inlined_call_operand.hbm [shape: f32[1,128], index: 14, kind: input, shape index: {}]
  %s15 = inlined_call_operand.hbm [shape: bf16[32,128], index: 15, kind: output, shape index: {}]
  %s16 = sld [smem:[#allocation0]]
  $region161: #{_xlnet_qa_forward_jit.13} parent=0
    _
  %s18 = ssub.s32 1, %s16
  %s19 = scalar_select 0, %s18, %s16
  $region1: #{_xlnet_qa_forward_jit.13} parent=0
    #allocation3 [shape = 'u8[8192]{0}', space=vmem, size = 0x2000, scoped, tag = 'input window, operand 0']
    #allocation4 [shape = 's32[2]{0}', space=sflag, size = 0x8, scoped, tag = 'scoped memory for _xlnet_qa_forward_jit.13']
    #allocation5 [shape = 's32[2]{0}', space=sflag, size = 0x8, scoped, tag = 'scoped memory for _xlnet_qa_forward_jit.13']
    #allocation6 [shape = 'u8[8192]{0}', space=vmem, size = 0x2000, scoped, tag = 'input window, operand 1']
    #allocation7 [shape = 's32[2]{0}', space=sflag, size = 0x8, scoped, tag = 'scoped memory for _xlnet_qa_forward_jit.13']
    #allocation8 [shape = 'u8[8192]{0}', space=vmem, size = 0x2000, scoped, tag = 'input window, operand 2']
    #allocation9 [shape = 'u8[8192]{0}', space=vmem, size = 0x2000, scoped, tag = 'input window, operand 3, single buffered']
    #allocation10 [shape = 's32[1]{0}', space=sflag, size = 0x4, scoped, tag = 'scoped memory for _xlnet_qa_forward_jit.13']
    #allocation11 [shape = 'u8[512]{0}', space=vmem, size = 0x400, scoped, tag = 'input window, operand 4, single buffered']
    #allocation12 [shape = 'u8[512]{0}', space=vmem, size = 0x400, scoped, tag = 'input window, operand 5, single buffered']
    #allocation13 [shape = 's32[1]{0}', space=sflag, size = 0x4, scoped, tag = 'scoped memory for _xlnet_qa_forward_jit.13']
    #allocation14 [shape = 'u8[512]{0}', space=vmem, size = 0x400, scoped, tag = 'input window, operand 6, single buffered']
    #allocation15 [shape = 'u8[1024]{0}', space=vmem, size = 0x400, scoped, tag = 'input window, operand 7, single buffered']
    #allocation16 [shape = 's32[1]{0}', space=sflag, size = 0x4, scoped, tag = 'scoped memory for _xlnet_qa_forward_jit.13']
    #allocation17 [shape = 'u8[1024]{0}', space=vmem, size = 0x400, scoped, tag = 'input window, operand 8']
    #allocation18 [shape = 'u8[16384]{0}', space=vmem, size = 0x4000, scoped, tag = 'input window, operand 9']
    #allocation19 [shape = 'u8[1024]{0}', space=vmem, size = 0x400, scoped, tag = 'input window, operand 10']
    #allocation20 [shape = 'u8[32768]{0}', space=vmem, size = 0x8000, scoped, tag = 'input window, operand 11, single buffered']
    #allocation21 [shape = 'u8[8192]{0}', space=vmem, size = 0x2000, scoped, tag = 'input window, operand 12']
    #allocation22 [shape = 'u8[512]{0}', space=vmem, size = 0x400, scoped, tag = 'input window, operand 13, single buffered']
    #allocation23 [shape = 'u8[512]{0}', space=vmem, size = 0x400, scoped, tag = 'input window, operand 14, single buffered']
    #allocation24 [shape = 'u8[8192]{0}', space=vmem, size = 0x2000, scoped, tag = 'output window, operand 0']
    %20 = vsyncpa [#allocation4], 0
    %s21 = scalar_lea.sflag [#allocation4], 1
    %22 = vsyncpa %s21, 0
    %23 = vsyncpa [#allocation7], 0
    %s24 = scalar_lea.sflag [#allocation7], 1
    %25 = vsyncpa %s24, 0
    %26 = vsyncpa [#allocation10], 0
    %27 = vsyncpa [#allocation13], 0
    %28 = vsyncpa [#allocation16], 0
    %29 = vsyncpa [#allocation5], 0
    %s30 = scalar_lea.sflag [#allocation5], 1
    %31 = vsyncpa %s30, 0
    loop: start=0, step=1, limit=4
    $region2: #{_xlnet_qa_forward_jit.13} parent=1 // loop_pre_header
      _
    $region3: #{_xlnet_qa_forward_jit.13} parent=1 // loop_header
      %s33 = sphi 0, %s37
      %p34 = scmp.ge.s32.totalorder %s33, 4
      %s40 = sphi 0, %s52
      %s41 = sphi 0, %s48
      %s42 = sphi 0, %s40
      %s43 = sphi 0, %s41
      %s44 = sphi 0, %s42
      %s45 = sphi 0, %s43
      %s57 = sphi 0, %s59
      %s60 = sphi 0, %s57
      %s61 = sphi 0, %s60
      %s77 = sphi 0, %s61
      %s87 = sphi 0, %s89
      %s90 = sphi 0, %s87
      %s91 = sphi 0, %s90
      %s107 = sphi 0, %s91
      %s117 = sphi 0, %s119
      %s120 = sphi 0, %s117
      %s121 = sphi 0, %s120
      %s137 = sphi 0, %s121
      %s143 = sphi 0, %s145
      %s146 = sphi 0, %s143
      %s147 = sphi 0, %s146
      %s163 = sphi 0, %s147
      %s169 = sphi 0, %s171
      %s172 = sphi 0, %s169
      %s173 = sphi 0, %s172
      %s189 = sphi 0, %s173
      %s195 = sphi 0, %s197
      %s198 = sphi 0, %s195
      %s199 = sphi 0, %s198
      %s215 = sphi 0, %s199
      %s221 = sphi 0, %s223
      %s224 = sphi 0, %s221
      %s225 = sphi 0, %s224
      %s241 = sphi 0, %s225
      %s247 = sphi 0, %s249
      %s250 = sphi 0, %s247
      %s251 = sphi 0, %s250
      %s267 = sphi 0, %s251
      %s273 = sphi 0, %s275
      %s276 = sphi 0, %s273
      %s277 = sphi 0, %s276
      %s293 = sphi 0, %s277
      %s299 = sphi 0, %s301
      %s302 = sphi 0, %s299
      %s303 = sphi 0, %s302
      %s319 = sphi 0, %s303
      %s325 = sphi 0, %s327
      %s328 = sphi 0, %s325
      %s329 = sphi 0, %s328
      %s345 = sphi 0, %s329
      %s351 = sphi 0, %s353
      %s354 = sphi 0, %s351
      %s355 = sphi 0, %s354
      %s371 = sphi 0, %s355
      %s377 = sphi 0, %s379
      %s380 = sphi 0, %s377
      %s381 = sphi 0, %s380
      %s397 = sphi 0, %s381
      %s401 = sphi 0, %s401
      %s403 = sphi 0, %s401
      %s404 = sphi 0, %s403
      %s418 = sphi 0, %s404
      %s422 = sphi 0, %s422
      %s424 = sphi 0, %s422
      %s425 = sphi 0, %s424
      %s439 = sphi 0, %s425
      %s445 = sphi 0, %s447
      %s448 = sphi 0, %s445
      %s449 = sphi 0, %s448
      %s465 = sphi 0, %s449
    $region4: #{_xlnet_qa_forward_jit.13} parent=1 // loop_header_branch
      %36 = sbr.rel (%p34) target = $region8
    $region5: #{_xlnet_qa_forward_jit.13} parent=1 // loop_body
      %s38 = ssub.s32 %s33, 1
      %s39 = ssub.s32 %s33, 2
      %s46 = sadd.s32 1, %s41
      %p47 = scmp.ge.s32.totalorder %s46, 1
      %s48 = scalar_select %p47, 0, %s46
      %s49 = sadd.s32 1, %s40
      %s50 = scalar_select %p47, %s49, %s40
      %p51 = scmp.ge.s32.totalorder %s50, 2
      %s52 = scalar_select %p51, 0, %s50
      %s53 = ssub.s32 %s40, %s52
      %s54 = ssub.s32 %s41, %s48
      %s55 = sor.u32 %s53, %s54
      %p56 = scmp.eq.s32.totalorder %s55, 0
      %s58 = sadd.s32 %s57, 1
      %s59 = scalar_select %p56, %s57, %s58
      %p62 = pneg %p56
      %p63 = scmp.eq.s32.totalorder %s33, 1
      %p64 = por %p62, %p63
      %p65 = scmp.ne.s32.totalorder %s57, %s60
      %p66 = scmp.eq.s32.totalorder %s33, 0
      %p67 = por %p65, %p66
      %p68 = scmp.ne.s32.totalorder %s57, %s60
      %p69 = scmp.eq.s32.totalorder %s38, 1
      %p70 = por %p68, %p69
      %p71 = scmp.ne.s32.totalorder %s60, %s61
      %p72 = scmp.eq.s32.totalorder %s38, 0
      %p73 = por %p71, %p72
      %p74 = scmp.ne.s32.totalorder %s60, %s61
      %p75 = scmp.eq.s32.totalorder %s39, 1
      %p76 = por %p74, %p75
      %p78 = scmp.ne.s32.totalorder %s61, %s77
      %p79 = scmp.eq.s32.totalorder %s39, 0
      %p80 = por %p78, %p79
      %s81 = sadd.s32 %s41, 1
      %s82 = sadd.s32 %s48, 1
      %s83 = ssub.s32 %s40, %s52
      %s84 = ssub.s32 %s81, %s82
      %s85 = sor.u32 %s83, %s84
      %p86 = scmp.eq.s32.totalorder %s85, 0
      %s88 = sadd.s32 %s87, 1
      %s89 = scalar_select %p86, %s87, %s88
      %p92 = pneg %p86
      %p93 = scmp.eq.s32.totalorder %s33, 1
      %p94 = por %p92, %p93
      %p95 = scmp.ne.s32.totalorder %s87, %s90
      %p96 = scmp.eq.s32.totalorder %s33, 0
      %p97 = por %p95, %p96
      %p98 = scmp.ne.s32.totalorder %s87, %s90
      %p99 = scmp.eq.s32.totalorder %s38, 1
      %p100 = por %p98, %p99
      %p101 = scmp.ne.s32.totalorder %s90, %s91
      %p102 = scmp.eq.s32.totalorder %s38, 0
      %p103 = por %p101, %p102
      %p104 = scmp.ne.s32.totalorder %s90, %s91
      %p105 = scmp.eq.s32.totalorder %s39, 1
      %p106 = por %p104, %p105
      %p108 = scmp.ne.s32.totalorder %s91, %s107
      %p109 = scmp.eq.s32.totalorder %s39, 0
      %p110 = por %p108, %p109
      %s111 = sadd.s32 %s41, 2
      %s112 = sadd.s32 %s48, 2
      %s113 = ssub.s32 %s40, %s52
      %s114 = ssub.s32 %s111, %s112
      %s115 = sor.u32 %s113, %s114
      %p116 = scmp.eq.s32.totalorder %s115, 0
      %s118 = sadd.s32 %s117, 1
      %s119 = scalar_select %p116, %s117, %s118
      %p122 = pneg %p116
      %p123 = scmp.eq.s32.totalorder %s33, 1
      %p124 = por %p122, %p123
      %p125 = scmp.ne.s32.totalorder %s117, %s120
      %p126 = scmp.eq.s32.totalorder %s33, 0
      %p127 = por %p125, %p126
      %p128 = scmp.ne.s32.totalorder %s117, %s120
      %p129 = scmp.eq.s32.totalorder %s38, 1
      %p130 = por %p128, %p129
      %p131 = scmp.ne.s32.totalorder %s120, %s121
      %p132 = scmp.eq.s32.totalorder %s38, 0
      %p133 = por %p131, %p132
      %p134 = scmp.ne.s32.totalorder %s120, %s121
      %p135 = scmp.eq.s32.totalorder %s39, 1
      %p136 = por %p134, %p135
      %p138 = scmp.ne.s32.totalorder %s121, %s137
      %p139 = scmp.eq.s32.totalorder %s39, 0
      %p140 = por %p138, %p139
      %s141 = ssub.s32 %s41, %s48
      %p142 = scmp.eq.s32.totalorder %s141, 0
      %s144 = sadd.s32 %s143, 1
      %s145 = scalar_select %p142, %s143, %s144
      %p148 = pneg %p142
      %p149 = scmp.eq.s32.totalorder %s33, 1
      %p150 = por %p148, %p149
      %p151 = scmp.ne.s32.totalorder %s143, %s146
      %p152 = scmp.eq.s32.totalorder %s33, 0
      %p153 = por %p151, %p152
      %p154 = scmp.ne.s32.totalorder %s143, %s146
      %p155 = scmp.eq.s32.totalorder %s38, 1
      %p156 = por %p154, %p155
      %p157 = scmp.ne.s32.totalorder %s146, %s147
      %p158 = scmp.eq.s32.totalorder %s38, 0
      %p159 = por %p157, %p158
      %p160 = scmp.ne.s32.totalorder %s146, %s147
      %p161 = scmp.eq.s32.totalorder %s39, 1
      %p162 = por %p160, %p161
      %p164 = scmp.ne.s32.totalorder %s147, %s163
      %p165 = scmp.eq.s32.totalorder %s39, 0
      %p166 = por %p164, %p165
      %s167 = ssub.s32 %s41, %s48
      %p168 = scmp.eq.s32.totalorder %s167, 0
      %s170 = sadd.s32 %s169, 1
      %s171 = scalar_select %p168, %s169, %s170
      %p174 = pneg %p168
      %p175 = scmp.eq.s32.totalorder %s33, 1
      %p176 = por %p174, %p175
      %p177 = scmp.ne.s32.totalorder %s169, %s172
      %p178 = scmp.eq.s32.totalorder %s33, 0
      %p179 = por %p177, %p178
      %p180 = scmp.ne.s32.totalorder %s169, %s172
      %p181 = scmp.eq.s32.totalorder %s38, 1
      %p182 = por %p180, %p181
      %p183 = scmp.ne.s32.totalorder %s172, %s173
      %p184 = scmp.eq.s32.totalorder %s38, 0
      %p185 = por %p183, %p184
      %p186 = scmp.ne.s32.totalorder %s172, %s173
      %p187 = scmp.eq.s32.totalorder %s39, 1
      %p188 = por %p186, %p187
      %p190 = scmp.ne.s32.totalorder %s173, %s189
      %p191 = scmp.eq.s32.totalorder %s39, 0
      %p192 = por %p190, %p191
      %s193 = ssub.s32 %s41, %s48
      %p194 = scmp.eq.s32.totalorder %s193, 0
      %s196 = sadd.s32 %s195, 1
      %s197 = scalar_select %p194, %s195, %s196
      %p200 = pneg %p194
      %p201 = scmp.eq.s32.totalorder %s33, 1
      %p202 = por %p200, %p201
      %p203 = scmp.ne.s32.totalorder %s195, %s198
      %p204 = scmp.eq.s32.totalorder %s33, 0
      %p205 = por %p203, %p204
      %p206 = scmp.ne.s32.totalorder %s195, %s198
      %p207 = scmp.eq.s32.totalorder %s38, 1
      %p208 = por %p206, %p207
      %p209 = scmp.ne.s32.totalorder %s198, %s199
      %p210 = scmp.eq.s32.totalorder %s38, 0
      %p211 = por %p209, %p210
      %p212 = scmp.ne.s32.totalorder %s198, %s199
      %p213 = scmp.eq.s32.totalorder %s39, 1
      %p214 = por %p212, %p213
      %p216 = scmp.ne.s32.totalorder %s199, %s215
      %p217 = scmp.eq.s32.totalorder %s39, 0
      %p218 = por %p216, %p217
      %s219 = ssub.s32 %s41, %s48
      %p220 = scmp.eq.s32.totalorder %s219, 0
      %s222 = sadd.s32 %s221, 1
      %s223 = scalar_select %p220, %s221, %s222
      %p226 = pneg %p220
      %p227 = scmp.eq.s32.totalorder %s33, 1
      %p228 = por %p226, %p227
      %p229 = scmp.ne.s32.totalorder %s221, %s224
      %p230 = scmp.eq.s32.totalorder %s33, 0
      %p231 = por %p229, %p230
      %p232 = scmp.ne.s32.totalorder %s221, %s224
      %p233 = scmp.eq.s32.totalorder %s38, 1
      %p234 = por %p232, %p233
      %p235 = scmp.ne.s32.totalorder %s224, %s225
      %p236 = scmp.eq.s32.totalorder %s38, 0
      %p237 = por %p235, %p236
      %p238 = scmp.ne.s32.totalorder %s224, %s225
      %p239 = scmp.eq.s32.totalorder %s39, 1
      %p240 = por %p238, %p239
      %p242 = scmp.ne.s32.totalorder %s225, %s241
      %p243 = scmp.eq.s32.totalorder %s39, 0
      %p244 = por %p242, %p243
      %s245 = ssub.s32 %s41, %s48
      %p246 = scmp.eq.s32.totalorder %s245, 0
      %s248 = sadd.s32 %s247, 1
      %s249 = scalar_select %p246, %s247, %s248
      %p252 = pneg %p246
      %p253 = scmp.eq.s32.totalorder %s33, 1
      %p254 = por %p252, %p253
      %p255 = scmp.ne.s32.totalorder %s247, %s250
      %p256 = scmp.eq.s32.totalorder %s33, 0
      %p257 = por %p255, %p256
      %p258 = scmp.ne.s32.totalorder %s247, %s250
      %p259 = scmp.eq.s32.totalorder %s38, 1
      %p260 = por %p258, %p259
      %p261 = scmp.ne.s32.totalorder %s250, %s251
      %p262 = scmp.eq.s32.totalorder %s38, 0
      %p263 = por %p261, %p262
      %p264 = scmp.ne.s32.totalorder %s250, %s251
      %p265 = scmp.eq.s32.totalorder %s39, 1
      %p266 = por %p264, %p265
      %p268 = scmp.ne.s32.totalorder %s251, %s267
      %p269 = scmp.eq.s32.totalorder %s39, 0
      %p270 = por %p268, %p269
      %s271 = ssub.s32 %s40, %s52
      %p272 = scmp.eq.s32.totalorder %s271, 0
      %s274 = sadd.s32 %s273, 1
      %s275 = scalar_select %p272, %s273, %s274
      %p278 = pneg %p272
      %p279 = scmp.eq.s32.totalorder %s33, 1
      %p280 = por %p278, %p279
      %p281 = scmp.ne.s32.totalorder %s273, %s276
      %p282 = scmp.eq.s32.totalorder %s33, 0
      %p283 = por %p281, %p282
      %p284 = scmp.ne.s32.totalorder %s273, %s276
      %p285 = scmp.eq.s32.totalorder %s38, 1
      %p286 = por %p284, %p285
      %p287 = scmp.ne.s32.totalorder %s276, %s277
      %p288 = scmp.eq.s32.totalorder %s38, 0
      %p289 = por %p287, %p288
      %p290 = scmp.ne.s32.totalorder %s276, %s277
      %p291 = scmp.eq.s32.totalorder %s39, 1
      %p292 = por %p290, %p291
      %p294 = scmp.ne.s32.totalorder %s277, %s293
      %p295 = scmp.eq.s32.totalorder %s39, 0
      %p296 = por %p294, %p295
      %s297 = ssub.s32 %s40, %s52
      %p298 = scmp.eq.s32.totalorder %s297, 0
      %s300 = sadd.s32 %s299, 1
      %s301 = scalar_select %p298, %s299, %s300
      %p304 = pneg %p298
      %p305 = scmp.eq.s32.totalorder %s33, 1
      %p306 = por %p304, %p305
      %p307 = scmp.ne.s32.totalorder %s299, %s302
      %p308 = scmp.eq.s32.totalorder %s33, 0
      %p309 = por %p307, %p308
      %p310 = scmp.ne.s32.totalorder %s299, %s302
      %p311 = scmp.eq.s32.totalorder %s38, 1
      %p312 = por %p310, %p311
      %p313 = scmp.ne.s32.totalorder %s302, %s303
      %p314 = scmp.eq.s32.totalorder %s38, 0
      %p315 = por %p313, %p314
      %p316 = scmp.ne.s32.totalorder %s302, %s303
      %p317 = scmp.eq.s32.totalorder %s39, 1
      %p318 = por %p316, %p317
      %p320 = scmp.ne.s32.totalorder %s303, %s319
      %p321 = scmp.eq.s32.totalorder %s39, 0
      %p322 = por %p320, %p321
      %s323 = ssub.s32 %s40, %s52
      %p324 = scmp.eq.s32.totalorder %s323, 0
      %s326 = sadd.s32 %s325, 1
      %s327 = scalar_select %p324, %s325, %s326
      %p330 = pneg %p324
      %p331 = scmp.eq.s32.totalorder %s33, 1
      %p332 = por %p330, %p331
      %p333 = scmp.ne.s32.totalorder %s325, %s328
      %p334 = scmp.eq.s32.totalorder %s33, 0
      %p335 = por %p333, %p334
      %p336 = scmp.ne.s32.totalorder %s325, %s328
      %p337 = scmp.eq.s32.totalorder %s38, 1
      %p338 = por %p336, %p337
      %p339 = scmp.ne.s32.totalorder %s328, %s329
      %p340 = scmp.eq.s32.totalorder %s38, 0
      %p341 = por %p339, %p340
      %p342 = scmp.ne.s32.totalorder %s328, %s329
      %p343 = scmp.eq.s32.totalorder %s39, 1
      %p344 = por %p342, %p343
      %p346 = scmp.ne.s32.totalorder %s329, %s345
      %p347 = scmp.eq.s32.totalorder %s39, 0
      %p348 = por %p346, %p347
      %s349 = ssub.s32 %s41, %s48
      %p350 = scmp.eq.s32.totalorder %s349, 0
      %s352 = sadd.s32 %s351, 1
      %s353 = scalar_select %p350, %s351, %s352
      %p356 = pneg %p350
      %p357 = scmp.eq.s32.totalorder %s33, 1
      %p358 = por %p356, %p357
      %p359 = scmp.ne.s32.totalorder %s351, %s354
      %p360 = scmp.eq.s32.totalorder %s33, 0
      %p361 = por %p359, %p360
      %p362 = scmp.ne.s32.totalorder %s351, %s354
      %p363 = scmp.eq.s32.totalorder %s38, 1
      %p364 = por %p362, %p363
      %p365 = scmp.ne.s32.totalorder %s354, %s355
      %p366 = scmp.eq.s32.totalorder %s38, 0
      %p367 = por %p365, %p366
      %p368 = scmp.ne.s32.totalorder %s354, %s355
      %p369 = scmp.eq.s32.totalorder %s39, 1
      %p370 = por %p368, %p369
      %p372 = scmp.ne.s32.totalorder %s355, %s371
      %p373 = scmp.eq.s32.totalorder %s39, 0
      %p374 = por %p372, %p373
      %s375 = ssub.s32 %s40, %s52
      %p376 = scmp.eq.s32.totalorder %s375, 0
      %s378 = sadd.s32 %s377, 1
      %s379 = scalar_select %p376, %s377, %s378
      %p382 = pneg %p376
      %p383 = scmp.eq.s32.totalorder %s33, 1
      %p384 = por %p382, %p383
      %p385 = scmp.ne.s32.totalorder %s377, %s380
      %p386 = scmp.eq.s32.totalorder %s33, 0
      %p387 = por %p385, %p386
      %p388 = scmp.ne.s32.totalorder %s377, %s380
      %p389 = scmp.eq.s32.totalorder %s38, 1
      %p390 = por %p388, %p389
      %p391 = scmp.ne.s32.totalorder %s380, %s381
      %p392 = scmp.eq.s32.totalorder %s38, 0
      %p393 = por %p391, %p392
      %p394 = scmp.ne.s32.totalorder %s380, %s381
      %p395 = scmp.eq.s32.totalorder %s39, 1
      %p396 = por %p394, %p395
      %p398 = scmp.ne.s32.totalorder %s381, %s397
      %p399 = scmp.eq.s32.totalorder %s39, 0
      %p400 = por %p398, %p399
      %s402 = sadd.s32 %s401, 1
      %p405 = scmp.eq.s32.totalorder %s33, 1
      %p406 = scmp.ne.s32.totalorder %s401, %s403
      %p407 = scmp.eq.s32.totalorder %s33, 0
      %p408 = por %p406, %p407
      %p409 = scmp.ne.s32.totalorder %s401, %s403
      %p410 = scmp.eq.s32.totalorder %s38, 1
      %p411 = por %p409, %p410
      %p412 = scmp.ne.s32.totalorder %s403, %s404
      %p413 = scmp.eq.s32.totalorder %s38, 0
      %p414 = por %p412, %p413
      %p415 = scmp.ne.s32.totalorder %s403, %s404
      %p416 = scmp.eq.s32.totalorder %s39, 1
      %p417 = por %p415, %p416
      %p419 = scmp.ne.s32.totalorder %s404, %s418
      %p420 = scmp.eq.s32.totalorder %s39, 0
      %p421 = por %p419, %p420
      %s423 = sadd.s32 %s422, 1
      %p426 = scmp.eq.s32.totalorder %s33, 1
      %p427 = scmp.ne.s32.totalorder %s422, %s424
      %p428 = scmp.eq.s32.totalorder %s33, 0
      %p429 = por %p427, %p428
      %p430 = scmp.ne.s32.totalorder %s422, %s424
      %p431 = scmp.eq.s32.totalorder %s38, 1
      %p432 = por %p430, %p431
      %p433 = scmp.ne.s32.totalorder %s424, %s425
      %p434 = scmp.eq.s32.totalorder %s38, 0
      %p435 = por %p433, %p434
      %p436 = scmp.ne.s32.totalorder %s424, %s425
      %p437 = scmp.eq.s32.totalorder %s39, 1
      %p438 = por %p436, %p437
      %p440 = scmp.ne.s32.totalorder %s425, %s439
      %p441 = scmp.eq.s32.totalorder %s39, 0
      %p442 = por %p440, %p441
      %s443 = ssub.s32 %s40, %s52
      %p444 = scmp.eq.s32.totalorder %s443, 0
      %s446 = sadd.s32 %s445, 1
      %s447 = scalar_select %p444, %s445, %s446
      %p450 = pneg %p444
      %p451 = scmp.eq.s32.totalorder %s33, 1
      %p452 = por %p450, %p451
      %p453 = scmp.ne.s32.totalorder %s445, %s448
      %p454 = scmp.eq.s32.totalorder %s33, 0
      %p455 = por %p453, %p454
      %p456 = scmp.ne.s32.totalorder %s445, %s448
      %p457 = scmp.eq.s32.totalorder %s38, 1
      %p458 = por %p456, %p457
      %p459 = scmp.ne.s32.totalorder %s448, %s449
      %p460 = scmp.eq.s32.totalorder %s38, 0
      %p461 = por %p459, %p460
      %p462 = scmp.ne.s32.totalorder %s448, %s449
      %p463 = scmp.eq.s32.totalorder %s39, 1
      %p464 = por %p462, %p463
      %p466 = scmp.ne.s32.totalorder %s449, %s465
      %p467 = scmp.eq.s32.totalorder %s39, 0
      %p468 = por %p466, %p467
      %p469 = scmp.le.s32.totalorder 1, %s33
      %p470 = scmp.lt.s32.totalorder %s33, 3
      %p471 = pnand %p469, %p470
      %p472 = pneg %p471
      // Predicated region
      $region9: #{_xlnet_qa_forward_jit.13} parent=5 // pred_check
        _
      $region10: #{_xlnet_qa_forward_jit.13} parent=5 // pred_check_branch
        %474 = sbr.rel (%p471) target = $region12
      $region11: #{_xlnet_qa_forward_jit.13} parent=5 // pred_region
        %s475 = ssub.s32 %s33, 1
        // Predicated region
        $region13: #{_xlnet_qa_forward_jit.13} parent=11 // pred_check
          %p476 = pneg %p159
        $region14: #{_xlnet_qa_forward_jit.13} parent=11 // pred_check_branch
          %478 = sbr.rel (%p476) target = $region16
        $region15: #{_xlnet_qa_forward_jit.13} parent=11 // pred_region
          %s480 = ssub.s32 256, 256
          %481 = vsyncadd [#allocation10], %s480
          %s482 = smul.addr %s43, 64
          %s483 = scalar_lea.hbm %s3, %s482
          %s484 = sshll.u32 [#allocation9], 4
          %s485 = int_to_ptr.vmem [resolvable:$true] %s484
          %490 = dma.hbm_to_vmem [thread:$0]  %s483, 256, %s485, [#allocation10], 64, 64, 4
        $region16: #{_xlnet_qa_forward_jit.13} parent=11 // pred_fallthru
          _
        // Predicated region
        $region17: #{_xlnet_qa_forward_jit.13} parent=11 // pred_check
          %p491 = pneg %p185
        $region18: #{_xlnet_qa_forward_jit.13} parent=11 // pred_check_branch
          %493 = sbr.rel (%p491) target = $region20
        $region19: #{_xlnet_qa_forward_jit.13} parent=11 // pred_region
          %s495 = ssub.s32 16, 16
          %496 = vsyncadd [#allocation10], %s495
          %s497 = smul.addr %s43, 16
          %s498 = scalar_lea.hbm %s4, %s497
          %s500 = sshll.u32 [#allocation11], 4
          %s501 = int_to_ptr.vmem [resolvable:$true] %s500
          %503 = dma.hbm_to_vmem [thread:$0]  %s498, 16, %s501, [#allocation10]
        $region20: #{_xlnet_qa_forward_jit.13} parent=11 // pred_fallthru
          _
        // Predicated region
        $region21: #{_xlnet_qa_forward_jit.13} parent=11 // pred_check
          %p504 = pneg %p211
        $region22: #{_xlnet_qa_forward_jit.13} parent=11 // pred_check_branch
          %506 = sbr.rel (%p504) target = $region24
        $region23: #{_xlnet_qa_forward_jit.13} parent=11 // pred_region
          %s508 = ssub.s32 16, 16
          %509 = vsyncadd [#allocation13], %s508
          %s510 = smul.addr %s43, 16
          %s511 = scalar_lea.hbm %s5, %s510
          %s513 = sshll.u32 [#allocation12], 4
          %s514 = int_to_ptr.vmem [resolvable:$true] %s513
          %516 = dma.hbm_to_vmem [thread:$0]  %s511, 16, %s514, [#allocation13]
        $region24: #{_xlnet_qa_forward_jit.13} parent=11 // pred_fallthru
          _
        // Predicated region
        $region25: #{_xlnet_qa_forward_jit.13} parent=11 // pred_check
          %p517 = pneg %p237
        $region26: #{_xlnet_qa_forward_jit.13} parent=11 // pred_check_branch
          %519 = sbr.rel (%p517) target = $region28
        $region27: #{_xlnet_qa_forward_jit.13} parent=11 // pred_region
          %s521 = ssub.s32 16, 16
          %522 = vsyncadd [#allocation13], %s521
          %s523 = smul.addr %s43, 16
          %s524 = scalar_lea.hbm %s6, %s523
          %s526 = sshll.u32 [#allocation14], 4
          %s527 = int_to_ptr.vmem [resolvable:$true] %s526
          %529 = dma.hbm_to_vmem [thread:$0]  %s524, 16, %s527, [#allocation13]
        $region28: #{_xlnet_qa_forward_jit.13} parent=11 // pred_fallthru
          _
        // Predicated region
        $region29: #{_xlnet_qa_forward_jit.13} parent=11 // pred_check
          %p530 = pneg %p263
        $region30: #{_xlnet_qa_forward_jit.13} parent=11 // pred_check_branch
          %532 = sbr.rel (%p530) target = $region32
        $region31: #{_xlnet_qa_forward_jit.13} parent=11 // pred_region
          %s534 = ssub.s32 32, 32
          %535 = vsyncadd [#allocation16], %s534
          %s536 = smul.addr %s43, 32
          %s537 = scalar_lea.hbm %s7, %s536
          %s539 = sshll.u32 [#allocation15], 4
          %s540 = int_to_ptr.vmem [resolvable:$true] %s539
          %542 = dma.hbm_to_vmem [thread:$0]  %s537, 32, %s540, [#allocation16]
        $region32: #{_xlnet_qa_forward_jit.13} parent=11 // pred_fallthru
          _
        // Predicated region
        $region33: #{_xlnet_qa_forward_jit.13} parent=11 // pred_check
          %p543 = pneg %p367
        $region34: #{_xlnet_qa_forward_jit.13} parent=11 // pred_check_branch
          %545 = sbr.rel (%p543) target = $region36
        $region35: #{_xlnet_qa_forward_jit.13} parent=11 // pred_region
          %s546 = smul.u32 16, %s43
          %s548 = ssub.s32 1024, 1024
          %549 = vsyncadd [#allocation7], %s548
          %s550 = smul.addr %s546, 64
          %s551 = scalar_lea.hbm %s11, %s550
          %s552 = sshll.u32 [#allocation20], 4
          %s553 = int_to_ptr.vmem [resolvable:$true] %s552
          %558 = dma.hbm_to_vmem [thread:$0]  %s551, 1024, %s553, [#allocation7], 64, 64, 4
        $region36: #{_xlnet_qa_forward_jit.13} parent=11 // pred_fallthru
          _
        // Predicated region
        $region37: #{_xlnet_qa_forward_jit.13} parent=11 // pred_check
          %p559 = pneg %p414
        $region38: #{_xlnet_qa_forward_jit.13} parent=11 // pred_check_branch
          %561 = sbr.rel (%p559) target = $region40
        $region39: #{_xlnet_qa_forward_jit.13} parent=11 // pred_region
          %s563 = ssub.s32 16, 16
          %564 = vsyncadd [#allocation7], %s563
          %s566 = sshll.u32 [#allocation22], 4
          %s567 = int_to_ptr.vmem [resolvable:$true] %s566
          %569 = dma.hbm_to_vmem [thread:$0]  %s13, 16, %s567, [#allocation7]
        $region40: #{_xlnet_qa_forward_jit.13} parent=11 // pred_fallthru
          _
        // Predicated region
        $region41: #{_xlnet_qa_forward_jit.13} parent=11 // pred_check
          %p570 = pneg %p435
        $region42: #{_xlnet_qa_forward_jit.13} parent=11 // pred_check_branch
          %572 = sbr.rel (%p570) target = $region44
        $region43: #{_xlnet_qa_forward_jit.13} parent=11 // pred_region
          %s574 = ssub.s32 16, 16
          %575 = vsyncadd [#allocation10], %s574
          %s577 = sshll.u32 [#allocation23], 4
          %s578 = int_to_ptr.vmem [resolvable:$true] %s577
          %580 = dma.hbm_to_vmem [thread:$0]  %s14, 16, %s578, [#allocation10]
        $region44: #{_xlnet_qa_forward_jit.13} parent=11 // pred_fallthru
          _
      $region12: #{_xlnet_qa_forward_jit.13} parent=5 // pred_fallthru
        _
      %p581 = scmp.lt.s32.totalorder %s33, 2
      // Predicated region
      $region45: #{_xlnet_qa_forward_jit.13} parent=5 // pred_check
        %p582 = pneg %p581
      $region46: #{_xlnet_qa_forward_jit.13} parent=5 // pred_check_branch
        %584 = sbr.rel (%p582) target = $region48
      $region47: #{_xlnet_qa_forward_jit.13} parent=5 // pred_region
        // Predicated region
        $region49: #{_xlnet_qa_forward_jit.13} parent=47 // pred_check
          %p585 = pneg %p67
        $region50: #{_xlnet_qa_forward_jit.13} parent=47 // pred_check_branch
          %587 = sbr.rel (%p585) target = $region52
        $region51: #{_xlnet_qa_forward_jit.13} parent=47 // pred_region
          %s588 = sand.u32 %s33, 1
          %s589 = scalar_lea.sflag [#allocation4], %s588
          %s590 = sand.u32 %s57, 1
          %s591 = smul.addr %s590, 8
          %s592 = scalar_lea.vmem [#allocation3], %s591
          %s593 = smul.u32 2, %s40
          %s595 = ssub.s32 128, 128
          %596 = vsyncadd %s589, %s595
          %s597 = smul.addr %s593, 3
          %s598 = sadd.s32 %s41, %s597
          %s599 = smul.addr %s598, 64
          %s600 = scalar_lea.hbm %s0, %s599
          %s601 = sshll.u32 %s592, 4
          %s602 = int_to_ptr.vmem [resolvable:$true] %s601
          %607 = dma.hbm_to_vmem [thread:$0]  %s600, 128, %s602, %s589, 192, 64, 4
        $region52: #{_xlnet_qa_forward_jit.13} parent=47 // pred_fallthru
          _
        // Predicated region
        $region53: #{_xlnet_qa_forward_jit.13} parent=47 // pred_check
          %p608 = pneg %p97
        $region54: #{_xlnet_qa_forward_jit.13} parent=47 // pred_check_branch
          %610 = sbr.rel (%p608) target = $region56
        $region55: #{_xlnet_qa_forward_jit.13} parent=47 // pred_region
          %s611 = sand.u32 %s33, 1
          %s612 = scalar_lea.sflag [#allocation7], %s611
          %s613 = sand.u32 %s87, 1
          %s614 = smul.addr %s613, 8
          %s615 = scalar_lea.vmem [#allocation6], %s614
          %s616 = sadd.s32 %s41, 1
          %s617 = smul.u32 2, %s40
          %s619 = ssub.s32 128, 128
          %620 = vsyncadd %s612, %s619
          %s621 = smul.addr %s617, 3
          %s622 = sadd.s32 %s616, %s621
          %s623 = smul.addr %s622, 64
          %s624 = scalar_lea.hbm %s1, %s623
          %s625 = sshll.u32 %s615, 4
          %s626 = int_to_ptr.vmem [resolvable:$true] %s625
          %631 = dma.hbm_to_vmem [thread:$0]  %s624, 128, %s626, %s612, 192, 64, 4
        $region56: #{_xlnet_qa_forward_jit.13} parent=47 // pred_fallthru
          _
        // Predicated region
        $region57: #{_xlnet_qa_forward_jit.13} parent=47 // pred_check
          %p632 = pneg %p127
        $region58: #{_xlnet_qa_forward_jit.13} parent=47 // pred_check_branch
          %634 = sbr.rel (%p632) target = $region60
        $region59: #{_xlnet_qa_forward_jit.13} parent=47 // pred_region
          %s635 = sand.u32 %s33, 1
          %s636 = scalar_lea.sflag [#allocation7], %s635
          %s637 = sand.u32 %s117, 1
          %s638 = smul.addr %s637, 8
          %s639 = scalar_lea.vmem [#allocation8], %s638
          %s640 = sadd.s32 %s41, 2
          %s641 = smul.u32 2, %s40
          %s643 = ssub.s32 128, 128
          %644 = vsyncadd %s636, %s643
          %s645 = smul.addr %s641, 3
          %s646 = sadd.s32 %s640, %s645
          %s647 = smul.addr %s646, 64
          %s648 = scalar_lea.hbm %s2, %s647
          %s649 = sshll.u32 %s639, 4
          %s650 = int_to_ptr.vmem [resolvable:$true] %s649
          %655 = dma.hbm_to_vmem [thread:$0]  %s648, 128, %s650, %s636, 192, 64, 4
        $region60: #{_xlnet_qa_forward_jit.13} parent=47 // pred_fallthru
          _
        // Predicated region
        $region61: #{_xlnet_qa_forward_jit.13} parent=47 // pred_check
          %p656 = pneg %p283
        $region62: #{_xlnet_qa_forward_jit.13} parent=47 // pred_check_branch
          %658 = sbr.rel (%p656) target = $region64
        $region63: #{_xlnet_qa_forward_jit.13} parent=47 // pred_region
          %s659 = sand.u32 %s33, 1
          %s660 = scalar_lea.sflag [#allocation4], %s659
          %s661 = sand.u32 %s273, 1
          %s662 = scalar_lea.vmem [#allocation17], %s661
          %s664 = ssub.s32 16, 16
          %665 = vsyncadd %s660, %s664
          %s666 = smul.addr %s40, 16
          %s667 = scalar_lea.hbm %s8, %s666
          %s669 = sshll.u32 %s662, 4
          %s670 = int_to_ptr.vmem [resolvable:$true] %s669
          %672 = dma.hbm_to_vmem [thread:$0]  %s667, 16, %s670, %s660
        $region64: #{_xlnet_qa_forward_jit.13} parent=47 // pred_fallthru
          _
        // Predicated region
        $region65: #{_xlnet_qa_forward_jit.13} parent=47 // pred_check
          %p673 = pneg %p309
        $region66: #{_xlnet_qa_forward_jit.13} parent=47 // pred_check_branch
          %675 = sbr.rel (%p673) target = $region68
        $region67: #{_xlnet_qa_forward_jit.13} parent=47 // pred_region
          %s676 = sand.u32 %s33, 1
          %s677 = scalar_lea.sflag [#allocation7], %s676
          %s678 = sand.u32 %s299, 1
          %s679 = smul.addr %s678, 16
          %s680 = scalar_lea.vmem [#allocation18], %s679
          %s682 = ssub.s32 256, 256
          %683 = vsyncadd %s677, %s682
          %s684 = smul.addr %s40, 2
          %s685 = smul.addr %s684, 128
          %s686 = scalar_lea.hbm %s9, %s685
          %s687 = sshll.u32 %s680, 4
          %s688 = int_to_ptr.vmem [resolvable:$true] %s687
          %693 = dma.hbm_to_vmem [thread:$0]  %s686, 256, %s688, %s677, 128, 128, 8
        $region68: #{_xlnet_qa_forward_jit.13} parent=47 // pred_fallthru
          _
        // Predicated region
        $region69: #{_xlnet_qa_forward_jit.13} parent=47 // pred_check
          %p694 = pneg %p335
        $region70: #{_xlnet_qa_forward_jit.13} parent=47 // pred_check_branch
          %696 = sbr.rel (%p694) target = $region72
        $region71: #{_xlnet_qa_forward_jit.13} parent=47 // pred_region
          %s697 = sand.u32 %s33, 1
          %s698 = scalar_lea.sflag [#allocation4], %s697
          %s699 = sand.u32 %s325, 1
          %s700 = scalar_lea.vmem [#allocation19], %s699
          %s702 = ssub.s32 16, 16
          %703 = vsyncadd %s698, %s702
          %s704 = smul.addr %s40, 16
          %s705 = scalar_lea.hbm %s10, %s704
          %s707 = sshll.u32 %s700, 4
          %s708 = int_to_ptr.vmem [resolvable:$true] %s707
          %710 = dma.hbm_to_vmem [thread:$0]  %s705, 16, %s708, %s698
        $region72: #{_xlnet_qa_forward_jit.13} parent=47 // pred_fallthru
          _
        // Predicated region
        $region73: #{_xlnet_qa_forward_jit.13} parent=47 // pred_check
          %p711 = pneg %p387
        $region74: #{_xlnet_qa_forward_jit.13} parent=47 // pred_check_branch
          %713 = sbr.rel (%p711) target = $region76
        $region75: #{_xlnet_qa_forward_jit.13} parent=47 // pred_region
          %s714 = sand.u32 %s33, 1
          %s715 = scalar_lea.sflag [#allocation4], %s714
          %s716 = sand.u32 %s377, 1
          %s717 = smul.addr %s716, 8
          %s718 = scalar_lea.vmem [#allocation21], %s717
          %s719 = smul.u32 2, %s40
          %s721 = ssub.s32 128, 128
          %722 = vsyncadd %s715, %s721
          %s723 = smul.addr %s719, 64
          %s724 = scalar_lea.hbm %s12, %s723
          %s725 = sshll.u32 %s718, 4
          %s726 = int_to_ptr.vmem [resolvable:$true] %s725
          %731 = dma.hbm_to_vmem [thread:$0]  %s724, 128, %s726, %s715, 64, 64, 4
        $region76: #{_xlnet_qa_forward_jit.13} parent=47 // pred_fallthru
          _
      $region48: #{_xlnet_qa_forward_jit.13} parent=5 // pred_fallthru
        _
      %p732 = scmp.le.s32.totalorder 1, %s33
      %p733 = scmp.lt.s32.totalorder %s33, 3
      %p734 = pnand %p732, %p733
      %p735 = pneg %p734
      // Predicated region
      $region77: #{_xlnet_qa_forward_jit.13} parent=5 // pred_check
        _
      $region78: #{_xlnet_qa_forward_jit.13} parent=5 // pred_check_branch
        %737 = sbr.rel (%p734) target = $region80
      $region79: #{_xlnet_qa_forward_jit.13} parent=5 // pred_region
        %s738 = ssub.s32 %s33, 1
        %s739 = sand.u32 %s38, 1
        %s740 = scalar_lea.sflag [#allocation4], %s739
        %s741 = sand.u32 %s60, 1
        %s742 = smul.addr %s741, 8
        %s743 = scalar_lea.vmem [#allocation3], %s742
        // Predicated region
        $region81: #{_xlnet_qa_forward_jit.13} parent=79 // pred_check
          %p744 = pneg %p73
        $region82: #{_xlnet_qa_forward_jit.13} parent=79 // pred_check_branch
          %746 = sbr.rel (%p744) target = $region84
        $region83: #{_xlnet_qa_forward_jit.13} parent=79 // pred_region
          %747 = dma.done %s740, 128
        $region84: #{_xlnet_qa_forward_jit.13} parent=79 // pred_fallthru
          _
        %s748 = sand.u32 %s38, 1
        %s749 = scalar_lea.sflag [#allocation7], %s748
        %s750 = sand.u32 %s90, 1
        %s751 = smul.addr %s750, 8
        %s752 = scalar_lea.vmem [#allocation6], %s751
        // Predicated region
        $region85: #{_xlnet_qa_forward_jit.13} parent=79 // pred_check
          %p753 = pneg %p103
        $region86: #{_xlnet_qa_forward_jit.13} parent=79 // pred_check_branch
          %755 = sbr.rel (%p753) target = $region88
        $region87: #{_xlnet_qa_forward_jit.13} parent=79 // pred_region
          %756 = dma.done %s749, 128
        $region88: #{_xlnet_qa_forward_jit.13} parent=79 // pred_fallthru
          _
        %s757 = sand.u32 %s38, 1
        %s758 = scalar_lea.sflag [#allocation7], %s757
        %s759 = sand.u32 %s120, 1
        %s760 = smul.addr %s759, 8
        %s761 = scalar_lea.vmem [#allocation8], %s760
        // Predicated region
        $region89: #{_xlnet_qa_forward_jit.13} parent=79 // pred_check
          %p762 = pneg %p133
        $region90: #{_xlnet_qa_forward_jit.13} parent=79 // pred_check_branch
          %764 = sbr.rel (%p762) target = $region92
        $region91: #{_xlnet_qa_forward_jit.13} parent=79 // pred_region
          %765 = dma.done %s758, 128
        $region92: #{_xlnet_qa_forward_jit.13} parent=79 // pred_fallthru
          _
        // Predicated region
        $region93: #{_xlnet_qa_forward_jit.13} parent=79 // pred_check
          %p766 = pneg %p159
        $region94: #{_xlnet_qa_forward_jit.13} parent=79 // pred_check_branch
          %768 = sbr.rel (%p766) target = $region96
        $region95: #{_xlnet_qa_forward_jit.13} parent=79 // pred_region
          %769 = dma.done [#allocation10], 256
        $region96: #{_xlnet_qa_forward_jit.13} parent=79 // pred_fallthru
          _
        // Predicated region
        $region97: #{_xlnet_qa_forward_jit.13} parent=79 // pred_check
          %p770 = pneg %p185
        $region98: #{_xlnet_qa_forward_jit.13} parent=79 // pred_check_branch
          %772 = sbr.rel (%p770) target = $region100
        $region99: #{_xlnet_qa_forward_jit.13} parent=79 // pred_region
          %773 = dma.done [#allocation10], 16
        $region100: #{_xlnet_qa_forward_jit.13} parent=79 // pred_fallthru
          _
        // Predicated region
        $region101: #{_xlnet_qa_forward_jit.13} parent=79 // pred_check
          %p774 = pneg %p211
        $region102: #{_xlnet_qa_forward_jit.13} parent=79 // pred_check_branch
          %776 = sbr.rel (%p774) target = $region104
        $region103: #{_xlnet_qa_forward_jit.13} parent=79 // pred_region
          %777 = dma.done [#allocation13], 16
        $region104: #{_xlnet_qa_forward_jit.13} parent=79 // pred_fallthru
          _
        // Predicated region
        $region105: #{_xlnet_qa_forward_jit.13} parent=79 // pred_check
          %p778 = pneg %p237
        $region106: #{_xlnet_qa_forward_jit.13} parent=79 // pred_check_branch
          %780 = sbr.rel (%p778) target = $region108
        $region107: #{_xlnet_qa_forward_jit.13} parent=79 // pred_region
          %781 = dma.done [#allocation13], 16
        $region108: #{_xlnet_qa_forward_jit.13} parent=79 // pred_fallthru
          _
        // Predicated region
        $region109: #{_xlnet_qa_forward_jit.13} parent=79 // pred_check
          %p782 = pneg %p263
        $region110: #{_xlnet_qa_forward_jit.13} parent=79 // pred_check_branch
          %784 = sbr.rel (%p782) target = $region112
        $region111: #{_xlnet_qa_forward_jit.13} parent=79 // pred_region
          %785 = dma.done [#allocation16], 32
        $region112: #{_xlnet_qa_forward_jit.13} parent=79 // pred_fallthru
          _
        %s786 = sand.u32 %s38, 1
        %s787 = scalar_lea.sflag [#allocation4], %s786
        %s788 = sand.u32 %s276, 1
        %s789 = scalar_lea.vmem [#allocation17], %s788
        // Predicated region
        $region113: #{_xlnet_qa_forward_jit.13} parent=79 // pred_check
          %p790 = pneg %p289
        $region114: #{_xlnet_qa_forward_jit.13} parent=79 // pred_check_branch
          %792 = sbr.rel (%p790) target = $region116
        $region115: #{_xlnet_qa_forward_jit.13} parent=79 // pred_region
          %793 = dma.done %s787, 16
        $region116: #{_xlnet_qa_forward_jit.13} parent=79 // pred_fallthru
          _
        %s794 = sand.u32 %s38, 1
        %s795 = scalar_lea.sflag [#allocation7], %s794
        %s796 = sand.u32 %s302, 1
        %s797 = smul.addr %s796, 16
        %s798 = scalar_lea.vmem [#allocation18], %s797
        // Predicated region
        $region117: #{_xlnet_qa_forward_jit.13} parent=79 // pred_check
          %p799 = pneg %p315
        $region118: #{_xlnet_qa_forward_jit.13} parent=79 // pred_check_branch
          %801 = sbr.rel (%p799) target = $region120
        $region119: #{_xlnet_qa_forward_jit.13} parent=79 // pred_region
          %802 = dma.done %s795, 256
        $region120: #{_xlnet_qa_forward_jit.13} parent=79 // pred_fallthru
          _
        %s803 = sand.u32 %s38, 1
        %s804 = scalar_lea.sflag [#allocation4], %s803
        %s805 = sand.u32 %s328, 1
        %s806 = scalar_lea.vmem [#allocation19], %s805
        // Predicated region
        $region121: #{_xlnet_qa_forward_jit.13} parent=79 // pred_check
          %p807 = pneg %p341
        $region122: #{_xlnet_qa_forward_jit.13} parent=79 // pred_check_branch
          %809 = sbr.rel (%p807) target = $region124
        $region123: #{_xlnet_qa_forward_jit.13} parent=79 // pred_region
          %810 = dma.done %s804, 16
        $region124: #{_xlnet_qa_forward_jit.13} parent=79 // pred_fallthru
          _
        // Predicated region
        $region125: #{_xlnet_qa_forward_jit.13} parent=79 // pred_check
          %p811 = pneg %p367
        $region126: #{_xlnet_qa_forward_jit.13} parent=79 // pred_check_branch
          %813 = sbr.rel (%p811) target = $region128
        $region127: #{_xlnet_qa_forward_jit.13} parent=79 // pred_region
          %814 = dma.done [#allocation7], 1024
        $region128: #{_xlnet_qa_forward_jit.13} parent=79 // pred_fallthru
          _
        %s815 = sand.u32 %s38, 1
        %s816 = scalar_lea.sflag [#allocation4], %s815
        %s817 = sand.u32 %s380, 1
        %s818 = smul.addr %s817, 8
        %s819 = scalar_lea.vmem [#allocation21], %s818
        // Predicated region
        $region129: #{_xlnet_qa_forward_jit.13} parent=79 // pred_check
          %p820 = pneg %p393
        $region130: #{_xlnet_qa_forward_jit.13} parent=79 // pred_check_branch
          %822 = sbr.rel (%p820) target = $region132
        $region131: #{_xlnet_qa_forward_jit.13} parent=79 // pred_region
          %823 = dma.done %s816, 128
        $region132: #{_xlnet_qa_forward_jit.13} parent=79 // pred_fallthru
          _
        // Predicated region
        $region133: #{_xlnet_qa_forward_jit.13} parent=79 // pred_check
          %p824 = pneg %p414
        $region134: #{_xlnet_qa_forward_jit.13} parent=79 // pred_check_branch
          %826 = sbr.rel (%p824) target = $region136
        $region135: #{_xlnet_qa_forward_jit.13} parent=79 // pred_region
          %827 = dma.done [#allocation7], 16
        $region136: #{_xlnet_qa_forward_jit.13} parent=79 // pred_fallthru
          _
        // Predicated region
        $region137: #{_xlnet_qa_forward_jit.13} parent=79 // pred_check
          %p828 = pneg %p435
        $region138: #{_xlnet_qa_forward_jit.13} parent=79 // pred_check_branch
          %830 = sbr.rel (%p828) target = $region140
        $region139: #{_xlnet_qa_forward_jit.13} parent=79 // pred_region
          %831 = dma.done [#allocation10], 16
        $region140: #{_xlnet_qa_forward_jit.13} parent=79 // pred_fallthru
          _
        %s832 = sand.u32 %s38, 1
        %s833 = scalar_lea.sflag [#allocation4], %s832
        %s834 = sand.u32 %s60, 1
        %s835 = smul.addr %s834, 8
        %s836 = scalar_lea.vmem [#allocation3], %s835
        %p837 = pneg %p73
        %p838 = pneg %p70
        %s839 = sand.u32 %s38, 1
        %s840 = scalar_lea.sflag [#allocation7], %s839
        %s841 = sand.u32 %s90, 1
        %s842 = smul.addr %s841, 8
        %s843 = scalar_lea.vmem [#allocation6], %s842
        %p844 = pneg %p103
        %p845 = pneg %p100
        %s846 = sand.u32 %s38, 1
        %s847 = scalar_lea.sflag [#allocation7], %s846
        %s848 = sand.u32 %s120, 1
        %s849 = smul.addr %s848, 8
        %s850 = scalar_lea.vmem [#allocation8], %s849
        %p851 = pneg %p133
        %p852 = pneg %p130
        %p853 = pneg %p159
        %p854 = pneg %p156
        %p855 = pneg %p185
        %p856 = pneg %p182
        %p857 = pneg %p211
        %p858 = pneg %p208
        %p859 = pneg %p237
        %p860 = pneg %p234
        %p861 = pneg %p263
        %p862 = pneg %p260
        %s863 = sand.u32 %s38, 1
        %s864 = scalar_lea.sflag [#allocation4], %s863
        %s865 = sand.u32 %s276, 1
        %s866 = scalar_lea.vmem [#allocation17], %s865
        %p867 = pneg %p289
        %p868 = pneg %p286
        %s869 = sand.u32 %s38, 1
        %s870 = scalar_lea.sflag [#allocation7], %s869
        %s871 = sand.u32 %s302, 1
        %s872 = smul.addr %s871, 16
        %s873 = scalar_lea.vmem [#allocation18], %s872
        %p874 = pneg %p315
        %p875 = pneg %p312
        %s876 = sand.u32 %s38, 1
        %s877 = scalar_lea.sflag [#allocation4], %s876
        %s878 = sand.u32 %s328, 1
        %s879 = scalar_lea.vmem [#allocation19], %s878
        %p880 = pneg %p341
        %p881 = pneg %p338
        %p882 = pneg %p367
        %p883 = pneg %p364
        %s884 = sand.u32 %s38, 1
        %s885 = scalar_lea.sflag [#allocation4], %s884
        %s886 = sand.u32 %s380, 1
        %s887 = smul.addr %s886, 8
        %s888 = scalar_lea.vmem [#allocation21], %s887
        %p889 = pneg %p393
        %p890 = pneg %p390
        %p891 = pneg %p414
        %p892 = pneg %p411
        %p893 = pneg %p435
        %p894 = pneg %p432
        %p895 = pneg %p461
        %p896 = pneg %p458
        %s897 = sand.u32 %s448, 1
        %s898 = scalar_lea.sflag [#allocation5], %s897
        %s899 = sand.u32 %s448, 1
        %s900 = smul.addr %s899, 8
        %s901 = scalar_lea.vmem [#allocation24], %s900
        %s902 = smul.u32 2, %s42
        %s903 = sadd.s32 %s43, 1
        %s904 = smul.u32 2, %s42
        %s905 = sadd.s32 %s43, 2
        %s906 = smul.u32 2, %s42
        %s907 = smul.u32 16, %s43
        %s908 = smul.u32 2, %s42
        %s909 = smul.u32 2, %s42
        %p911 = scmp.eq.s32.totalorder %s43, 0
        // Predicated region
        $region141: #{_xlnet_qa_forward_jit.13} parent=79 // pred_check
          %p912 = pneg %p911
        $region142: #{_xlnet_qa_forward_jit.13} parent=79 // pred_check_branch
          %914 = sbr.rel (%p912) target = $region144
        $region143: #{_xlnet_qa_forward_jit.13} parent=79 // pred_region
          %915 = vst [vmem:[#allocation2] sm:$0xff] 0.0
          %916 = vst [vmem:[#allocation2 + $0x8] sm:$0xff] 0.0
        $region144: #{_xlnet_qa_forward_jit.13} parent=79 // pred_fallthru
          _
        %v917 = vlaneseq
        %v918 = vshrl.u32 %v917, 7
        %v919 = vadd.s32 %v918, 8
        %v920 = vlaneseq
        %v921 = vand.u32 %v920, 127
        %v922 = vld [vmem:[%s789] sm:$0x1]
        %vm923 = vcmp.gt.f32.partialorder %v922, 0.5
        %vm924 = vcmp.ne.s32.totalorder %v918, %v921
        %vm925 = vcmp.ne.s32.totalorder %v919, %v921
        %v926 = vsel %vm923, 1, 0
        %v927 = vlaneseq
        %v928 = vshrl.u32 %v927, 7
        %v929 = vsub.s32 0, %v928
        %v930 = vrot.slane %v926, %v929
        %vm931 = vcmp.eq.s32.totalorder %v930, 1
        %vm932 = vmand %vm931, %vm924
        %vm933 = vmand %vm931, %vm925
        %v934 = vld [vmem:[%s798] sm:$0xff]
        %v935 = vld [vmem:[%s798 + $0x8] sm:$0xff]
        %v936 = vld [vmem:[%s806] sm:$0x1]
        %938 = vset.pattern.permute.xlu0 0
        %939 = vperm.xlu0 %938, %v934
        %v940 = vpop.permute.xlu0 %939
        %943 = vset.pattern.permute.xlu0 0
        %944 = vperm.xlu0 %943, %v935
        %v945 = vpop.permute.xlu0 %944
        %v948 = vlaneseq
        %v949 = vshrl.u32 %v948, 7
        %v950 = vsub.s32 0, %v949
        %v951 = vrot.slane %v936, %v950
        %vm953 = vcmp.ne.f32.partialorder %v940, %v951
        %vm954 = vcmp.ne.f32.partialorder %v945, %v951
        %v955 = vld [vmem:[#allocation15] sm:$0x3]
        %v956 = vld [vmem:[%s743] sm:$0xf]
        %v957 = vld [vmem:[%s743 + $0x4] sm:$0xf]
        %v958 = vunpack.c.l.bf16 %v956
        %v959 = vunpack.c.l.bf16 %v957
        %v960 = vld [vmem:[%s752] sm:$0xf]
        %v961 = vld [vmem:[%s752 + $0x4] sm:$0xf]
        %v962 = vld [vmem:[%s761] sm:$0xf]
        %v963 = vld [vmem:[%s761 + $0x4] sm:$0xf]
        %v964 = vld [vmem:[#allocation9] sm:$0xf]
        %v965 = vld [vmem:[#allocation9 + $0x4] sm:$0xf]
        %v966 = vld [vmem:[#allocation9 + $0x8] sm:$0xf]
        %v967 = vld [vmem:[#allocation9 + $0xc] sm:$0xf]
        %v968 = vld [vmem:[#allocation11] sm:$0x1]
        %v969 = vld [vmem:[#allocation12] sm:$0x1]
        %v970 = vld [vmem:[#allocation14] sm:$0x1]
        %v972 = vlaneseq
        %v973 = vshrl.u32 %v972, 7
        %v974 = vsub.s32 0, %v973
        %v975 = vrot.slane %v968, %v974
        %v977 = vadd.f32 %v958, %v975
        %v978 = vadd.f32 %v959, %v975
        %v979 = vmul.f32 %v977, 0.125
        %v980 = vmul.f32 %v978, 0.125
        %v981 = vpack.c.bf16 %v980, %v979
        %v983 = vlaneseq
        %v984 = vshrl.u32 %v983, 7
        %v985 = vsub.s32 0, %v984
        %v986 = vrot.slane %v969, %v985
        %v988 = vadd.f32 %v958, %v986
        %v989 = vadd.f32 %v959, %v986
        %v990 = vmul.f32 %v988, 0.125
        %v991 = vmul.f32 %v989, 0.125
        %v992 = vpack.c.bf16 %v991, %v990
        %v994 = vlaneseq
        %v995 = vshrl.u32 %v994, 7
        %v996 = vsub.s32 0, %v995
        %v997 = vrot.slane %v970, %v996
        %v999 = vadd.f32 %v958, %v997
        %v1000 = vadd.f32 %v959, %v997
        %v1001 = vmul.f32 %v999, 0.125
        %v1002 = vmul.f32 %v1000, 0.125
        %v1007 = vunpack.c.l.b16 %v964
        %v1008 = vunpack.c.l.b16 %v965
        %v1009 = vunpack.c.l.b16 %v966
        %v1010 = vunpack.c.l.b16 %v967
        %v1011 = vpack.c.b16 %v1008, %v1007
        %v1012 = vpack.c.b16 %v1010, %v1009
        %vm1013 = vcmask 523264
        %v1015 = vsel %vm1013, %v992, 0
        %v1018 = vsel %vm1013, %v1011, 0
        %v1021 = vsel %vm1013, %v1012, 0
        %1023 = vmatprep.subr.bf16.mxu0 0
        %1024 = vmatpush1.bf16.xpose.msra.mxu0 %v1018
        %1025 = vmatprep.subr.bf16.mxu0 0
        %1026 = vmatpush1.bf16.xpose.msra.mxu0 %v1021
        %1027 = vmatprep.subr.bf16.mxu0 0
        %1028 = vmatpush1.bf16.xpose.msra.mxu0 0
        %1029 = vmatprep.subr.bf16.mxu0 0
        %1030 = vmatpush1.bf16.xpose.msra.mxu0 0
        %1031 = vmatprep.subr.bf16.mxu0 0
        %1032 = vmatpush1.bf16.xpose.msra.mxu0 0
        %1033 = vmatprep.subr.bf16.mxu0 0
        %1034 = vmatpush1.bf16.xpose.msra.mxu0 0
        %1035 = vmatprep.subr.bf16.mxu0 0
        %1036 = vmatpush1.bf16.xpose.msra.mxu0 0
        %1037 = vmatprep.subr.bf16.mxu0 0
        %1038 = vmatpush1.bf16.xpose.msra.mxu0 0
        %1039 = vmatprep.subr.bf16.mxu0 0
        %1040 = vmatpush1.bf16.xpose.msra.mxu0 0
        %1041 = vmatprep.subr.bf16.mxu0 0
        %1042 = vmatpush1.bf16.xpose.msra.mxu0 0
        %1043 = vmatprep.subr.bf16.mxu0 0
        %1044 = vmatpush1.bf16.xpose.msra.mxu0 0
        %1045 = vmatprep.subr.bf16.mxu0 0
        %1046 = vmatpush1.bf16.xpose.msra.mxu0 0
        %1047 = vmatprep.subr.bf16.mxu0 0
        %1048 = vmatpush1.bf16.xpose.msra.mxu0 0
        %1049 = vmatprep.subr.bf16.mxu0 0
        %1050 = vmatpush1.bf16.xpose.msra.mxu0 0
        %1051 = vmatprep.subr.bf16.mxu0 0
        %1052 = vmatpush1.bf16.xpose.msra.mxu0 0
        %1053 = vmatprep.subr.bf16.mxu0 0
        %1054 = vmatpush1.bf16.xpose.msra.mxu0 0
        %1055 = vmatprep.mubr.bf16.mxu0 0
        %1056 = vmatmul.mubr.bf16.gmra.mrb[0].mxu0 %v1015
        %v1057 = vpop.f32.mrb[0].mxu0
        %v1058 = vadd.f32 0.0, %v1057
        %v1059 = vpop.f32.mrb[0].mxu0
        %v1060 = vpop.f32.mrb[0].mxu0
        %v1061 = vadd.f32 0.0, %v1060
        %v1062 = vpop.f32.mrb[0].mxu0
        %1063 = vdwg.mxu0
        %v1064 = vsub.s32 16, %v918
        %v1065 = vsub.s32 16, %v919
        %1068 = vrot.lane.b32.xlu0 %v1058, 127
        %v1069 = vpop.permute.xlu0 %1068
        %1070 = vrot.lane.b32.xlu0 %v1061, 127
        %v1071 = vpop.permute.xlu0 %1070
        %1074 = vrot.lane.b32.xlu0 %v1058, 31
        %v1075 = vpop.permute.xlu0 %1074
        %1076 = vrot.lane.b32.xlu0 %v1061, 31
        %v1077 = vpop.permute.xlu0 %1076
        %vm1080 = vcmask 252928
        %v1081 = vsel %vm1080, %v1069, %v1075
        %v1082 = vsel %vm1080, %v1071, %v1077
        %v1083 = vand.u32 %v1064, 1
        %v1084 = vand.u32 %v1065, 1
        %vm1085 = vcmp.ne.s32.totalorder %v1083, 0
        %vm1086 = vcmp.ne.s32.totalorder %v1084, 0
        %v1087 = vsel %vm1085, %v1081, %v1058
        %v1088 = vsel %vm1086, %v1082, %v1061
        %1091 = vrot.lane.b32.xlu0 %v1087, 126
        %v1092 = vpop.permute.xlu0 %1091
        %1093 = vrot.lane.b32.xlu0 %v1088, 126
        %v1094 = vpop.permute.xlu0 %1093
        %1097 = vrot.lane.b32.xlu0 %v1087, 30
        %v1098 = vpop.permute.xlu0 %1097
        %1099 = vrot.lane.b32.xlu0 %v1088, 30
        %v1100 = vpop.permute.xlu0 %1099
        %vm1103 = vcmask 244736
        %v1104 = vsel %vm1103, %v1092, %v1098
        %v1105 = vsel %vm1103, %v1094, %v1100
        %v1106 = vand.u32 %v1064, 2
        %v1107 = vand.u32 %v1065, 2
        %vm1108 = vcmp.ne.s32.totalorder %v1106, 0
        %vm1109 = vcmp.ne.s32.totalorder %v1107, 0
        %v1110 = vsel %vm1108, %v1104, %v1087
        %v1111 = vsel %vm1109, %v1105, %v1088
        %1114 = vrot.lane.b32.xlu0 %v1110, 124
        %v1115 = vpop.permute.xlu0 %1114
        %1116 = vrot.lane.b32.xlu0 %v1111, 124
        %v1117 = vpop.permute.xlu0 %1116
        %1120 = vrot.lane.b32.xlu0 %v1110, 28
        %v1121 = vpop.permute.xlu0 %1120
        %1122 = vrot.lane.b32.xlu0 %v1111, 28
        %v1123 = vpop.permute.xlu0 %1122
        %vm1126 = vcmask 228352
        %v1127 = vsel %vm1126, %v1115, %v1121
        %v1128 = vsel %vm1126, %v1117, %v1123
        %v1129 = vand.u32 %v1064, 4
        %v1130 = vand.u32 %v1065, 4
        %vm1131 = vcmp.ne.s32.totalorder %v1129, 0
        %vm1132 = vcmp.ne.s32.totalorder %v1130, 0
        %v1133 = vsel %vm1131, %v1127, %v1110
        %v1134 = vsel %vm1132, %v1128, %v1111
        %1137 = vrot.lane.b32.xlu0 %v1133, 120
        %v1138 = vpop.permute.xlu0 %1137
        %1139 = vrot.lane.b32.xlu0 %v1134, 120
        %v1140 = vpop.permute.xlu0 %1139
        %1143 = vrot.lane.b32.xlu0 %v1133, 24
        %v1144 = vpop.permute.xlu0 %1143
        %1145 = vrot.lane.b32.xlu0 %v1134, 24
        %v1146 = vpop.permute.xlu0 %1145
        %vm1149 = vcmask 195584
        %v1150 = vsel %vm1149, %v1138, %v1144
        %v1151 = vsel %vm1149, %v1140, %v1146
        %v1152 = vand.u32 %v1064, 8
        %v1153 = vand.u32 %v1065, 8
        %vm1154 = vcmp.ne.s32.totalorder %v1152, 0
        %vm1155 = vcmp.ne.s32.totalorder %v1153, 0
        %v1156 = vsel %vm1154, %v1150, %v1133
        %v1157 = vsel %vm1155, %v1151, %v1134
        %1160 = vrot.lane.b32.xlu0 %v1156, 112
        %v1161 = vpop.permute.xlu0 %1160
        %1162 = vrot.lane.b32.xlu0 %v1157, 112
        %v1163 = vpop.permute.xlu0 %1162
        %1166 = vrot.lane.b32.xlu0 %v1156, 16
        %v1167 = vpop.permute.xlu0 %1166
        %1168 = vrot.lane.b32.xlu0 %v1157, 16
        %v1169 = vpop.permute.xlu0 %1168
        %vm1172 = vcmask 130048
        %v1173 = vsel %vm1172, %v1161, %v1167
        %v1174 = vsel %vm1172, %v1163, %v1169
        %v1175 = vand.u32 %v1064, 16
        %v1176 = vand.u32 %v1065, 16
        %vm1177 = vcmp.ne.s32.totalorder %v1175, 0
        %vm1178 = vcmp.ne.s32.totalorder %v1176, 0
        %v1179 = vsel %vm1177, %v1173, %v1156
        %v1180 = vsel %vm1178, %v1174, %v1157
        %v1181 = vlaneseq
        %v1182 = vshrl.u32 %v1181, 7
        %v1183 = vsub.s32 0, %v1182
        %v1184 = vrot.slane %v955, %v1183
        %v1185 = vmul.f32 %v1001, %v1184
        %v1186 = vmul.f32 %v1002, %v1184
        %v1187 = vsel %vm1013, %v1185, 0.0
        %1188 = vadd.xlane.f32.xlu0 %v1187
        %v1189 = vpop.xlane.xlu0 %1188
        %v1190 = vsel %vm1013, %v1186, 0.0
        %1191 = vadd.xlane.f32.xlu0 %v1190
        %v1192 = vpop.xlane.xlu0 %1191
        %v1193 = vlaneseq
        %v1194 = vshrl.u32 %v1193, 7
        %v1195 = vsub.s32 1, %v1194
        %v1196 = vrot.slane %v955, %v1195
        %v1197 = vmul.f32 %v1001, %v1196
        %v1198 = vmul.f32 %v1002, %v1196
        %v1199 = vsel %vm1013, %v1197, 0.0
        %1200 = vadd.xlane.f32.xlu0 %v1199
        %v1201 = vpop.xlane.xlu0 %1200
        %v1202 = vsel %vm1013, %v1198, 0.0
        %1203 = vadd.xlane.f32.xlu0 %v1202
        %v1204 = vpop.xlane.xlu0 %1203
        %v1205 = vsel %vm953, %v1201, %v1189
        %v1206 = vsel %vm954, %v1204, %v1192
        %v1209 = vunpack.c.l.b16 %v960
        %v1210 = vunpack.c.l.b16 %v961
        %v1211 = vpack.c.b16 %v1210, %v1209
        %v1213 = vsel %vm1013, %v981, 0
        %v1216 = vsel %vm1013, %v1211, 0
        %1218 = vmatprep.subr.bf16.mxu0 0
        %1219 = vmatpush1.bf16.xpose.msra.mxu0 %v1216
        %1220 = vmatprep.subr.bf16.mxu0 0
        %1221 = vmatpush1.bf16.xpose.msra.mxu0 0
        %1222 = vmatprep.subr.bf16.mxu0 0
        %1223 = vmatpush1.bf16.xpose.msra.mxu0 0
        %1224 = vmatprep.subr.bf16.mxu0 0
        %1225 = vmatpush1.bf16.xpose.msra.mxu0 0
        %1226 = vmatprep.subr.bf16.mxu0 0
        %1227 = vmatpush1.bf16.xpose.msra.mxu0 0
        %1228 = vmatprep.subr.bf16.mxu0 0
        %1229 = vmatpush1.bf16.xpose.msra.mxu0 0
        %1230 = vmatprep.subr.bf16.mxu0 0
        %1231 = vmatpush1.bf16.xpose.msra.mxu0 0
        %1232 = vmatprep.subr.bf16.mxu0 0
        %1233 = vmatpush1.bf16.xpose.msra.mxu0 0
        %1234 = vmatprep.subr.bf16.mxu0 0
        %1235 = vmatpush1.bf16.xpose.msra.mxu0 0
        %1236 = vmatprep.subr.bf16.mxu0 0
        %1237 = vmatpush1.bf16.xpose.msra.mxu0 0
        %1238 = vmatprep.subr.bf16.mxu0 0
        %1239 = vmatpush1.bf16.xpose.msra.mxu0 0
        %1240 = vmatprep.subr.bf16.mxu0 0
        %1241 = vmatpush1.bf16.xpose.msra.mxu0 0
        %1242 = vmatprep.subr.bf16.mxu0 0
        %1243 = vmatpush1.bf16.xpose.msra.mxu0 0
        %1244 = vmatprep.subr.bf16.mxu0 0
        %1245 = vmatpush1.bf16.xpose.msra.mxu0 0
        %1246 = vmatprep.subr.bf16.mxu0 0
        %1247 = vmatpush1.bf16.xpose.msra.mxu0 0
        %1248 = vmatprep.subr.bf16.mxu0 0
        %1249 = vmatpush1.bf16.xpose.msra.mxu0 0
        %1250 = vmatprep.mubr.bf16.mxu0 0
        %1251 = vmatmul.mubr.bf16.gmra.mrb[0].mxu0 %v1213
        %v1252 = vpop.f32.mrb[0].mxu0
        %v1253 = vadd.f32 %v1179, %v1252
        %v1254 = vpop.f32.mrb[0].mxu0
        %v1255 = vpop.f32.mrb[0].mxu0
        %v1256 = vadd.f32 %v1180, %v1255
        %v1257 = vpop.f32.mrb[0].mxu0
        %1258 = vdwg.mxu0
        %v1259 = vadd.f32 %v1253, %v1205
        %v1260 = vadd.f32 %v1256, %v1206
        %v1261 = vsel %vm932, -1e+30, %v1259
        %v1262 = vsel %vm933, -1e+30, %v1260
        %v1263 = vsel %vm1172, %v1261, -inf
        %1264 = vmax.xlane.f32.xlu0 %v1263
        %v1265 = vpop.xlane.xlu0 %1264
        %v1266 = vsel %vm1172, %v1262, -inf
        %1267 = vmax.xlane.f32.xlu0 %v1266
        %v1268 = vpop.xlane.xlu0 %1267
        %v1269 = vsub.f32 %v1261, %v1265
        %v1270 = vsub.f32 %v1262, %v1268
        %v1271 = vmul.f32 %v1269, 1.442695
        %v1272 = vpow.pop %v1271
        %v1273 = vmul.f32 %v1270, 1.442695
        %v1274 = vpow.pop %v1273
        %v1275 = vsel %vm1172, %v1272, 0.0
        %1276 = vadd.xlane.f32.xlu0 %v1275
        %v1277 = vpop.xlane.xlu0 %1276
        %v1278 = vsel %vm1172, %v1274, 0.0
        %1279 = vadd.xlane.f32.xlu0 %v1278
        %v1280 = vpop.xlane.xlu0 %1279
        %v1281 = vrcp.pop %v1277
        %v1282 = vrcp.pop %v1280
        %v1283 = vmul.f32 %v1272, %v1281
        %v1284 = vmul.f32 %v1274, %v1282
        %v1285 = vpack.c.bf16 %v1284, %v1283
        %v1288 = vunpack.c.l.b16 %v962
        %v1289 = vunpack.c.l.b16 %v963
        %v1290 = vpack.c.b16 %v1289, %v1288
        %v1293 = vsel %vm1172, %v1285, 0
        %1295 = vmatprep.subr.bf16.mxu0 0
        %1296 = vmatpush1.bf16.msra.mxu0 %v1290
        %1297 = vmatprep.subr.bf16.mxu0 0
        %1298 = vmatpush1.bf16.msra.mxu0 0
        %1299 = vmatprep.subr.bf16.mxu0 0
        %1300 = vmatpush1.bf16.msra.mxu0 0
        %1301 = vmatprep.subr.bf16.mxu0 0
        %1302 = vmatpush1.bf16.msra.mxu0 0
        %1303 = vmatprep.subr.bf16.mxu0 0
        %1304 = vmatpush1.bf16.msra.mxu0 0
        %1305 = vmatprep.subr.bf16.mxu0 0
        %1306 = vmatpush1.bf16.msra.mxu0 0
        %1307 = vmatprep.subr.bf16.mxu0 0
        %1308 = vmatpush1.bf16.msra.mxu0 0
        %1309 = vmatprep.subr.bf16.mxu0 0
        %1310 = vmatpush1.bf16.msra.mxu0 0
        %1311 = vmatprep.subr.bf16.mxu0 0
        %1312 = vmatpush1.bf16.msra.mxu0 0
        %1313 = vmatprep.subr.bf16.mxu0 0
        %1314 = vmatpush1.bf16.msra.mxu0 0
        %1315 = vmatprep.subr.bf16.mxu0 0
        %1316 = vmatpush1.bf16.msra.mxu0 0
        %1317 = vmatprep.subr.bf16.mxu0 0
        %1318 = vmatpush1.bf16.msra.mxu0 0
        %1319 = vmatprep.subr.bf16.mxu0 0
        %1320 = vmatpush1.bf16.msra.mxu0 0
        %1321 = vmatprep.subr.bf16.mxu0 0
        %1322 = vmatpush1.bf16.msra.mxu0 0
        %1323 = vmatprep.subr.bf16.mxu0 0
        %1324 = vmatpush1.bf16.msra.mxu0 0
        %1325 = vmatprep.subr.bf16.mxu0 0
        %1326 = vmatpush1.bf16.msra.mxu0 0
        %1327 = vmatprep.mubr.bf16.mxu0 0
        %1328 = vmatmul.mubr.bf16.gmra.mrb[0].mxu0 %v1293
        %v1329 = vpop.f32.mrb[0].mxu0
        %v1330 = vadd.f32 0.0, %v1329
        %v1331 = vpop.f32.mrb[0].mxu0
        %v1332 = vpop.f32.mrb[0].mxu0
        %v1333 = vadd.f32 0.0, %v1332
        %v1334 = vpop.f32.mrb[0].mxu0
        %1335 = vdwg.mxu0
        %1337 = vrot.lane.b32.xlu0 %v992, 64
        %v1338 = vpop.permute.xlu0 %1337
        %1339 = vrot.lane.b32.xlu0 %v1011, 64
        %v1340 = vpop.permute.xlu0 %1339
        %1341 = vrot.lane.b32.xlu0 %v1012, 64
        %v1342 = vpop.permute.xlu0 %1341
        %v1344 = vsel %vm1013, %v1338, 0
        %v1347 = vsel %vm1013, %v1340, 0
        %v1350 = vsel %vm1013, %v1342, 0
        %1352 = vmatprep.subr.bf16.mxu0 0
        %1353 = vmatpush1.bf16.xpose.msra.mxu0 %v1347
        %1354 = vmatprep.subr.bf16.mxu0 0
        %1355 = vmatpush1.bf16.xpose.msra.mxu0 %v1350
        %1356 = vmatprep.subr.bf16.mxu0 0
        %1357 = vmatpush1.bf16.xpose.msra.mxu0 0
        %1358 = vmatprep.subr.bf16.mxu0 0
        %1359 = vmatpush1.bf16.xpose.msra.mxu0 0
        %1360 = vmatprep.subr.bf16.mxu0 0
        %1361 = vmatpush1.bf16.xpose.msra.mxu0 0
        %1362 = vmatprep.subr.bf16.mxu0 0
        %1363 = vmatpush1.bf16.xpose.msra.mxu0 0
        %1364 = vmatprep.subr.bf16.mxu0 0
        %1365 = vmatpush1.bf16.xpose.msra.mxu0 0
        %1366 = vmatprep.subr.bf16.mxu0 0
        %1367 = vmatpush1.bf16.xpose.msra.mxu0 0
        %1368 = vmatprep.subr.bf16.mxu0 0
        %1369 = vmatpush1.bf16.xpose.msra.mxu0 0
        %1370 = vmatprep.subr.bf16.mxu0 0
        %1371 = vmatpush1.bf16.xpose.msra.mxu0 0
        %1372 = vmatprep.subr.bf16.mxu0 0
        %1373 = vmatpush1.bf16.xpose.msra.mxu0 0
        %1374 = vmatprep.subr.bf16.mxu0 0
        %1375 = vmatpush1.bf16.xpose.msra.mxu0 0
        %1376 = vmatprep.subr.bf16.mxu0 0
        %1377 = vmatpush1.bf16.xpose.msra.mxu0 0
        %1378 = vmatprep.subr.bf16.mxu0 0
        %1379 = vmatpush1.bf16.xpose.msra.mxu0 0
        %1380 = vmatprep.subr.bf16.mxu0 0
        %1381 = vmatpush1.bf16.xpose.msra.mxu0 0
        %1382 = vmatprep.subr.bf16.mxu0 0
        %1383 = vmatpush1.bf16.xpose.msra.mxu0 0
        %1384 = vmatprep.mubr.bf16.mxu0 0
        %1385 = vmatmul.mubr.bf16.gmra.mrb[0].mxu0 %v1344
        %v1386 = vpop.f32.mrb[0].mxu0
        %v1387 = vadd.f32 0.0, %v1386
        %v1388 = vpop.f32.mrb[0].mxu0
        %v1389 = vpop.f32.mrb[0].mxu0
        %v1390 = vadd.f32 0.0, %v1389
        %v1391 = vpop.f32.mrb[0].mxu0
        %1392 = vdwg.mxu0
        %1395 = vrot.lane.b32.xlu0 %v1387, 127
        %v1396 = vpop.permute.xlu0 %1395
        %1397 = vrot.lane.b32.xlu0 %v1390, 127
        %v1398 = vpop.permute.xlu0 %1397
        %1401 = vrot.lane.b32.xlu0 %v1387, 31
        %v1402 = vpop.permute.xlu0 %1401
        %1403 = vrot.lane.b32.xlu0 %v1390, 31
        %v1404 = vpop.permute.xlu0 %1403
        %v1407 = vsel %vm1080, %v1396, %v1402
        %v1408 = vsel %vm1080, %v1398, %v1404
        %v1409 = vsel %vm1085, %v1407, %v1387
        %v1410 = vsel %vm1086, %v1408, %v1390
        %1413 = vrot.lane.b32.xlu0 %v1409, 126
        %v1414 = vpop.permute.xlu0 %1413
        %1415 = vrot.lane.b32.xlu0 %v1410, 126
        %v1416 = vpop.permute.xlu0 %1415
        %1419 = vrot.lane.b32.xlu0 %v1409, 30
        %v1420 = vpop.permute.xlu0 %1419
        %1421 = vrot.lane.b32.xlu0 %v1410, 30
        %v1422 = vpop.permute.xlu0 %1421
        %v1425 = vsel %vm1103, %v1414, %v1420
        %v1426 = vsel %vm1103, %v1416, %v1422
        %v1427 = vsel %vm1108, %v1425, %v1409
        %v1428 = vsel %vm1109, %v1426, %v1410
        %1431 = vrot.lane.b32.xlu0 %v1427, 124
        %v1432 = vpop.permute.xlu0 %1431
        %1433 = vrot.lane.b32.xlu0 %v1428, 124
        %v1434 = vpop.permute.xlu0 %1433
        %1437 = vrot.lane.b32.xlu0 %v1427, 28
        %v1438 = vpop.permute.xlu0 %1437
        %1439 = vrot.lane.b32.xlu0 %v1428, 28
        %v1440 = vpop.permute.xlu0 %1439
        %v1443 = vsel %vm1126, %v1432, %v1438
        %v1444 = vsel %vm1126, %v1434, %v1440
        %v1445 = vsel %vm1131, %v1443, %v1427
        %v1446 = vsel %vm1132, %v1444, %v1428
        %1449 = vrot.lane.b32.xlu0 %v1445, 120
        %v1450 = vpop.permute.xlu0 %1449
        %1451 = vrot.lane.b32.xlu0 %v1446, 120
        %v1452 = vpop.permute.xlu0 %1451
        %1455 = vrot.lane.b32.xlu0 %v1445, 24
        %v1456 = vpop.permute.xlu0 %1455
        %1457 = vrot.lane.b32.xlu0 %v1446, 24
        %v1458 = vpop.permute.xlu0 %1457
        %v1461 = vsel %vm1149, %v1450, %v1456
        %v1462 = vsel %vm1149, %v1452, %v1458
        %v1463 = vsel %vm1154, %v1461, %v1445
        %v1464 = vsel %vm1155, %v1462, %v1446
        %1467 = vrot.lane.b32.xlu0 %v1463, 112
        %v1468 = vpop.permute.xlu0 %1467
        %1469 = vrot.lane.b32.xlu0 %v1464, 112
        %v1470 = vpop.permute.xlu0 %1469
        %1473 = vrot.lane.b32.xlu0 %v1463, 16
        %v1474 = vpop.permute.xlu0 %1473
        %1475 = vrot.lane.b32.xlu0 %v1464, 16
        %v1476 = vpop.permute.xlu0 %1475
        %v1479 = vsel %vm1172, %v1468, %v1474
        %v1480 = vsel %vm1172, %v1470, %v1476
        %v1481 = vsel %vm1177, %v1479, %v1463
        %v1482 = vsel %vm1178, %v1480, %v1464
        %1485 = vrot.lane.b32.xlu0 %v1185, 64
        %v1486 = vpop.permute.xlu0 %1485
        %1487 = vrot.lane.b32.xlu0 %v1186, 64
        %v1488 = vpop.permute.xlu0 %1487
        %v1491 = vsel %vm1013, %v1486, 0.0
        %1492 = vadd.xlane.f32.xlu0 %v1491
        %v1493 = vpop.xlane.xlu0 %1492
        %v1494 = vsel %vm1013, %v1488, 0.0
        %1495 = vadd.xlane.f32.xlu0 %v1494
        %v1496 = vpop.xlane.xlu0 %1495
        %1499 = vrot.lane.b32.xlu0 %v1197, 64
        %v1500 = vpop.permute.xlu0 %1499
        %1501 = vrot.lane.b32.xlu0 %v1198, 64
        %v1502 = vpop.permute.xlu0 %1501
        %v1505 = vsel %vm1013, %v1500, 0.0
        %1506 = vadd.xlane.f32.xlu0 %v1505
        %v1507 = vpop.xlane.xlu0 %1506
        %v1508 = vsel %vm1013, %v1502, 0.0
        %1509 = vadd.xlane.f32.xlu0 %v1508
        %v1510 = vpop.xlane.xlu0 %1509
        %v1511 = vsel %vm953, %v1507, %v1493
        %v1512 = vsel %vm954, %v1510, %v1496
        %1514 = vrot.lane.b32.xlu0 %v981, 64
        %v1515 = vpop.permute.xlu0 %1514
        %1516 = vrot.lane.b32.xlu0 %v1211, 64
        %v1517 = vpop.permute.xlu0 %1516
        %v1519 = vsel %vm1013, %v1515, 0
        %v1522 = vsel %vm1013, %v1517, 0
        %1524 = vmatprep.subr.bf16.mxu0 0
        %1525 = vmatpush1.bf16.xpose.msra.mxu0 %v1522
        %1526 = vmatprep.subr.bf16.mxu0 0
        %1527 = vmatpush1.bf16.xpose.msra.mxu0 0
        %1528 = vmatprep.subr.bf16.mxu0 0
        %1529 = vmatpush1.bf16.xpose.msra.mxu0 0
        %1530 = vmatprep.subr.bf16.mxu0 0
        %1531 = vmatpush1.bf16.xpose.msra.mxu0 0
        %1532 = vmatprep.subr.bf16.mxu0 0
        %1533 = vmatpush1.bf16.xpose.msra.mxu0 0
        %1534 = vmatprep.subr.bf16.mxu0 0
        %1535 = vmatpush1.bf16.xpose.msra.mxu0 0
        %1536 = vmatprep.subr.bf16.mxu0 0
        %1537 = vmatpush1.bf16.xpose.msra.mxu0 0
        %1538 = vmatprep.subr.bf16.mxu0 0
        %1539 = vmatpush1.bf16.xpose.msra.mxu0 0
        %1540 = vmatprep.subr.bf16.mxu0 0
        %1541 = vmatpush1.bf16.xpose.msra.mxu0 0
        %1542 = vmatprep.subr.bf16.mxu0 0
        %1543 = vmatpush1.bf16.xpose.msra.mxu0 0
        %1544 = vmatprep.subr.bf16.mxu0 0
        %1545 = vmatpush1.bf16.xpose.msra.mxu0 0
        %1546 = vmatprep.subr.bf16.mxu0 0
        %1547 = vmatpush1.bf16.xpose.msra.mxu0 0
        %1548 = vmatprep.subr.bf16.mxu0 0
        %1549 = vmatpush1.bf16.xpose.msra.mxu0 0
        %1550 = vmatprep.subr.bf16.mxu0 0
        %1551 = vmatpush1.bf16.xpose.msra.mxu0 0
        %1552 = vmatprep.subr.bf16.mxu0 0
        %1553 = vmatpush1.bf16.xpose.msra.mxu0 0
        %1554 = vmatprep.subr.bf16.mxu0 0
        %1555 = vmatpush1.bf16.xpose.msra.mxu0 0
        %1556 = vmatprep.mubr.bf16.mxu0 0
        %1557 = vmatmul.mubr.bf16.gmra.mrb[0].mxu0 %v1519
        %v1558 = vpop.f32.mrb[0].mxu0
        %v1559 = vadd.f32 %v1481, %v1558
        %v1560 = vpop.f32.mrb[0].mxu0
        %v1561 = vpop.f32.mrb[0].mxu0
        %v1562 = vadd.f32 %v1482, %v1561
        %v1563 = vpop.f32.mrb[0].mxu0
        %1564 = vdwg.mxu0
        %v1565 = vadd.f32 %v1559, %v1511
        %v1566 = vadd.f32 %v1562, %v1512
        %v1567 = vsel %vm932, -1e+30, %v1565
        %v1568 = vsel %vm933, -1e+30, %v1566
        %v1569 = vsel %vm1172, %v1567, -inf
        %1570 = vmax.xlane.f32.xlu0 %v1569
        %v1571 = vpop.xlane.xlu0 %1570
        %v1572 = vsel %vm1172, %v1568, -inf
        %1573 = vmax.xlane.f32.xlu0 %v1572
        %v1574 = vpop.xlane.xlu0 %1573
        %v1575 = vsub.f32 %v1567, %v1571
        %v1576 = vsub.f32 %v1568, %v1574
        %v1577 = vmul.f32 %v1575, 1.442695
        %v1578 = vpow.pop %v1577
        %v1579 = vmul.f32 %v1576, 1.442695
        %v1580 = vpow.pop %v1579
        %v1581 = vsel %vm1172, %v1578, 0.0
        %1582 = vadd.xlane.f32.xlu0 %v1581
        %v1583 = vpop.xlane.xlu0 %1582
        %v1584 = vsel %vm1172, %v1580, 0.0
        %1585 = vadd.xlane.f32.xlu0 %v1584
        %v1586 = vpop.xlane.xlu0 %1585
        %v1587 = vrcp.pop %v1583
        %v1588 = vrcp.pop %v1586
        %v1589 = vmul.f32 %v1578, %v1587
        %v1590 = vmul.f32 %v1580, %v1588
        %v1591 = vpack.c.bf16 %v1590, %v1589
        %1592 = vrot.lane.b32.xlu0 %v1290, 64
        %v1593 = vpop.permute.xlu0 %1592
        %v1596 = vsel %vm1172, %v1591, 0
        %1598 = vmatprep.subr.bf16.mxu0 0
        %1599 = vmatpush1.bf16.msra.mxu0 %v1593
        %1600 = vmatprep.subr.bf16.mxu0 0
        %1601 = vmatpush1.bf16.msra.mxu0 0
        %1602 = vmatprep.subr.bf16.mxu0 0
        %1603 = vmatpush1.bf16.msra.mxu0 0
        %1604 = vmatprep.subr.bf16.mxu0 0
        %1605 = vmatpush1.bf16.msra.mxu0 0
        %1606 = vmatprep.subr.bf16.mxu0 0
        %1607 = vmatpush1.bf16.msra.mxu0 0
        %1608 = vmatprep.subr.bf16.mxu0 0
        %1609 = vmatpush1.bf16.msra.mxu0 0
        %1610 = vmatprep.subr.bf16.mxu0 0
        %1611 = vmatpush1.bf16.msra.mxu0 0
        %1612 = vmatprep.subr.bf16.mxu0 0
        %1613 = vmatpush1.bf16.msra.mxu0 0
        %1614 = vmatprep.subr.bf16.mxu0 0
        %1615 = vmatpush1.bf16.msra.mxu0 0
        %1616 = vmatprep.subr.bf16.mxu0 0
        %1617 = vmatpush1.bf16.msra.mxu0 0
        %1618 = vmatprep.subr.bf16.mxu0 0
        %1619 = vmatpush1.bf16.msra.mxu0 0
        %1620 = vmatprep.subr.bf16.mxu0 0
        %1621 = vmatpush1.bf16.msra.mxu0 0
        %1622 = vmatprep.subr.bf16.mxu0 0
        %1623 = vmatpush1.bf16.msra.mxu0 0
        %1624 = vmatprep.subr.bf16.mxu0 0
        %1625 = vmatpush1.bf16.msra.mxu0 0
        %1626 = vmatprep.subr.bf16.mxu0 0
        %1627 = vmatpush1.bf16.msra.mxu0 0
        %1628 = vmatprep.subr.bf16.mxu0 0
        %1629 = vmatpush1.bf16.msra.mxu0 0
        %1630 = vmatprep.mubr.bf16.mxu0 0
        %1631 = vmatmul.mubr.bf16.gmra.mrb[0].mxu0 %v1596
        %v1632 = vpop.f32.mrb[0].mxu0
        %v1633 = vadd.f32 0.0, %v1632
        %v1634 = vpop.f32.mrb[0].mxu0
        %v1635 = vpop.f32.mrb[0].mxu0
        %v1636 = vadd.f32 0.0, %v1635
        %v1637 = vpop.f32.mrb[0].mxu0
        %1638 = vdwg.mxu0
        %1641 = vrot.lane.b32.xlu0 %v1633, 64
        %v1642 = vpop.permute.xlu0 %1641
        %1643 = vrot.lane.b32.xlu0 %v1636, 64
        %v1644 = vpop.permute.xlu0 %1643
        %v1647 = vsel %vm1013, %v1330, %v1642
        %v1648 = vsel %vm1013, %v1333, %v1644
        %v1649 = vld [vmem:[#allocation2] sm:$0xff]
        %v1650 = vld [vmem:[#allocation2 + $0x8] sm:$0xff]
        %v1651 = vpack.c.bf16 %v1648, %v1647
        %v1652 = vld [vmem:[#allocation20] sm:$0xf]
        %v1653 = vld [vmem:[#allocation20 + $0x4] sm:$0xf]
        %v1654 = vld [vmem:[#allocation20 + $0x8] sm:$0xf]
        %v1655 = vld [vmem:[#allocation20 + $0xc] sm:$0xf]
        %v1656 = vld [vmem:[#allocation20 + $0x10] sm:$0xf]
        %v1657 = vld [vmem:[#allocation20 + $0x14] sm:$0xf]
        %v1658 = vld [vmem:[#allocation20 + $0x18] sm:$0xf]
        %v1659 = vld [vmem:[#allocation20 + $0x1c] sm:$0xf]
        %v1660 = vld [vmem:[#allocation20 + $0x20] sm:$0xf]
        %v1661 = vld [vmem:[#allocation20 + $0x24] sm:$0xf]
        %v1662 = vld [vmem:[#allocation20 + $0x28] sm:$0xf]
        %v1663 = vld [vmem:[#allocation20 + $0x2c] sm:$0xf]
        %v1664 = vld [vmem:[#allocation20 + $0x30] sm:$0xf]
        %v1665 = vld [vmem:[#allocation20 + $0x34] sm:$0xf]
        %v1666 = vld [vmem:[#allocation20 + $0x38] sm:$0xf]
        %v1667 = vld [vmem:[#allocation20 + $0x3c] sm:$0xf]
        %v1684 = vunpack.c.l.b16 %v1652
        %v1685 = vunpack.c.l.b16 %v1653
        %v1686 = vunpack.c.l.b16 %v1654
        %v1687 = vunpack.c.l.b16 %v1655
        %v1688 = vunpack.c.l.b16 %v1656
        %v1689 = vunpack.c.l.b16 %v1657
        %v1690 = vunpack.c.l.b16 %v1658
        %v1691 = vunpack.c.l.b16 %v1659
        %v1692 = vunpack.c.l.b16 %v1660
        %v1693 = vunpack.c.l.b16 %v1661
        %v1694 = vunpack.c.l.b16 %v1662
        %v1695 = vunpack.c.l.b16 %v1663
        %v1696 = vunpack.c.l.b16 %v1664
        %v1697 = vunpack.c.l.b16 %v1665
        %v1698 = vunpack.c.l.b16 %v1666
        %v1699 = vunpack.c.l.b16 %v1667
        %v1700 = vpack.c.b16 %v1685, %v1684
        %v1701 = vpack.c.b16 %v1687, %v1686
        %v1702 = vpack.c.b16 %v1689, %v1688
        %v1703 = vpack.c.b16 %v1691, %v1690
        %v1704 = vpack.c.b16 %v1693, %v1692
        %v1705 = vpack.c.b16 %v1695, %v1694
        %v1706 = vpack.c.b16 %v1697, %v1696
        %v1707 = vpack.c.b16 %v1699, %v1698
        %1716 = vmatprep.subr.bf16.mxu0 0
        %1717 = vmatpush1.bf16.msra.mxu0 %v1700
        %1718 = vmatprep.subr.bf16.mxu0 0
        %1719 = vmatpush1.bf16.msra.mxu0 %v1701
        %1720 = vmatprep.subr.bf16.mxu0 0
        %1721 = vmatpush1.bf16.msra.mxu0 %v1702
        %1722 = vmatprep.subr.bf16.mxu0 0
        %1723 = vmatpush1.bf16.msra.mxu0 %v1703
        %1724 = vmatprep.subr.bf16.mxu0 0
        %1725 = vmatpush1.bf16.msra.mxu0 %v1704
        %1726 = vmatprep.subr.bf16.mxu0 0
        %1727 = vmatpush1.bf16.msra.mxu0 %v1705
        %1728 = vmatprep.subr.bf16.mxu0 0
        %1729 = vmatpush1.bf16.msra.mxu0 %v1706
        %1730 = vmatprep.subr.bf16.mxu0 0
        %1731 = vmatpush1.bf16.msra.mxu0 %v1707
        %1732 = vmatprep.subr.bf16.mxu0 0
        %1733 = vmatpush1.bf16.msra.mxu0 0
        %1734 = vmatprep.subr.bf16.mxu0 0
        %1735 = vmatpush1.bf16.msra.mxu0 0
        %1736 = vmatprep.subr.bf16.mxu0 0
        %1737 = vmatpush1.bf16.msra.mxu0 0
        %1738 = vmatprep.subr.bf16.mxu0 0
        %1739 = vmatpush1.bf16.msra.mxu0 0
        %1740 = vmatprep.subr.bf16.mxu0 0
        %1741 = vmatpush1.bf16.msra.mxu0 0
        %1742 = vmatprep.subr.bf16.mxu0 0
        %1743 = vmatpush1.bf16.msra.mxu0 0
        %1744 = vmatprep.subr.bf16.mxu0 0
        %1745 = vmatpush1.bf16.msra.mxu0 0
        %1746 = vmatprep.subr.bf16.mxu0 0
        %1747 = vmatpush1.bf16.msra.mxu0 0
        %1748 = vmatprep.mubr.bf16.mxu0 0
        %1749 = vmatmul.mubr.bf16.gmra.mrb[0].mxu0 %v1651
        %v1750 = vpop.f32.mrb[0].mxu0
        %v1751 = vadd.f32 0.0, %v1750
        %v1752 = vpop.f32.mrb[0].mxu0
        %v1753 = vpop.f32.mrb[0].mxu0
        %v1754 = vadd.f32 0.0, %v1753
        %v1755 = vpop.f32.mrb[0].mxu0
        %1756 = vdwg.mxu0
        %v1757 = vadd.f32 %v1649, %v1751
        %v1758 = vadd.f32 %v1650, %v1754
        %1759 = vst [vmem:[#allocation2] sm:$0xff] %v1757
        %1760 = vst [vmem:[#allocation2 + $0x8] sm:$0xff] %v1758
        // Predicated region
        $region145: #{_xlnet_qa_forward_jit.13} parent=79 // pred_check
          %p1761 = pneg %p911
        $region146: #{_xlnet_qa_forward_jit.13} parent=79 // pred_check_branch
          %1763 = sbr.rel (%p1761) target = $region148
        $region147: #{_xlnet_qa_forward_jit.13} parent=79 // pred_region
          %v1764 = vld [vmem:[#allocation2] sm:$0xff]
          %v1765 = vld [vmem:[#allocation2 + $0x8] sm:$0xff]
          %v1766 = vld [vmem:[%s819] sm:$0xf]
          %v1767 = vld [vmem:[%s819 + $0x4] sm:$0xf]
          %v1768 = vunpack.c.l.bf16 %v1766
          %v1769 = vunpack.c.l.bf16 %v1767
          %v1770 = vadd.f32 %v1764, %v1768
          %v1771 = vadd.f32 %v1765, %v1769
          %1772 = vadd.xlane.f32.xlu0 %v1770
          %v1773 = vpop.xlane.xlu0 %1772
          %1774 = vadd.xlane.f32.xlu0 %v1771
          %v1775 = vpop.xlane.xlu0 %1774
          %v1776 = vrcp.pop 128.0
          %v1777 = vmul.f32 %v1773, %v1776
          %v1778 = vmul.f32 %v1775, %v1776
          %v1779 = vsub.f32 %v1770, %v1777
          %v1780 = vsub.f32 %v1771, %v1778
          %v1781 = vmul.f32 %v1779, %v1779
          %v1782 = vmul.f32 %v1780, %v1780
          %1783 = vadd.xlane.f32.xlu0 %v1781
          %v1784 = vpop.xlane.xlu0 %1783
          %1785 = vadd.xlane.f32.xlu0 %v1782
          %v1786 = vpop.xlane.xlu0 %1785
          %v1787 = vmul.f32 %v1784, %v1776
          %v1788 = vmul.f32 %v1786, %v1776
          %v1789 = vadd.f32 %v1787, 1e-12
          %v1790 = vadd.f32 %v1788, 1e-12
          %v1791 = vrsqrt.pop %v1789
          %v1792 = vrsqrt.pop %v1790
          %v1793 = vmul.f32 %v1779, %v1791
          %v1794 = vmul.f32 %v1780, %v1792
          %v1795 = vld [vmem:[#allocation22] sm:$0x1]
          %v1797 = vlaneseq
          %v1798 = vshrl.u32 %v1797, 7
          %v1799 = vsub.s32 0, %v1798
          %v1800 = vrot.slane %v1795, %v1799
          %v1802 = vmul.f32 %v1793, %v1800
          %v1803 = vmul.f32 %v1794, %v1800
          %v1804 = vld [vmem:[#allocation23] sm:$0x1]
          %v1806 = vlaneseq
          %v1807 = vshrl.u32 %v1806, 7
          %v1808 = vsub.s32 0, %v1807
          %v1809 = vrot.slane %v1804, %v1808
          %v1811 = vadd.f32 %v1802, %v1809
          %v1812 = vadd.f32 %v1803, %v1809
          %v1813 = vpack.c.bf16 %v1812, %v1811
          %v1815 = vunpack.c.l.b16 %v1813
          %v1816 = vunpack.c.h.b16 %v1813
          %v1817 = vpack.c.b16 %v1815, %v1815
          %v1818 = vpack.c.b16 %v1816, %v1816
          %1821 = vst [vmem:[%s901] sm:$0xf] %v1817
          %1822 = vst [vmem:[%s901 + $0x4] sm:$0xf] %v1818
        $region148: #{_xlnet_qa_forward_jit.13} parent=79 // pred_fallthru
          _
        %s1823 = sand.u32 %s448, 1
        %s1824 = scalar_lea.sflag [#allocation5], %s1823
        %s1825 = sand.u32 %s448, 1
        %s1826 = smul.addr %s1825, 8
        %s1827 = scalar_lea.vmem [#allocation24], %s1826
        // Predicated region
        $region149: #{_xlnet_qa_forward_jit.13} parent=79 // pred_check
          %p1828 = pneg %p458
        $region150: #{_xlnet_qa_forward_jit.13} parent=79 // pred_check_branch
          %1830 = sbr.rel (%p1828) target = $region152
        $region151: #{_xlnet_qa_forward_jit.13} parent=79 // pred_region
          %s1831 = smul.u32 2, %s42
          %s1833 = ssub.s32 128, 128
          %1834 = vsyncadd %s1824, %s1833
          %s1835 = smul.addr %s1831, 64
          %s1836 = scalar_lea.hbm %s15, %s1835
          %s1837 = sshll.u32 %s1827, 4
          %s1838 = int_to_ptr.vmem [resolvable:$true] %s1837
          %1843 = dma.vmem_to_hbm [thread:$0]  %s1838, 128, %s1836, %s1824, 64, 64, 4
        $region152: #{_xlnet_qa_forward_jit.13} parent=79 // pred_fallthru
          _
      $region80: #{_xlnet_qa_forward_jit.13} parent=5 // pred_fallthru
        _
      %p1844 = scmp.le.s32.totalorder 2, %s33
      // Predicated region
      $region153: #{_xlnet_qa_forward_jit.13} parent=5 // pred_check
        %p1845 = pneg %p1844
      $region154: #{_xlnet_qa_forward_jit.13} parent=5 // pred_check_branch
        %1847 = sbr.rel (%p1845) target = $region156
      $region155: #{_xlnet_qa_forward_jit.13} parent=5 // pred_region
        %s1848 = ssub.s32 %s33, 2
        // Predicated region
        $region157: #{_xlnet_qa_forward_jit.13} parent=155 // pred_check
          %p1849 = pneg %p464
        $region158: #{_xlnet_qa_forward_jit.13} parent=155 // pred_check_branch
          %1851 = sbr.rel (%p1849) target = $region160
        $region159: #{_xlnet_qa_forward_jit.13} parent=155 // pred_region
          %s1852 = sand.u32 %s449, 1
          %s1853 = scalar_lea.sflag [#allocation5], %s1852
          %s1854 = sand.u32 %s449, 1
          %s1855 = smul.addr %s1854, 8
          %s1856 = scalar_lea.vmem [#allocation24], %s1855
          %1857 = dma.done %s1853, 128
        $region160: #{_xlnet_qa_forward_jit.13} parent=155 // pred_fallthru
          _
      $region156: #{_xlnet_qa_forward_jit.13} parent=5 // pred_fallthru
        _
    $region6: #{_xlnet_qa_forward_jit.13} parent=1 // loop_footer
      %s37 = sadd.s32 1, %s33
    $region7: #{_xlnet_qa_forward_jit.13} parent=1 // loop_footer_branch
      %32 = sbr.rel target = $region3
    $region8: #{_xlnet_qa_forward_jit.13} parent=1 // loop_exit
      _
    %1858 = vsyncpa [#allocation4], 1
    %s1859 = scalar_lea.sflag [#allocation4], 1
    %1860 = vsyncpa %s1859, 1
    %1861 = vsyncpa [#allocation7], 1
    %s1862 = scalar_lea.sflag [#allocation7], 1
    %1863 = vsyncpa %s1862, 1
    %1864 = vsyncpa [#allocation10], 1
    %1865 = vsyncpa [#allocation13], 1
    %1866 = vsyncpa [#allocation16], 1
    %1867 = vsyncpa [#allocation5], 1
    %s1868 = scalar_lea.sflag [#allocation5], 1
    %1869 = vsyncpa %s1868, 1

// kernel: _xlnet_qa_forward_jit.21
$region0: #{_xlnet_qa_forward_jit.21}
  #allocation0 [shape = 'u32[]', space=smem, size = 0x4, offset = 0x4, fixed_abs, tag = 'smem constant byte address 0x4 - core index']
  #allocation1 [shape = 'u32[144,128]{1,0:T(1,128)}', space=vmem, size = 0x12000, scoped, tag = 'internal scratch']
  %s0 = inlined_call_operand.hbm [shape: bf16[32,128], index: 0, kind: input, shape index: {}]
  %s1 = inlined_call_operand.hbm [shape: bf16[128,128], index: 1, kind: input, shape index: {}]
  %s2 = inlined_call_operand.hbm [shape: f32[1,128], index: 2, kind: input, shape index: {}]
  %s3 = inlined_call_operand.hbm [shape: f32[32,128], index: 3, kind: output, shape index: {}]
  %s4 = sld [smem:[#allocation0]]
  $region57: #{_xlnet_qa_forward_jit.21} parent=0
    _
  %s6 = ssub.s32 1, %s4
  %s7 = scalar_select 0, %s6, %s4
  $region1: #{_xlnet_qa_forward_jit.21} parent=0
    #allocation2 [shape = 'u8[8192]{0}', space=vmem, size = 0x2000, scoped, tag = 'input window, operand 0']
    #allocation3 [shape = 's32[2]{0}', space=sflag, size = 0x8, scoped, tag = 'scoped memory for _xlnet_qa_forward_jit.21']
    #allocation4 [shape = 's32[2]{0}', space=sflag, size = 0x8, scoped, tag = 'scoped memory for _xlnet_qa_forward_jit.21']
    #allocation5 [shape = 'u8[32768]{0}', space=vmem, size = 0x8000, scoped, tag = 'input window, operand 1, single buffered']
    #allocation6 [shape = 's32[1]{0}', space=sflag, size = 0x4, scoped, tag = 'scoped memory for _xlnet_qa_forward_jit.21']
    #allocation7 [shape = 'u8[512]{0}', space=vmem, size = 0x400, scoped, tag = 'input window, operand 2, single buffered']
    #allocation8 [shape = 'u8[16384]{0}', space=vmem, size = 0x4000, scoped, tag = 'output window, operand 0']
    %8 = vsyncpa [#allocation3], 0
    %s9 = scalar_lea.sflag [#allocation3], 1
    %10 = vsyncpa %s9, 0
    %11 = vsyncpa [#allocation6], 0
    %12 = vsyncpa [#allocation4], 0
    %s13 = scalar_lea.sflag [#allocation4], 1
    %14 = vsyncpa %s13, 0
    loop: start=0, step=1, limit=4
    $region2: #{_xlnet_qa_forward_jit.21} parent=1 // loop_pre_header
      _
    $region3: #{_xlnet_qa_forward_jit.21} parent=1 // loop_header
      %s16 = sphi 0, %s20
      %p17 = scmp.ge.s32.totalorder %s16, 4
      %s26 = sphi 0, %s28
      %s29 = sphi 0, %s26
      %s30 = sphi 0, %s29
      %s46 = sphi 0, %s30
      %s50 = sphi 0, %s50
      %s52 = sphi 0, %s50
      %s53 = sphi 0, %s52
      %s67 = sphi 0, %s53
      %s71 = sphi 0, %s71
      %s73 = sphi 0, %s71
      %s74 = sphi 0, %s73
      %s88 = sphi 0, %s74
      %s94 = sphi 0, %s96
      %s97 = sphi 0, %s94
      %s98 = sphi 0, %s97
      %s114 = sphi 0, %s98
    $region4: #{_xlnet_qa_forward_jit.21} parent=1 // loop_header_branch
      %19 = sbr.rel (%p17) target = $region8
    $region5: #{_xlnet_qa_forward_jit.21} parent=1 // loop_body
      %s21 = ssub.s32 %s16, 1
      %s22 = ssub.s32 %s16, 2
      %s23 = sadd.s32 %s16, 1
      %s24 = ssub.s32 %s16, %s23
      %p25 = scmp.eq.s32.totalorder %s24, 0
      %s27 = sadd.s32 %s26, 1
      %s28 = scalar_select %p25, %s26, %s27
      %p31 = pneg %p25
      %p32 = scmp.eq.s32.totalorder %s16, 1
      %p33 = por %p31, %p32
      %p34 = scmp.ne.s32.totalorder %s26, %s29
      %p35 = scmp.eq.s32.totalorder %s16, 0
      %p36 = por %p34, %p35
      %p37 = scmp.ne.s32.totalorder %s26, %s29
      %p38 = scmp.eq.s32.totalorder %s21, 1
      %p39 = por %p37, %p38
      %p40 = scmp.ne.s32.totalorder %s29, %s30
      %p41 = scmp.eq.s32.totalorder %s21, 0
      %p42 = por %p40, %p41
      %p43 = scmp.ne.s32.totalorder %s29, %s30
      %p44 = scmp.eq.s32.totalorder %s22, 1
      %p45 = por %p43, %p44
      %p47 = scmp.ne.s32.totalorder %s30, %s46
      %p48 = scmp.eq.s32.totalorder %s22, 0
      %p49 = por %p47, %p48
      %s51 = sadd.s32 %s50, 1
      %p54 = scmp.eq.s32.totalorder %s16, 1
      %p55 = scmp.ne.s32.totalorder %s50, %s52
      %p56 = scmp.eq.s32.totalorder %s16, 0
      %p57 = por %p55, %p56
      %p58 = scmp.ne.s32.totalorder %s50, %s52
      %p59 = scmp.eq.s32.totalorder %s21, 1
      %p60 = por %p58, %p59
      %p61 = scmp.ne.s32.totalorder %s52, %s53
      %p62 = scmp.eq.s32.totalorder %s21, 0
      %p63 = por %p61, %p62
      %p64 = scmp.ne.s32.totalorder %s52, %s53
      %p65 = scmp.eq.s32.totalorder %s22, 1
      %p66 = por %p64, %p65
      %p68 = scmp.ne.s32.totalorder %s53, %s67
      %p69 = scmp.eq.s32.totalorder %s22, 0
      %p70 = por %p68, %p69
      %s72 = sadd.s32 %s71, 1
      %p75 = scmp.eq.s32.totalorder %s16, 1
      %p76 = scmp.ne.s32.totalorder %s71, %s73
      %p77 = scmp.eq.s32.totalorder %s16, 0
      %p78 = por %p76, %p77
      %p79 = scmp.ne.s32.totalorder %s71, %s73
      %p80 = scmp.eq.s32.totalorder %s21, 1
      %p81 = por %p79, %p80
      %p82 = scmp.ne.s32.totalorder %s73, %s74
      %p83 = scmp.eq.s32.totalorder %s21, 0
      %p84 = por %p82, %p83
      %p85 = scmp.ne.s32.totalorder %s73, %s74
      %p86 = scmp.eq.s32.totalorder %s22, 1
      %p87 = por %p85, %p86
      %p89 = scmp.ne.s32.totalorder %s74, %s88
      %p90 = scmp.eq.s32.totalorder %s22, 0
      %p91 = por %p89, %p90
      %s92 = ssub.s32 %s16, %s23
      %p93 = scmp.eq.s32.totalorder %s92, 0
      %s95 = sadd.s32 %s94, 1
      %s96 = scalar_select %p93, %s94, %s95
      %p99 = pneg %p93
      %p100 = scmp.eq.s32.totalorder %s16, 1
      %p101 = por %p99, %p100
      %p102 = scmp.ne.s32.totalorder %s94, %s97
      %p103 = scmp.eq.s32.totalorder %s16, 0
      %p104 = por %p102, %p103
      %p105 = scmp.ne.s32.totalorder %s94, %s97
      %p106 = scmp.eq.s32.totalorder %s21, 1
      %p107 = por %p105, %p106
      %p108 = scmp.ne.s32.totalorder %s97, %s98
      %p109 = scmp.eq.s32.totalorder %s21, 0
      %p110 = por %p108, %p109
      %p111 = scmp.ne.s32.totalorder %s97, %s98
      %p112 = scmp.eq.s32.totalorder %s22, 1
      %p113 = por %p111, %p112
      %p115 = scmp.ne.s32.totalorder %s98, %s114
      %p116 = scmp.eq.s32.totalorder %s22, 0
      %p117 = por %p115, %p116
      %p118 = scmp.le.s32.totalorder 1, %s16
      %p119 = scmp.lt.s32.totalorder %s16, 3
      %p120 = pnand %p118, %p119
      %p121 = pneg %p120
      // Predicated region
      $region9: #{_xlnet_qa_forward_jit.21} parent=5 // pred_check
        _
      $region10: #{_xlnet_qa_forward_jit.21} parent=5 // pred_check_branch
        %123 = sbr.rel (%p120) target = $region12
      $region11: #{_xlnet_qa_forward_jit.21} parent=5 // pred_region
        %s124 = ssub.s32 %s16, 1
        // Predicated region
        $region13: #{_xlnet_qa_forward_jit.21} parent=11 // pred_check
          %p125 = pneg %p63
        $region14: #{_xlnet_qa_forward_jit.21} parent=11 // pred_check_branch
          %127 = sbr.rel (%p125) target = $region16
        $region15: #{_xlnet_qa_forward_jit.21} parent=11 // pred_region
          %s129 = ssub.s32 1024, 1024
          %130 = vsyncadd [#allocation6], %s129
          %s131 = sshll.u32 [#allocation5], 4
          %s132 = int_to_ptr.vmem [resolvable:$true] %s131
          %137 = dma.hbm_to_vmem [thread:$0]  %s1, 1024, %s132, [#allocation6], 64, 64, 4
        $region16: #{_xlnet_qa_forward_jit.21} parent=11 // pred_fallthru
          _
        // Predicated region
        $region17: #{_xlnet_qa_forward_jit.21} parent=11 // pred_check
          %p138 = pneg %p84
        $region18: #{_xlnet_qa_forward_jit.21} parent=11 // pred_check_branch
          %140 = sbr.rel (%p138) target = $region20
        $region19: #{_xlnet_qa_forward_jit.21} parent=11 // pred_region
          %s142 = ssub.s32 16, 16
          %143 = vsyncadd [#allocation6], %s142
          %s145 = sshll.u32 [#allocation7], 4
          %s146 = int_to_ptr.vmem [resolvable:$true] %s145
          %148 = dma.hbm_to_vmem [thread:$0]  %s2, 16, %s146, [#allocation6]
        $region20: #{_xlnet_qa_forward_jit.21} parent=11 // pred_fallthru
          _
      $region12: #{_xlnet_qa_forward_jit.21} parent=5 // pred_fallthru
        _
      %p149 = scmp.lt.s32.totalorder %s16, 2
      // Predicated region
      $region21: #{_xlnet_qa_forward_jit.21} parent=5 // pred_check
        %p150 = pneg %p149
      $region22: #{_xlnet_qa_forward_jit.21} parent=5 // pred_check_branch
        %152 = sbr.rel (%p150) target = $region24
      $region23: #{_xlnet_qa_forward_jit.21} parent=5 // pred_region
        // Predicated region
        $region25: #{_xlnet_qa_forward_jit.21} parent=23 // pred_check
          %p153 = pneg %p36
        $region26: #{_xlnet_qa_forward_jit.21} parent=23 // pred_check_branch
          %155 = sbr.rel (%p153) target = $region28
        $region27: #{_xlnet_qa_forward_jit.21} parent=23 // pred_region
          %s156 = sand.u32 %s26, 1
          %s157 = scalar_lea.sflag [#allocation3], %s156
          %s158 = sand.u32 %s26, 1
          %s159 = smul.addr %s158, 8
          %s160 = scalar_lea.vmem [#allocation2], %s159
          %s161 = smul.u32 2, %s16
          %s163 = ssub.s32 128, 128
          %164 = vsyncadd %s157, %s163
          %s165 = smul.addr %s161, 64
          %s166 = scalar_lea.hbm %s0, %s165
          %s167 = sshll.u32 %s160, 4
          %s168 = int_to_ptr.vmem [resolvable:$true] %s167
          %173 = dma.hbm_to_vmem [thread:$0]  %s166, 128, %s168, %s157, 64, 64, 4
        $region28: #{_xlnet_qa_forward_jit.21} parent=23 // pred_fallthru
          _
      $region24: #{_xlnet_qa_forward_jit.21} parent=5 // pred_fallthru
        _
      %p174 = scmp.le.s32.totalorder 1, %s16
      %p175 = scmp.lt.s32.totalorder %s16, 3
      %p176 = pnand %p174, %p175
      %p177 = pneg %p176
      // Predicated region
      $region29: #{_xlnet_qa_forward_jit.21} parent=5 // pred_check
        _
      $region30: #{_xlnet_qa_forward_jit.21} parent=5 // pred_check_branch
        %179 = sbr.rel (%p176) target = $region32
      $region31: #{_xlnet_qa_forward_jit.21} parent=5 // pred_region
        %s180 = ssub.s32 %s16, 1
        %s181 = sand.u32 %s29, 1
        %s182 = scalar_lea.sflag [#allocation3], %s181
        %s183 = sand.u32 %s29, 1
        %s184 = smul.addr %s183, 8
        %s185 = scalar_lea.vmem [#allocation2], %s184
        // Predicated region
        $region33: #{_xlnet_qa_forward_jit.21} parent=31 // pred_check
          %p186 = pneg %p42
        $region34: #{_xlnet_qa_forward_jit.21} parent=31 // pred_check_branch
          %188 = sbr.rel (%p186) target = $region36
        $region35: #{_xlnet_qa_forward_jit.21} parent=31 // pred_region
          %189 = dma.done %s182, 128
        $region36: #{_xlnet_qa_forward_jit.21} parent=31 // pred_fallthru
          _
        // Predicated region
        $region37: #{_xlnet_qa_forward_jit.21} parent=31 // pred_check
          %p190 = pneg %p63
        $region38: #{_xlnet_qa_forward_jit.21} parent=31 // pred_check_branch
          %192 = sbr.rel (%p190) target = $region40
        $region39: #{_xlnet_qa_forward_jit.21} parent=31 // pred_region
          %193 = dma.done [#allocation6], 1024
        $region40: #{_xlnet_qa_forward_jit.21} parent=31 // pred_fallthru
          _
        // Predicated region
        $region41: #{_xlnet_qa_forward_jit.21} parent=31 // pred_check
          %p194 = pneg %p84
        $region42: #{_xlnet_qa_forward_jit.21} parent=31 // pred_check_branch
          %196 = sbr.rel (%p194) target = $region44
        $region43: #{_xlnet_qa_forward_jit.21} parent=31 // pred_region
          %197 = dma.done [#allocation6], 16
        $region44: #{_xlnet_qa_forward_jit.21} parent=31 // pred_fallthru
          _
        %s198 = sand.u32 %s29, 1
        %s199 = scalar_lea.sflag [#allocation3], %s198
        %s200 = sand.u32 %s29, 1
        %s201 = smul.addr %s200, 8
        %s202 = scalar_lea.vmem [#allocation2], %s201
        %p203 = pneg %p42
        %p204 = pneg %p39
        %p205 = pneg %p63
        %p206 = pneg %p60
        %p207 = pneg %p84
        %p208 = pneg %p81
        %p209 = pneg %p110
        %p210 = pneg %p107
        %s211 = sand.u32 %s97, 1
        %s212 = scalar_lea.sflag [#allocation4], %s211
        %s213 = sand.u32 %s97, 1
        %s214 = smul.addr %s213, 16
        %s215 = scalar_lea.vmem [#allocation8], %s214
        %s216 = smul.u32 2, %s21
        %s217 = smul.u32 2, %s21
        %v219 = vld [vmem:[%s185] sm:$0xf]
        %v220 = vld [vmem:[%s185 + $0x4] sm:$0xf]
        %v221 = vld [vmem:[#allocation5] sm:$0xf]
        %v222 = vld [vmem:[#allocation5 + $0x4] sm:$0xf]
        %v223 = vld [vmem:[#allocation5 + $0x8] sm:$0xf]
        %v224 = vld [vmem:[#allocation5 + $0xc] sm:$0xf]
        %v225 = vld [vmem:[#allocation5 + $0x10] sm:$0xf]
        %v226 = vld [vmem:[#allocation5 + $0x14] sm:$0xf]
        %v227 = vld [vmem:[#allocation5 + $0x18] sm:$0xf]
        %v228 = vld [vmem:[#allocation5 + $0x1c] sm:$0xf]
        %v229 = vld [vmem:[#allocation5 + $0x20] sm:$0xf]
        %v230 = vld [vmem:[#allocation5 + $0x24] sm:$0xf]
        %v231 = vld [vmem:[#allocation5 + $0x28] sm:$0xf]
        %v232 = vld [vmem:[#allocation5 + $0x2c] sm:$0xf]
        %v233 = vld [vmem:[#allocation5 + $0x30] sm:$0xf]
        %v234 = vld [vmem:[#allocation5 + $0x34] sm:$0xf]
        %v235 = vld [vmem:[#allocation5 + $0x38] sm:$0xf]
        %v236 = vld [vmem:[#allocation5 + $0x3c] sm:$0xf]
        %v237 = vld [vmem:[#allocation7] sm:$0x1]
        %v239 = vlaneseq
        %v240 = vshrl.u32 %v239, 7
        %v241 = vsub.s32 0, %v240
        %v242 = vrot.slane %v237, %v241
        %v246 = vunpack.c.l.b16 %v219
        %v247 = vunpack.c.l.b16 %v220
        %v248 = vpack.c.b16 %v247, %v246
        %v266 = vunpack.c.l.b16 %v221
        %v267 = vunpack.c.l.b16 %v222
        %v268 = vunpack.c.l.b16 %v223
        %v269 = vunpack.c.l.b16 %v224
        %v270 = vunpack.c.l.b16 %v225
        %v271 = vunpack.c.l.b16 %v226
        %v272 = vunpack.c.l.b16 %v227
        %v273 = vunpack.c.l.b16 %v228
        %v274 = vunpack.c.l.b16 %v229
        %v275 = vunpack.c.l.b16 %v230
        %v276 = vunpack.c.l.b16 %v231
        %v277 = vunpack.c.l.b16 %v232
        %v278 = vunpack.c.l.b16 %v233
        %v279 = vunpack.c.l.b16 %v234
        %v280 = vunpack.c.l.b16 %v235
        %v281 = vunpack.c.l.b16 %v236
        %v282 = vpack.c.b16 %v267, %v266
        %v283 = vpack.c.b16 %v269, %v268
        %v284 = vpack.c.b16 %v271, %v270
        %v285 = vpack.c.b16 %v273, %v272
        %v286 = vpack.c.b16 %v275, %v274
        %v287 = vpack.c.b16 %v277, %v276
        %v288 = vpack.c.b16 %v279, %v278
        %v289 = vpack.c.b16 %v281, %v280
        %298 = vmatprep.subr.bf16.mxu0 0
        %299 = vmatpush1.bf16.msra.mxu0 %v282
        %300 = vmatprep.subr.bf16.mxu0 0
        %301 = vmatpush1.bf16.msra.mxu0 %v283
        %302 = vmatprep.subr.bf16.mxu0 0
        %303 = vmatpush1.bf16.msra.mxu0 %v284
        %304 = vmatprep.subr.bf16.mxu0 0
        %305 = vmatpush1.bf16.msra.mxu0 %v285
        %306 = vmatprep.subr.bf16.mxu0 0
        %307 = vmatpush1.bf16.msra.mxu0 %v286
        %308 = vmatprep.subr.bf16.mxu0 0
        %309 = vmatpush1.bf16.msra.mxu0 %v287
        %310 = vmatprep.subr.bf16.mxu0 0
        %311 = vmatpush1.bf16.msra.mxu0 %v288
        %312 = vmatprep.subr.bf16.mxu0 0
        %313 = vmatpush1.bf16.msra.mxu0 %v289
        %314 = vmatprep.subr.bf16.mxu0 0
        %315 = vmatpush1.bf16.msra.mxu0 0
        %316 = vmatprep.subr.bf16.mxu0 0
        %317 = vmatpush1.bf16.msra.mxu0 0
        %318 = vmatprep.subr.bf16.mxu0 0
        %319 = vmatpush1.bf16.msra.mxu0 0
        %320 = vmatprep.subr.bf16.mxu0 0
        %321 = vmatpush1.bf16.msra.mxu0 0
        %322 = vmatprep.subr.bf16.mxu0 0
        %323 = vmatpush1.bf16.msra.mxu0 0
        %324 = vmatprep.subr.bf16.mxu0 0
        %325 = vmatpush1.bf16.msra.mxu0 0
        %326 = vmatprep.subr.bf16.mxu0 0
        %327 = vmatpush1.bf16.msra.mxu0 0
        %328 = vmatprep.subr.bf16.mxu0 0
        %329 = vmatpush1.bf16.msra.mxu0 0
        %330 = vmatprep.mubr.bf16.mxu0 0
        %331 = vmatmul.mubr.bf16.gmra.mrb[0].mxu0 %v248
        %v332 = vpop.f32.mrb[0].mxu0
        %v333 = vadd.f32 %v242, %v332
        %v334 = vpop.f32.mrb[0].mxu0
        %v335 = vpop.f32.mrb[0].mxu0
        %v336 = vadd.f32 %v242, %v335
        %v337 = vpop.f32.mrb[0].mxu0
        %338 = vdwg.mxu0
        %v339 = vmax.f32 %v333, %v336
        %v340 = vrot.slane %v339, 4
        %v341 = vmax.f32 %v339, %v340
        %v342 = vrot.slane %v341, 2
        %v343 = vmax.f32 %v341, %v342
        %v344 = vrot.slane %v343, 1
        %v345 = vmax.f32 %v343, %v344
        %v346 = vsub.f32 %v333, %v345
        %v347 = vsub.f32 %v336, %v345
        %v348 = vmul.f32 %v346, 1.442695
        %v349 = vpow.pop %v348
        %v350 = vmul.f32 %v347, 1.442695
        %v351 = vpow.pop %v350
        %v352 = vadd.f32 %v349, %v351
        %v353 = vrot.slane %v352, 4
        %v354 = vadd.f32 %v352, %v353
        %v355 = vrot.slane %v354, 2
        %v356 = vadd.f32 %v354, %v355
        %v357 = vrot.slane %v356, 1
        %v358 = vadd.f32 %v356, %v357
        %v359 = vrcp.pop %v358
        %v360 = vmul.f32 %v349, %v359
        %v361 = vmul.f32 %v351, %v359
        %362 = vst [vmem:[%s215] sm:$0xff] %v360
        %363 = vst [vmem:[%s215 + $0x8] sm:$0xff] %v361
        %s364 = sand.u32 %s97, 1
        %s365 = scalar_lea.sflag [#allocation4], %s364
        %s366 = sand.u32 %s97, 1
        %s367 = smul.addr %s366, 16
        %s368 = scalar_lea.vmem [#allocation8], %s367
        // Predicated region
        $region45: #{_xlnet_qa_forward_jit.21} parent=31 // pred_check
          %p369 = pneg %p107
        $region46: #{_xlnet_qa_forward_jit.21} parent=31 // pred_check_branch
          %371 = sbr.rel (%p369) target = $region48
        $region47: #{_xlnet_qa_forward_jit.21} parent=31 // pred_region
          %s372 = smul.u32 2, %s21
          %s374 = ssub.s32 256, 256
          %375 = vsyncadd %s365, %s374
          %s376 = smul.addr %s372, 128
          %s377 = scalar_lea.hbm %s3, %s376
          %s378 = sshll.u32 %s368, 4
          %s379 = int_to_ptr.vmem [resolvable:$true] %s378
          %384 = dma.vmem_to_hbm [thread:$0]  %s379, 256, %s377, %s365, 128, 128, 8
        $region48: #{_xlnet_qa_forward_jit.21} parent=31 // pred_fallthru
          _
      $region32: #{_xlnet_qa_forward_jit.21} parent=5 // pred_fallthru
        _
      %p385 = scmp.le.s32.totalorder 2, %s16
      // Predicated region
      $region49: #{_xlnet_qa_forward_jit.21} parent=5 // pred_check
        %p386 = pneg %p385
      $region50: #{_xlnet_qa_forward_jit.21} parent=5 // pred_check_branch
        %388 = sbr.rel (%p386) target = $region52
      $region51: #{_xlnet_qa_forward_jit.21} parent=5 // pred_region
        %s389 = ssub.s32 %s16, 2
        // Predicated region
        $region53: #{_xlnet_qa_forward_jit.21} parent=51 // pred_check
          %p390 = pneg %p113
        $region54: #{_xlnet_qa_forward_jit.21} parent=51 // pred_check_branch
          %392 = sbr.rel (%p390) target = $region56
        $region55: #{_xlnet_qa_forward_jit.21} parent=51 // pred_region
          %s393 = sand.u32 %s98, 1
          %s394 = scalar_lea.sflag [#allocation4], %s393
          %s395 = sand.u32 %s98, 1
          %s396 = smul.addr %s395, 16
          %s397 = scalar_lea.vmem [#allocation8], %s396
          %398 = dma.done %s394, 256
        $region56: #{_xlnet_qa_forward_jit.21} parent=51 // pred_fallthru
          _
      $region52: #{_xlnet_qa_forward_jit.21} parent=5 // pred_fallthru
        _
    $region6: #{_xlnet_qa_forward_jit.21} parent=1 // loop_footer
      %s20 = sadd.s32 1, %s16
    $region7: #{_xlnet_qa_forward_jit.21} parent=1 // loop_footer_branch
      %15 = sbr.rel target = $region3
    $region8: #{_xlnet_qa_forward_jit.21} parent=1 // loop_exit
      _
    %399 = vsyncpa [#allocation3], 1
    %s400 = scalar_lea.sflag [#allocation3], 1
    %401 = vsyncpa %s400, 1
    %402 = vsyncpa [#allocation6], 1
    %403 = vsyncpa [#allocation4], 1
    %s404 = scalar_lea.sflag [#allocation4], 1
    %405 = vsyncpa %s404, 1

</llo_original>
